<compile_context>
chip_gen: v5e
topology: v5e:2x2
jax: 0.10.0
libtpu: 0.0.40
codegen_flags: <defaults>
</compile_context>

<pallas_src>
import numpy as np
import jax
import jax.numpy as jnp
from jax import lax
from jax.experimental import pallas as pl
from jax.experimental.pallas import tpu as pltpu


# ------------------------------ fused kernel ------------------------------- #

def _down_fused_kernel(x_ref, w1_ref, b1_ref, w2_ref, b2_ref, o_ref,
                       xpad_ref, mpad_ref):
    # x_ref   : (1, 1, 2*TH+8, W*Cin) f32  raw-row halo window (lane-dense NHWC)
    # w1_ref  : (9*Cin,  Cmid) bf16        conv1 weight, im2col layout, BN scale folded
    # w2_ref  : (9*Cmid, Cout) bf16        conv2 weight, likewise
    # b1/b2   : (1, C) f32                 folded BN bias
    # o_ref   : (1, TH*Wp, Cout)           natural matmul-layout output block
    # xpad_ref: VMEM (TH+4, Wp+2, Cin)  bf16  pooled rows + conv1 zero pad
    # mpad_ref: VMEM (TH+2, Wp+2, Cmid) bf16  conv1 output + conv2 zero pad
    Rraw = x_ref.shape[2]
    WC = x_ref.shape[3]
    Cin = w1_ref.shape[0] // 9
    Cmid = w1_ref.shape[1]
    Cout = w2_ref.shape[1]
    W = WC // Cin
    Wp = W // 2
    TH = (Rraw - 8) // 2           # output rows of this tile (pooled resolution)
    Rpool = TH + 4                 # pooled rows incl. 2-row conv1 halo each side
    Rmid = TH + 2                  # conv1 output rows incl. 1-row conv2 halo

    t = pl.program_id(1)
    n_tiles = pl.num_programs(1)

    # ---- 2x2 / stride-2 max pool in f32 on the VPU (pairwise maxima) ----
    x = x_ref[0, 0]                                        # (2*Rpool, W*Cin)
    xr = x.reshape(Rpool, 2, WC)
    xh = jnp.maximum(xr[:, 0, :], xr[:, 1, :])             # rows pooled
    xw = xh.reshape(Rpool, Wp, 2 * Cin)
    pooled = jnp.maximum(xw[:, :, :Cin], xw[:, :, Cin:])   # (Rpool, Wp, Cin) f32

    # conv1 input scratch: only the two zero-pad columns need initialising —
    # every data row is rewritten each step (kept per-step so correctness does
    # not depend on grid-iteration order / core sharding).
    zc1 = jnp.zeros((Rpool, 1, Cin), xpad_ref.dtype)
    xpad_ref[:, 0:1, :] = zc1
    xpad_ref[:, Wp + 1:Wp + 2, :] = zc1
    xpad_ref[:, 1:Wp + 1, :] = pooled.astype(xpad_ref.dtype)  # bf16 at MXU boundary

    # ---- conv1 (3x3, pad=1, no bias) as 9 accumulated shifted matmuls ----
    acc1 = jnp.zeros((Rmid * Wp, Cmid), jnp.float32)
    for k in range(9):
        dy, dx = k // 3, k % 3
        patch = xpad_ref[dy:dy + Rmid, dx:dx + Wp, :].reshape(Rmid * Wp, Cin)
        acc1 = acc1 + jnp.dot(patch, w1_ref[k * Cin:(k + 1) * Cin, :],
                              preferred_element_type=jnp.float32)
    y1 = jnp.maximum(acc1 + b1_ref[...], 0.0)              # folded BN bias + ReLU (f32)

    # conv2 input scratch (zero-pad columns + conv1 output interior)
    zc2 = jnp.zeros((Rmid, 1, Cmid), mpad_ref.dtype)
    mpad_ref[:, 0:1, :] = zc2
    mpad_ref[:, Wp + 1:Wp + 2, :] = zc2
    mpad_ref[:, 1:Wp + 1, :] = y1.reshape(Rmid, Wp, Cmid).astype(mpad_ref.dtype)

    # conv2's halo rows that fall outside the image are zero padding, NOT
    # conv1(zero-padded input): overwrite them at the image edges.
    zrow = jnp.zeros((1, Wp + 2, Cmid), mpad_ref.dtype)

    @pl.when(t == 0)
    def _():
        mpad_ref[0:1, :, :] = zrow

    @pl.when(t == n_tiles - 1)
    def _():
        mpad_ref[Rmid - 1:Rmid, :, :] = zrow

    # ---- conv2 (3x3, pad=1, no bias) + folded BN bias + ReLU ----
    acc2 = jnp.zeros((TH * Wp, Cout), jnp.float32)
    for k in range(9):
        dy, dx = k // 3, k % 3
        patch = mpad_ref[dy:dy + TH, dx:dx + Wp, :].reshape(TH * Wp, Cmid)
        acc2 = acc2 + jnp.dot(patch, w2_ref[k * Cmid:(k + 1) * Cmid, :],
                              preferred_element_type=jnp.float32)
    y2 = jnp.maximum(acc2 + b2_ref[...], 0.0)

    # Natural matmul-layout store (no in-kernel relayout); lane-dense whenever
    # Cout is a lane multiple (true at production channel counts).
    o_ref[0] = y2.astype(o_ref.dtype)


# ------------------------------ tile selection ------------------------------ #

def _pick_tile_h(Hp, Wp, Cin, Cmid, Cout, budget_bytes=40 * 1024 * 1024):
    """Largest row tile (over pooled height) whose double-buffered working set
    fits the VMEM budget (sized to also fit v7x's 64 MiB per TensorCore)."""
    weights = 2 * 9 * (Cin * Cmid + Cmid * Cout)           # bf16 weights
    def tile_bytes(th):
        in_tile = (2 * th + 8) * (2 * Wp) * Cin * 4        # f32 raw halo window
        out_tile = th * Wp * Cout * 4
        xpad = (th + 4) * (Wp + 2) * Cin * 2               # bf16 scratch
        mpad = (th + 2) * (Wp + 2) * Cmid * 2
        accs = (th + 2) * Wp * Cmid * 4 + th * Wp * Cout * 4
        return 2 * in_tile + 2 * out_tile + xpad + mpad + accs + weights
    cands = [d for d in range(Hp, 0, -1)
             if Hp % d == 0 and (d == Hp or (d * Wp) % 8 == 0)]
    for th in cands:
        if tile_bytes(th) <= budget_bytes:
            return th
    return cands[-1]


# -------------------------------- Down module ------------------------------- #

def down_forward(x_nchw, params, *, tile_h=None):
    """Down.forward: MaxPool2d(2) -> (Conv3x3 + BN(eval) + ReLU) x2.  NCHW I/O."""
    N, Cin, H, W = x_nchw.shape
    assert H % 2 == 0 and W % 2 == 0, "MaxPool2d(2) expects even spatial dims"
    Hp, Wp = H // 2, W // 2
    w1, w2 = params["w1"], params["w2"]                    # HWIO
    Cmid, Cout = w1.shape[-1], w2.shape[-1]

    # Fold BN scale into the weight columns (exact for eval-mode BN), flatten
    # to the (dy,dx,c)-major im2col layout, pre-cast to bf16 for the
    # full-rate MXU path (f32 accumulation happens in the kernel).
    w1f = (w1 * params["s1"].reshape(1, 1, 1, Cmid)).reshape(9 * Cin, Cmid)
    w2f = (w2 * params["s2"].reshape(1, 1, 1, Cout)).reshape(9 * Cmid, Cout)
    w1f = w1f.astype(jnp.bfloat16)
    w2f = w2f.astype(jnp.bfloat16)
    b1 = params["b1"].astype(jnp.float32)
    b2 = params["b2"].astype(jnp.float32)

    TH = _pick_tile_h(Hp, Wp, Cin, Cmid, Cout) if tile_h is None else tile_h
    assert Hp % TH == 0
    n_tiles = Hp // TH
    rows_in = 2 * TH + 8                                   # raw rows/tile incl. halo

    # NCHW -> lane-dense (N, H, W*Cin) slab; 4 zero raw rows top/bottom make the
    # pooled / conv zero padding at the image edge fall out of the halo window.
    x = jnp.transpose(x_nchw, (0, 2, 3, 1)).reshape(N, H, W * Cin)
    x = jnp.pad(x, ((0, 0), (4, 4), (0, 0)))
    # Overlapping raw-row halo windows (one per row tile) so plain BlockSpec
    # double-buffering pipelines the input HBM->VMEM DMA.
    x_tiles = jnp.stack(
        [x[:, t * 2 * TH: t * 2 * TH + rows_in, :] for t in range(n_tiles)],
        axis=1)                                            # (N, n_tiles, 2TH+8, W*Cin)

    flops = 2 * N * Hp * Wp * 9 * (Cin * Cmid + Cmid * Cout)
    bytes_accessed = int(4 * x_tiles.size + 4 * N * Hp * Wp * Cout
                         + 2 * (w1f.size + w2f.size) + 4 * (b1.size + b2.size))

    out = pl.pallas_call(
        _down_fused_kernel,
        out_shape=jax.ShapeDtypeStruct((N, Hp * Wp, Cout), x_nchw.dtype),
        grid=(N, n_tiles),
        in_specs=[
            pl.BlockSpec((1, 1, rows_in, W * Cin), lambda n, t: (n, t, 0, 0)),
            pl.BlockSpec((9 * Cin, Cmid), lambda n, t: (0, 0)),
            pl.BlockSpec((1, Cmid), lambda n, t: (0, 0)),
            pl.BlockSpec((9 * Cmid, Cout), lambda n, t: (0, 0)),
            pl.BlockSpec((1, Cout), lambda n, t: (0, 0)),
        ],
        out_specs=pl.BlockSpec((1, TH * Wp, Cout), lambda n, t: (n, t, 0)),
        scratch_shapes=[
            pltpu.VMEM((TH + 4, Wp + 2, Cin), jnp.bfloat16),
            pltpu.VMEM((TH + 2, Wp + 2, Cmid), jnp.bfloat16),
        ],
        compiler_params=pltpu.CompilerParams(
            dimension_semantics=("parallel", "parallel"),   # batch + row tiles
            vmem_limit_bytes=48 * 1024 * 1024),
        cost_estimate=pl.CostEstimate(flops=flops, transcendentals=0,
                                      bytes_accessed=bytes_accessed),
    )(x_tiles, w1f, b1, w2f, b2)

    out = out.reshape(N, Hp, Wp, Cout)            # free unflatten in the wrapper
    return jnp.transpose(out, (0, 3, 1, 2))       # NHWC -> NCHW


# ------------------------------ Parameter init ----------------------------- #

def _fold_bn(c):
    """Deterministic BN params (eval mode) folded into scale/bias of shape (1, c)."""
    i = jnp.arange(c, dtype=jnp.float32)
    gamma = 1.0 + 0.05 * i / c
    beta = 0.01 * i
    running_mean = 0.02 * i
    running_var = 1.0 + 0.1 * i / c
    eps = 1e-5
    scale = gamma / jnp.sqrt(running_var + eps)
    bias = beta - running_mean * scale
    return scale.reshape(1, c), bias.reshape(1, c)


def _conv_weight(key, cin, cout):
    """PyTorch-style kaiming-uniform-ish init for Conv2d(cin, cout, 3, bias=False)."""
    fan_in = cin * 9
    bound = 1.0 / np.sqrt(fan_in)
    w_oihw = jax.random.uniform(key, (cout, cin, 3, 3), jnp.float32, -bound, bound)
    return jnp.transpose(w_oihw, (2, 3, 1, 0))    # OIHW -> HWIO (3,3,Cin,Cout)


def init_down_params(key, in_channels, out_channels, mid_channels=None):
    if mid_channels is None:
        mid_channels = out_channels
    k1, k2 = jax.random.split(key)
    w1 = _conv_weight(k1, in_channels, mid_channels)
    s1, b1 = _fold_bn(mid_channels)
    w2 = _conv_weight(k2, mid_channels, out_channels)
    s2, b2 = _fold_bn(out_channels)
    return dict(w1=w1, s1=s1, b1=b1, w2=w2, s2=s2, b2=b2)


# ------------------------------ pure-JAX reference -------------------------- #

def _ref_down(x_nchw, params):
    x = jnp.transpose(x_nchw, (0, 2, 3, 1))
    N, H, W, C = x.shape
    x = x.reshape(N, H // 2, 2, W // 2, 2, C).max(axis=(2, 4))

    def cbr(x, w, s, b):
        y = lax.conv_general_dilated(
            x, w, window_strides=(1, 1), padding="SAME",
            dimension_numbers=("NHWC", "HWIO", "NHWC"))
        y = y * s.reshape(1, 1, 1, -1) + b.reshape(1, 1, 1, -1)
        return jnp.maximum(y, 0.0)

    x = cbr(x, params["w1"], params["s1"], params["b1"])
    x = cbr(x, params["w2"], params["s2"], params["b2"])
    return jnp.transpose(x, (0, 3, 1, 2))


# ----------------------------------- main ----------------------------------- #

if __name__ == "__main__":
    key = jax.random.PRNGKey(0)
    k_x, k_p = jax.random.split(key)

    N, C_in, H, W = 2, 4, 16, 16
    C_out = 8

    x = jax.random.normal(k_x, (N, C_in, H, W), dtype=jnp.float32)
    params = init_down_params(k_p, C_in, C_out)

    out = down_forward(x, params)
    out = jax.block_until_ready(out)

    assert out.shape == (N, C_out, H // 2, W // 2), out.shape

    ref = jax.block_until_ready(_ref_down(x, params))
    # bf16 MXU inputs (f32 accumulation) -> slightly looser tolerance vs f32 ref.
    np.testing.assert_allclose(np.asarray(out), np.asarray(ref), rtol=2e-2, atol=2e-2)

    print("KERNEL_OK")
</pallas_src>

<mosaic_0001>
module attributes {stable_mosaic.version = 11 : i64} {
  func.func @_down_fused_kernel(%arg0: i32, %arg1: i32, %arg2: memref<1x1x24x64xf32, #tpu.memory_space<vmem>>, %arg3: memref<36x8xbf16, #tpu.memory_space<vmem>>, %arg4: memref<1x8xf32, #tpu.memory_space<vmem>>, %arg5: memref<72x8xbf16, #tpu.memory_space<vmem>>, %arg6: memref<1x8xf32, #tpu.memory_space<vmem>>, %arg7: memref<1x64x8xf32, #tpu.memory_space<vmem>>, %arg8: memref<12x10x4xbf16, #tpu.memory_space<vmem>>, %arg9: memref<10x10x8xbf16, #tpu.memory_space<vmem>>) attributes {dimension_semantics = [#tpu.dimension_semantics<parallel>, #tpu.dimension_semantics<parallel>], iteration_bounds = array<i64: 2, 1>, scalar_prefetch = 0 : i64, scratch_operands = 2 : i64, tpu.core_type = #tpu.core_type<tc>, window_params = [{transform_indices = @transform_0, window_bounds = array<i64: 1, 1, 24, 64>}, {pipeline_mode = #tpu.pipeline_mode<synchronous>, transform_indices = @transform_1, window_bounds = array<i64: 36, 8>}, {pipeline_mode = #tpu.pipeline_mode<synchronous>, transform_indices = @transform_2, window_bounds = array<i64: 1, 8>}, {pipeline_mode = #tpu.pipeline_mode<synchronous>, transform_indices = @transform_3, window_bounds = array<i64: 72, 8>}, {pipeline_mode = #tpu.pipeline_mode<synchronous>, transform_indices = @transform_4, window_bounds = array<i64: 1, 8>}, {transform_indices = @transform_5, window_bounds = array<i64: 1, 64, 8>}]} {
    %c0 = arith.constant 0 : index
    %c0_0 = arith.constant 0 : index
    %c0_1 = arith.constant 0 : index
    %c0_2 = arith.constant 0 : index
    %0 = vector.load %arg2[%c0, %c0_0, %c0_1, %c0_2] : memref<1x1x24x64xf32, #tpu.memory_space<vmem>>, vector<1x1x24x64xf32>
    %1 = vector.shape_cast %0 : vector<1x1x24x64xf32> to vector<24x64xf32>
    %2 = vector.shape_cast %1 : vector<24x64xf32> to vector<12x2x64xf32>
    %3 = vector.extract_strided_slice %2 {offsets = [0, 0, 0], sizes = [12, 1, 64], strides = [1, 1, 1]} : vector<12x2x64xf32> to vector<12x1x64xf32>
    %4 = vector.shape_cast %3 : vector<12x1x64xf32> to vector<12x64xf32>
    %5 = vector.extract_strided_slice %2 {offsets = [0, 1, 0], sizes = [12, 1, 64], strides = [1, 1, 1]} : vector<12x2x64xf32> to vector<12x1x64xf32>
    %6 = vector.shape_cast %5 : vector<12x1x64xf32> to vector<12x64xf32>
    %7 = arith.maximumf %4, %6 : vector<12x64xf32>
    %8 = vector.shape_cast %7 : vector<12x64xf32> to vector<12x8x8xf32>
    %9 = vector.extract_strided_slice %8 {offsets = [0, 0, 0], sizes = [12, 8, 4], strides = [1, 1, 1]} : vector<12x8x8xf32> to vector<12x8x4xf32>
    %10 = vector.extract_strided_slice %8 {offsets = [0, 0, 4], sizes = [12, 8, 4], strides = [1, 1, 1]} : vector<12x8x8xf32> to vector<12x8x4xf32>
    %11 = arith.maximumf %9, %10 : vector<12x8x4xf32>
    %cst = arith.constant 0.000000e+00 : bf16
    %12 = vector.broadcast %cst : bf16 to vector<12x1x4xbf16>
    %c0_3 = arith.constant 0 : index
    %c0_4 = arith.constant 0 : index
    %c0_5 = arith.constant 0 : index
    %13 = vector.load %arg8[%c0_3, %c0_4, %c0_5] : memref<12x10x4xbf16, #tpu.memory_space<vmem>>, vector<12x1x4xbf16>
    tpu.vector_store %arg8[%c0_3, %c0_4, %c0_5], %12 {strides = array<i32>} : memref<12x10x4xbf16, #tpu.memory_space<vmem>>, vector<12x1x4xbf16>,
    %c0_6 = arith.constant 0 : index
    %c9 = arith.constant 9 : index
    %c0_7 = arith.constant 0 : index
    %14 = vector.load %arg8[%c0_6, %c9, %c0_7] : memref<12x10x4xbf16, #tpu.memory_space<vmem>>, vector<12x1x4xbf16>
    tpu.vector_store %arg8[%c0_6, %c9, %c0_7], %12 {strides = array<i32>} : memref<12x10x4xbf16, #tpu.memory_space<vmem>>, vector<12x1x4xbf16>,
    %15 = arith.truncf %11 : vector<12x8x4xf32> to vector<12x8x4xbf16>
    %c0_8 = arith.constant 0 : index
    %c1 = arith.constant 1 : index
    %c0_9 = arith.constant 0 : index
    %16 = vector.load %arg8[%c0_8, %c1, %c0_9] : memref<12x10x4xbf16, #tpu.memory_space<vmem>>, vector<12x8x4xbf16>
    tpu.vector_store %arg8[%c0_8, %c1, %c0_9], %15 {strides = array<i32>} : memref<12x10x4xbf16, #tpu.memory_space<vmem>>, vector<12x8x4xbf16>,
    %cst_10 = arith.constant 0.000000e+00 : f32
    %17 = vector.broadcast %cst_10 : f32 to vector<80x8xf32>
    %c0_11 = arith.constant 0 : index
    %c0_12 = arith.constant 0 : index
    %c0_13 = arith.constant 0 : index
    %18 = vector.load %arg8[%c0_11, %c0_12, %c0_13] : memref<12x10x4xbf16, #tpu.memory_space<vmem>>, vector<10x8x4xbf16>
    %19 = vector.shape_cast %18 : vector<10x8x4xbf16> to vector<80x4xbf16>
    %c0_14 = arith.constant 0 : index
    %c0_15 = arith.constant 0 : index
    %20 = vector.load %arg3[%c0_14, %c0_15] : memref<36x8xbf16, #tpu.memory_space<vmem>>, vector<4x8xbf16>
    %cst_16 = arith.constant dense<0.000000e+00> : vector<80x8xf32>
    %21 = tpu.matmul %19, %20, %cst_16 {dimension_numbers = #tpu.dot_dimension_numbers<[1], [0], [0], [1], [0, 0, 1, 1], [], []>} : vector<80x4xbf16>, vector<4x8xbf16>, vector<80x8xf32> -> vector<80x8xf32>
    %22 = arith.addf %17, %21 : vector<80x8xf32>
    %c0_17 = arith.constant 0 : index
    %c1_18 = arith.constant 1 : index
    %c0_19 = arith.constant 0 : index
    %23 = vector.load %arg8[%c0_17, %c1_18, %c0_19] : memref<12x10x4xbf16, #tpu.memory_space<vmem>>, vector<10x8x4xbf16>
    %24 = vector.shape_cast %23 : vector<10x8x4xbf16> to vector<80x4xbf16>
    %c4 = arith.constant 4 : index
    %c0_20 = arith.constant 0 : index
    %25 = vector.load %arg3[%c4, %c0_20] : memref<36x8xbf16, #tpu.memory_space<vmem>>, vector<4x8xbf16>
    %cst_21 = arith.constant dense<0.000000e+00> : vector<80x8xf32>
    %26 = tpu.matmul %24, %25, %cst_21 {dimension_numbers = #tpu.dot_dimension_numbers<[1], [0], [0], [1], [0, 0, 1, 1], [], []>} : vector<80x4xbf16>, vector<4x8xbf16>, vector<80x8xf32> -> vector<80x8xf32>
    %27 = arith.addf %22, %26 : vector<80x8xf32>
    %c0_22 = arith.constant 0 : index
    %c2 = arith.constant 2 : index
    %c0_23 = arith.constant 0 : index
    %28 = vector.load %arg8[%c0_22, %c2, %c0_23] : memref<12x10x4xbf16, #tpu.memory_space<vmem>>, vector<10x8x4xbf16>
    %29 = vector.shape_cast %28 : vector<10x8x4xbf16> to vector<80x4xbf16>
    %c8 = arith.constant 8 : index
    %c0_24 = arith.constant 0 : index
    %30 = vector.load %arg3[%c8, %c0_24] : memref<36x8xbf16, #tpu.memory_space<vmem>>, vector<4x8xbf16>
    %cst_25 = arith.constant dense<0.000000e+00> : vector<80x8xf32>
    %31 = tpu.matmul %29, %30, %cst_25 {dimension_numbers = #tpu.dot_dimension_numbers<[1], [0], [0], [1], [0, 0, 1, 1], [], []>} : vector<80x4xbf16>, vector<4x8xbf16>, vector<80x8xf32> -> vector<80x8xf32>
    %32 = arith.addf %27, %31 : vector<80x8xf32>
    %c1_26 = arith.constant 1 : index
    %c0_27 = arith.constant 0 : index
    %c0_28 = arith.constant 0 : index
    %33 = vector.load %arg8[%c1_26, %c0_27, %c0_28] : memref<12x10x4xbf16, #tpu.memory_space<vmem>>, vector<10x8x4xbf16>
    %34 = vector.shape_cast %33 : vector<10x8x4xbf16> to vector<80x4xbf16>
    %c12 = arith.constant 12 : index
    %c0_29 = arith.constant 0 : index
    %35 = vector.load %arg3[%c12, %c0_29] : memref<36x8xbf16, #tpu.memory_space<vmem>>, vector<4x8xbf16>
    %cst_30 = arith.constant dense<0.000000e+00> : vector<80x8xf32>
    %36 = tpu.matmul %34, %35, %cst_30 {dimension_numbers = #tpu.dot_dimension_numbers<[1], [0], [0], [1], [0, 0, 1, 1], [], []>} : vector<80x4xbf16>, vector<4x8xbf16>, vector<80x8xf32> -> vector<80x8xf32>
    %37 = arith.addf %32, %36 : vector<80x8xf32>
    %c1_31 = arith.constant 1 : index
    %c1_32 = arith.constant 1 : index
    %c0_33 = arith.constant 0 : index
    %38 = vector.load %arg8[%c1_31, %c1_32, %c0_33] : memref<12x10x4xbf16, #tpu.memory_space<vmem>>, vector<10x8x4xbf16>
    %39 = vector.shape_cast %38 : vector<10x8x4xbf16> to vector<80x4xbf16>
    %c16 = arith.constant 16 : index
    %c0_34 = arith.constant 0 : index
    %40 = vector.load %arg3[%c16, %c0_34] : memref<36x8xbf16, #tpu.memory_space<vmem>>, vector<4x8xbf16>
    %cst_35 = arith.constant dense<0.000000e+00> : vector<80x8xf32>
    %41 = tpu.matmul %39, %40, %cst_35 {dimension_numbers = #tpu.dot_dimension_numbers<[1], [0], [0], [1], [0, 0, 1, 1], [], []>} : vector<80x4xbf16>, vector<4x8xbf16>, vector<80x8xf32> -> vector<80x8xf32>
    %42 = arith.addf %37, %41 : vector<80x8xf32>
    %c1_36 = arith.constant 1 : index
    %c2_37 = arith.constant 2 : index
    %c0_38 = arith.constant 0 : index
    %43 = vector.load %arg8[%c1_36, %c2_37, %c0_38] : memref<12x10x4xbf16, #tpu.memory_space<vmem>>, vector<10x8x4xbf16>
    %44 = vector.shape_cast %43 : vector<10x8x4xbf16> to vector<80x4xbf16>
    %c20 = arith.constant 20 : index
    %c0_39 = arith.constant 0 : index
    %45 = vector.load %arg3[%c20, %c0_39] : memref<36x8xbf16, #tpu.memory_space<vmem>>, vector<4x8xbf16>
    %cst_40 = arith.constant dense<0.000000e+00> : vector<80x8xf32>
    %46 = tpu.matmul %44, %45, %cst_40 {dimension_numbers = #tpu.dot_dimension_numbers<[1], [0], [0], [1], [0, 0, 1, 1], [], []>} : vector<80x4xbf16>, vector<4x8xbf16>, vector<80x8xf32> -> vector<80x8xf32>
    %47 = arith.addf %42, %46 : vector<80x8xf32>
    %c2_41 = arith.constant 2 : index
    %c0_42 = arith.constant 0 : index
    %c0_43 = arith.constant 0 : index
    %48 = vector.load %arg8[%c2_41, %c0_42, %c0_43] : memref<12x10x4xbf16, #tpu.memory_space<vmem>>, vector<10x8x4xbf16>
    %49 = vector.shape_cast %48 : vector<10x8x4xbf16> to vector<80x4xbf16>
    %c24 = arith.constant 24 : index
    %c0_44 = arith.constant 0 : index
    %50 = vector.load %arg3[%c24, %c0_44] : memref<36x8xbf16, #tpu.memory_space<vmem>>, vector<4x8xbf16>
    %cst_45 = arith.constant dense<0.000000e+00> : vector<80x8xf32>
    %51 = tpu.matmul %49, %50, %cst_45 {dimension_numbers = #tpu.dot_dimension_numbers<[1], [0], [0], [1], [0, 0, 1, 1], [], []>} : vector<80x4xbf16>, vector<4x8xbf16>, vector<80x8xf32> -> vector<80x8xf32>
    %52 = arith.addf %47, %51 : vector<80x8xf32>
    %c2_46 = arith.constant 2 : index
    %c1_47 = arith.constant 1 : index
    %c0_48 = arith.constant 0 : index
    %53 = vector.load %arg8[%c2_46, %c1_47, %c0_48] : memref<12x10x4xbf16, #tpu.memory_space<vmem>>, vector<10x8x4xbf16>
    %54 = vector.shape_cast %53 : vector<10x8x4xbf16> to vector<80x4xbf16>
    %c28 = arith.constant 28 : index
    %c0_49 = arith.constant 0 : index
    %55 = vector.load %arg3[%c28, %c0_49] : memref<36x8xbf16, #tpu.memory_space<vmem>>, vector<4x8xbf16>
    %cst_50 = arith.constant dense<0.000000e+00> : vector<80x8xf32>
    %56 = tpu.matmul %54, %55, %cst_50 {dimension_numbers = #tpu.dot_dimension_numbers<[1], [0], [0], [1], [0, 0, 1, 1], [], []>} : vector<80x4xbf16>, vector<4x8xbf16>, vector<80x8xf32> -> vector<80x8xf32>
    %57 = arith.addf %52, %56 : vector<80x8xf32>
    %c2_51 = arith.constant 2 : index
    %c2_52 = arith.constant 2 : index
    %c0_53 = arith.constant 0 : index
    %58 = vector.load %arg8[%c2_51, %c2_52, %c0_53] : memref<12x10x4xbf16, #tpu.memory_space<vmem>>, vector<10x8x4xbf16>
    %59 = vector.shape_cast %58 : vector<10x8x4xbf16> to vector<80x4xbf16>
    %c32 = arith.constant 32 : index
    %c0_54 = arith.constant 0 : index
    %60 = vector.load %arg3[%c32, %c0_54] : memref<36x8xbf16, #tpu.memory_space<vmem>>, vector<4x8xbf16>
    %cst_55 = arith.constant dense<0.000000e+00> : vector<80x8xf32>
    %61 = tpu.matmul %59, %60, %cst_55 {dimension_numbers = #tpu.dot_dimension_numbers<[1], [0], [0], [1], [0, 0, 1, 1], [], []>} : vector<80x4xbf16>, vector<4x8xbf16>, vector<80x8xf32> -> vector<80x8xf32>
    %62 = arith.addf %57, %61 : vector<80x8xf32>
    %c0_56 = arith.constant 0 : index
    %c0_57 = arith.constant 0 : index
    %63 = vector.load %arg4[%c0_56, %c0_57] : memref<1x8xf32, #tpu.memory_space<vmem>>, vector<1x8xf32>
    %64 = vector.broadcast %63 : vector<1x8xf32> to vector<80x8xf32>
    %65 = arith.addf %62, %64 : vector<80x8xf32>
    %cst_58 = arith.constant 0.000000e+00 : f32
    %66 = vector.broadcast %cst_58 : f32 to vector<80x8xf32>
    %67 = arith.maximumf %65, %66 : vector<80x8xf32>
    %cst_59 = arith.constant 0.000000e+00 : bf16
    %68 = vector.broadcast %cst_59 : bf16 to vector<10x1x8xbf16>
    %c0_60 = arith.constant 0 : index
    %c0_61 = arith.constant 0 : index
    %c0_62 = arith.constant 0 : index
    %69 = vector.load %arg9[%c0_60, %c0_61, %c0_62] : memref<10x10x8xbf16, #tpu.memory_space<vmem>>, vector<10x1x8xbf16>
    tpu.vector_store %arg9[%c0_60, %c0_61, %c0_62], %68 {strides = array<i32>} : memref<10x10x8xbf16, #tpu.memory_space<vmem>>, vector<10x1x8xbf16>,
    %c0_63 = arith.constant 0 : index
    %c9_64 = arith.constant 9 : index
    %c0_65 = arith.constant 0 : index
    %70 = vector.load %arg9[%c0_63, %c9_64, %c0_65] : memref<10x10x8xbf16, #tpu.memory_space<vmem>>, vector<10x1x8xbf16>
    tpu.vector_store %arg9[%c0_63, %c9_64, %c0_65], %68 {strides = array<i32>} : memref<10x10x8xbf16, #tpu.memory_space<vmem>>, vector<10x1x8xbf16>,
    %71 = vector.shape_cast %67 : vector<80x8xf32> to vector<10x8x8xf32>
    %72 = arith.truncf %71 : vector<10x8x8xf32> to vector<10x8x8xbf16>
    %c0_66 = arith.constant 0 : index
    %c1_67 = arith.constant 1 : index
    %c0_68 = arith.constant 0 : index
    %73 = vector.load %arg9[%c0_66, %c1_67, %c0_68] : memref<10x10x8xbf16, #tpu.memory_space<vmem>>, vector<10x8x8xbf16>
    tpu.vector_store %arg9[%c0_66, %c1_67, %c0_68], %72 {strides = array<i32>} : memref<10x10x8xbf16, #tpu.memory_space<vmem>>, vector<10x8x8xbf16>,
    %cst_69 = arith.constant 0.000000e+00 : bf16
    %74 = vector.broadcast %cst_69 : bf16 to vector<1x10x8xbf16>
    %c0_i32 = arith.constant 0 : i32
    %75 = arith.cmpi eq, %arg1, %c0_i32 : i32
    %76 = arith.extui %75 : i1 to i32
    %c0_i32_70 = arith.constant 0 : i32
    %77 = arith.cmpi ne, %76, %c0_i32_70 : i32
    scf.if %77 {
      %c0_130 = arith.constant 0 : index
      %c0_131 = arith.constant 0 : index
      %c0_132 = arith.constant 0 : index
      %135 = vector.load %arg9[%c0_130, %c0_131, %c0_132] : memref<10x10x8xbf16, #tpu.memory_space<vmem>>, vector<1x10x8xbf16>
      tpu.vector_store %arg9[%c0_130, %c0_131, %c0_132], %74 {strides = array<i32>} : memref<10x10x8xbf16, #tpu.memory_space<vmem>>, vector<1x10x8xbf16>,
    } else {
    }
    %c0_i32_71 = arith.constant 0 : i32
    %78 = arith.cmpi eq, %arg1, %c0_i32_71 : i32
    %79 = arith.extui %78 : i1 to i32
    %c0_i32_72 = arith.constant 0 : i32
    %80 = arith.cmpi ne, %79, %c0_i32_72 : i32
    scf.if %80 {
      %c9_130 = arith.constant 9 : index
      %c0_131 = arith.constant 0 : index
      %c0_132 = arith.constant 0 : index
      %135 = vector.load %arg9[%c9_130, %c0_131, %c0_132] : memref<10x10x8xbf16, #tpu.memory_space<vmem>>, vector<1x10x8xbf16>
      tpu.vector_store %arg9[%c9_130, %c0_131, %c0_132], %74 {strides = array<i32>} : memref<10x10x8xbf16, #tpu.memory_space<vmem>>, vector<1x10x8xbf16>,
    } else {
    }
    %cst_73 = arith.constant 0.000000e+00 : f32
    %81 = vector.broadcast %cst_73 : f32 to vector<64x8xf32>
    %c0_74 = arith.constant 0 : index
    %c0_75 = arith.constant 0 : index
    %c0_76 = arith.constant 0 : index
    %82 = vector.load %arg9[%c0_74, %c0_75, %c0_76] : memref<10x10x8xbf16, #tpu.memory_space<vmem>>, vector<8x8x8xbf16>
    %83 = vector.shape_cast %82 : vector<8x8x8xbf16> to vector<64x8xbf16>
    %c0_77 = arith.constant 0 : index
    %c0_78 = arith.constant 0 : index
    %84 = vector.load %arg5[%c0_77, %c0_78] : memref<72x8xbf16, #tpu.memory_space<vmem>>, vector<8x8xbf16>
    %cst_79 = arith.constant dense<0.000000e+00> : vector<64x8xf32>
    %85 = tpu.matmul %83, %84, %cst_79 {dimension_numbers = #tpu.dot_dimension_numbers<[1], [0], [0], [1], [0, 0, 1, 1], [], []>} : vector<64x8xbf16>, vector<8x8xbf16>, vector<64x8xf32> -> vector<64x8xf32>
    %86 = arith.addf %81, %85 : vector<64x8xf32>
    %c0_80 = arith.constant 0 : index
    %c1_81 = arith.constant 1 : index
    %c0_82 = arith.constant 0 : index
    %87 = vector.load %arg9[%c0_80, %c1_81, %c0_82] : memref<10x10x8xbf16, #tpu.memory_space<vmem>>, vector<8x8x8xbf16>
    %88 = vector.shape_cast %87 : vector<8x8x8xbf16> to vector<64x8xbf16>
    %c8_83 = arith.constant 8 : index
    %c0_84 = arith.constant 0 : index
    %89 = vector.load %arg5[%c8_83, %c0_84] : memref<72x8xbf16, #tpu.memory_space<vmem>>, vector<8x8xbf16>
    %cst_85 = arith.constant dense<0.000000e+00> : vector<64x8xf32>
    %90 = tpu.matmul %88, %89, %cst_85 {dimension_numbers = #tpu.dot_dimension_numbers<[1], [0], [0], [1], [0, 0, 1, 1], [], []>} : vector<64x8xbf16>, vector<8x8xbf16>, vector<64x8xf32> -> vector<64x8xf32>
    %91 = arith.addf %86, %90 : vector<64x8xf32>
    %c0_86 = arith.constant 0 : index
    %c2_87 = arith.constant 2 : index
    %c0_88 = arith.constant 0 : index
    %92 = vector.load %arg9[%c0_86, %c2_87, %c0_88] : memref<10x10x8xbf16, #tpu.memory_space<vmem>>, vector<8x8x8xbf16>
    %93 = vector.shape_cast %92 : vector<8x8x8xbf16> to vector<64x8xbf16>
    %c16_89 = arith.constant 16 : index
    %c0_90 = arith.constant 0 : index
    %94 = vector.load %arg5[%c16_89, %c0_90] : memref<72x8xbf16, #tpu.memory_space<vmem>>, vector<8x8xbf16>
    %cst_91 = arith.constant dense<0.000000e+00> : vector<64x8xf32>
    %95 = tpu.matmul %93, %94, %cst_91 {dimension_numbers = #tpu.dot_dimension_numbers<[1], [0], [0], [1], [0, 0, 1, 1], [], []>} : vector<64x8xbf16>, vector<8x8xbf16>, vector<64x8xf32> -> vector<64x8xf32>
    %96 = arith.addf %91, %95 : vector<64x8xf32>
    %c1_92 = arith.constant 1 : index
    %c0_93 = arith.constant 0 : index
    %c0_94 = arith.constant 0 : index
    %97 = vector.load %arg9[%c1_92, %c0_93, %c0_94] : memref<10x10x8xbf16, #tpu.memory_space<vmem>>, vector<8x8x8xbf16>
    %98 = vector.shape_cast %97 : vector<8x8x8xbf16> to vector<64x8xbf16>
    %c24_95 = arith.constant 24 : index
    %c0_96 = arith.constant 0 : index
    %99 = vector.load %arg5[%c24_95, %c0_96] : memref<72x8xbf16, #tpu.memory_space<vmem>>, vector<8x8xbf16>
    %cst_97 = arith.constant dense<0.000000e+00> : vector<64x8xf32>
    %100 = tpu.matmul %98, %99, %cst_97 {dimension_numbers = #tpu.dot_dimension_numbers<[1], [0], [0], [1], [0, 0, 1, 1], [], []>} : vector<64x8xbf16>, vector<8x8xbf16>, vector<64x8xf32> -> vector<64x8xf32>
    %101 = arith.addf %96, %100 : vector<64x8xf32>
    %c1_98 = arith.constant 1 : index
    %c1_99 = arith.constant 1 : index
    %c0_100 = arith.constant 0 : index
    %102 = vector.load %arg9[%c1_98, %c1_99, %c0_100] : memref<10x10x8xbf16, #tpu.memory_space<vmem>>, vector<8x8x8xbf16>
    %103 = vector.shape_cast %102 : vector<8x8x8xbf16> to vector<64x8xbf16>
    %c32_101 = arith.constant 32 : index
    %c0_102 = arith.constant 0 : index
    %104 = vector.load %arg5[%c32_101, %c0_102] : memref<72x8xbf16, #tpu.memory_space<vmem>>, vector<8x8xbf16>
    %cst_103 = arith.constant dense<0.000000e+00> : vector<64x8xf32>
    %105 = tpu.matmul %103, %104, %cst_103 {dimension_numbers = #tpu.dot_dimension_numbers<[1], [0], [0], [1], [0, 0, 1, 1], [], []>} : vector<64x8xbf16>, vector<8x8xbf16>, vector<64x8xf32> -> vector<64x8xf32>
    %106 = arith.addf %101, %105 : vector<64x8xf32>
    %c1_104 = arith.constant 1 : index
    %c2_105 = arith.constant 2 : index
    %c0_106 = arith.constant 0 : index
    %107 = vector.load %arg9[%c1_104, %c2_105, %c0_106] : memref<10x10x8xbf16, #tpu.memory_space<vmem>>, vector<8x8x8xbf16>
    %108 = vector.shape_cast %107 : vector<8x8x8xbf16> to vector<64x8xbf16>
    %c40 = arith.constant 40 : index
    %c0_107 = arith.constant 0 : index
    %109 = vector.load %arg5[%c40, %c0_107] : memref<72x8xbf16, #tpu.memory_space<vmem>>, vector<8x8xbf16>
    %cst_108 = arith.constant dense<0.000000e+00> : vector<64x8xf32>
    %110 = tpu.matmul %108, %109, %cst_108 {dimension_numbers = #tpu.dot_dimension_numbers<[1], [0], [0], [1], [0, 0, 1, 1], [], []>} : vector<64x8xbf16>, vector<8x8xbf16>, vector<64x8xf32> -> vector<64x8xf32>
    %111 = arith.addf %106, %110 : vector<64x8xf32>
    %c2_109 = arith.constant 2 : index
    %c0_110 = arith.constant 0 : index
    %c0_111 = arith.constant 0 : index
    %112 = vector.load %arg9[%c2_109, %c0_110, %c0_111] : memref<10x10x8xbf16, #tpu.memory_space<vmem>>, vector<8x8x8xbf16>
    %113 = vector.shape_cast %112 : vector<8x8x8xbf16> to vector<64x8xbf16>
    %c48 = arith.constant 48 : index
    %c0_112 = arith.constant 0 : index
    %114 = vector.load %arg5[%c48, %c0_112] : memref<72x8xbf16, #tpu.memory_space<vmem>>, vector<8x8xbf16>
    %cst_113 = arith.constant dense<0.000000e+00> : vector<64x8xf32>
    %115 = tpu.matmul %113, %114, %cst_113 {dimension_numbers = #tpu.dot_dimension_numbers<[1], [0], [0], [1], [0, 0, 1, 1], [], []>} : vector<64x8xbf16>, vector<8x8xbf16>, vector<64x8xf32> -> vector<64x8xf32>
    %116 = arith.addf %111, %115 : vector<64x8xf32>
    %c2_114 = arith.constant 2 : index
    %c1_115 = arith.constant 1 : index
    %c0_116 = arith.constant 0 : index
    %117 = vector.load %arg9[%c2_114, %c1_115, %c0_116] : memref<10x10x8xbf16, #tpu.memory_space<vmem>>, vector<8x8x8xbf16>
    %118 = vector.shape_cast %117 : vector<8x8x8xbf16> to vector<64x8xbf16>
    %c56 = arith.constant 56 : index
    %c0_117 = arith.constant 0 : index
    %119 = vector.load %arg5[%c56, %c0_117] : memref<72x8xbf16, #tpu.memory_space<vmem>>, vector<8x8xbf16>
    %cst_118 = arith.constant dense<0.000000e+00> : vector<64x8xf32>
    %120 = tpu.matmul %118, %119, %cst_118 {dimension_numbers = #tpu.dot_dimension_numbers<[1], [0], [0], [1], [0, 0, 1, 1], [], []>} : vector<64x8xbf16>, vector<8x8xbf16>, vector<64x8xf32> -> vector<64x8xf32>
    %121 = arith.addf %116, %120 : vector<64x8xf32>
    %c2_119 = arith.constant 2 : index
    %c2_120 = arith.constant 2 : index
    %c0_121 = arith.constant 0 : index
    %122 = vector.load %arg9[%c2_119, %c2_120, %c0_121] : memref<10x10x8xbf16, #tpu.memory_space<vmem>>, vector<8x8x8xbf16>
    %123 = vector.shape_cast %122 : vector<8x8x8xbf16> to vector<64x8xbf16>
    %c64 = arith.constant 64 : index
    %c0_122 = arith.constant 0 : index
    %124 = vector.load %arg5[%c64, %c0_122] : memref<72x8xbf16, #tpu.memory_space<vmem>>, vector<8x8xbf16>
    %cst_123 = arith.constant dense<0.000000e+00> : vector<64x8xf32>
    %125 = tpu.matmul %123, %124, %cst_123 {dimension_numbers = #tpu.dot_dimension_numbers<[1], [0], [0], [1], [0, 0, 1, 1], [], []>} : vector<64x8xbf16>, vector<8x8xbf16>, vector<64x8xf32> -> vector<64x8xf32>
    %126 = arith.addf %121, %125 : vector<64x8xf32>
    %c0_124 = arith.constant 0 : index
    %c0_125 = arith.constant 0 : index
    %127 = vector.load %arg6[%c0_124, %c0_125] : memref<1x8xf32, #tpu.memory_space<vmem>>, vector<1x8xf32>
    %128 = vector.broadcast %127 : vector<1x8xf32> to vector<64x8xf32>
    %129 = arith.addf %126, %128 : vector<64x8xf32>
    %cst_126 = arith.constant 0.000000e+00 : f32
    %130 = vector.broadcast %cst_126 : f32 to vector<64x8xf32>
    %131 = arith.maximumf %129, %130 : vector<64x8xf32>
    %c0_127 = arith.constant 0 : index
    %c0_128 = arith.constant 0 : index
    %c0_129 = arith.constant 0 : index
    %132 = vector.load %arg7[%c0_127, %c0_128, %c0_129] : memref<1x64x8xf32, #tpu.memory_space<vmem>>, vector<1x64x8xf32>
    %133 = vector.shape_cast %132 : vector<1x64x8xf32> to vector<64x8xf32>
    %134 = vector.shape_cast %131 : vector<64x8xf32> to vector<1x64x8xf32>
    tpu.vector_store %arg7[%c0_127, %c0_128, %c0_129], %134 {strides = array<i32>} : memref<1x64x8xf32, #tpu.memory_space<vmem>>, vector<1x64x8xf32>,
    return
  }
  func.func @transform_0(%arg0: i32, %arg1: i32) -> (i32, i32, i32, i32) {
    %c0_i32 = arith.constant 0 : i32
    %c0_i32_0 = arith.constant 0 : i32
    %c0_i32_1 = arith.constant 0 : i32
    return %arg0, %arg1, %c0_i32, %c0_i32_0 : i32, i32, i32, i32
  }
  func.func @transform_1(%arg0: i32, %arg1: i32) -> (i32, i32) {
    %c0_i32 = arith.constant 0 : i32
    %c0_i32_0 = arith.constant 0 : i32
    %c0_i32_1 = arith.constant 0 : i32
    return %c0_i32, %c0_i32_0 : i32, i32
  }
  func.func @transform_2(%arg0: i32, %arg1: i32) -> (i32, i32) {
    %c0_i32 = arith.constant 0 : i32
    %c0_i32_0 = arith.constant 0 : i32
    %c0_i32_1 = arith.constant 0 : i32
    return %c0_i32, %c0_i32_0 : i32, i32
  }
  func.func @transform_3(%arg0: i32, %arg1: i32) -> (i32, i32) {
    %c0_i32 = arith.constant 0 : i32
    %c0_i32_0 = arith.constant 0 : i32
    %c0_i32_1 = arith.constant 0 : i32
    return %c0_i32, %c0_i32_0 : i32, i32
  }
  func.func @transform_4(%arg0: i32, %arg1: i32) -> (i32, i32) {
    %c0_i32 = arith.constant 0 : i32
    %c0_i32_0 = arith.constant 0 : i32
    %c0_i32_1 = arith.constant 0 : i32
    return %c0_i32, %c0_i32_0 : i32, i32
  }
  func.func @transform_5(%arg0: i32, %arg1: i32) -> (i32, i32, i32) {
    %c0_i32 = arith.constant 0 : i32
    %c0_i32_0 = arith.constant 0 : i32
    return %arg0, %arg1, %c0_i32 : i32, i32, i32
  }
}

</mosaic_0001>

<llo_original>
// kernel: tpu_custom_call.1
$region0: #{tpu_custom_call.1}
  #allocation0 [shape = 'u32[]', space=smem, size = 0x4, offset = 0x4, fixed_abs, tag = 'smem constant byte address 0x4 - core index']
  #allocation1 [shape = 'u32[72,128]{1,0:T(1,128)}', space=vmem, size = 0x9000, scoped, tag = 'internal scratch']
  #allocation2 [shape = 'bf16[12,10,4]{2,1,0:T(8,128)(2,1)}', space=vmem, size = 0xc000, scoped, tag = 'scratch operand']
  #allocation3 [shape = 'bf16[10,10,8]{2,1,0:T(8,128)(2,1)}', space=vmem, size = 0xa000, scoped, tag = 'scratch operand']
  %s0 = inlined_call_operand.vmem [shape: f32[2,1,24,64], index: 0, kind: input, shape index: {}]
  %s1 = inlined_call_operand.vmem [shape: bf16[36,8], index: 1, kind: input, shape index: {}]
  %s2 = inlined_call_operand.vmem [shape: f32[1,8], index: 2, kind: input, shape index: {}]
  %s3 = inlined_call_operand.vmem [shape: bf16[72,8], index: 3, kind: input, shape index: {}]
  %s4 = inlined_call_operand.vmem [shape: f32[1,8], index: 4, kind: input, shape index: {}]
  %s5 = inlined_call_operand.vmem [shape: f32[2,64,8], index: 5, kind: output, shape index: {}]
  %s6 = sld [smem:[#allocation0]]
  $region57: #{tpu_custom_call.1} parent=0
    _
  %s8 = ssub.s32 1, %s6
  %s9 = scalar_select 0, %s8, %s6
  loop: start=0, step=1, limit=4
  $region2: #{tpu_custom_call.1} parent=0 // loop_pre_header
    _
  $region3: #{tpu_custom_call.1} parent=0 // loop_header
    %s11 = sphi 0, %s15
    %p12 = scmp.ge.s32.totalorder %s11, 4
    %s18 = sphi 0, %s30
    %s19 = sphi 0, %s26
    %s20 = sphi 0, %s18
    %s21 = sphi 0, %s19
    %s22 = sphi 0, %s20
    %s23 = sphi 0, %s21
    %s35 = sphi 0, %s37
    %s38 = sphi 0, %s35
    %s39 = sphi 0, %s38
    %s55 = sphi 0, %s39
    %s59 = sphi 0, %s59
    %s61 = sphi 0, %s59
    %s62 = sphi 0, %s61
    %s76 = sphi 0, %s62
    %s80 = sphi 0, %s80
    %s82 = sphi 0, %s80
    %s83 = sphi 0, %s82
    %s97 = sphi 0, %s83
    %s101 = sphi 0, %s101
    %s103 = sphi 0, %s101
    %s104 = sphi 0, %s103
    %s118 = sphi 0, %s104
    %s122 = sphi 0, %s122
    %s124 = sphi 0, %s122
    %s125 = sphi 0, %s124
    %s139 = sphi 0, %s125
    %s147 = sphi 0, %s149
    %s150 = sphi 0, %s147
    %s151 = sphi 0, %s150
    %s167 = sphi 0, %s151
  $region4: #{tpu_custom_call.1} parent=0 // loop_header_branch
    %14 = sbr.rel (%p12) target = $region8
  $region5: #{tpu_custom_call.1} parent=0 // loop_body
    %s16 = ssub.s32 %s11, 1
    %s17 = ssub.s32 %s11, 2
    %s24 = sadd.s32 1, %s19
    %p25 = scmp.ge.s32.totalorder %s24, 1
    %s26 = scalar_select %p25, 0, %s24
    %s27 = sadd.s32 1, %s18
    %s28 = scalar_select %p25, %s27, %s18
    %p29 = scmp.ge.s32.totalorder %s28, 2
    %s30 = scalar_select %p29, 0, %s28
    %s31 = ssub.s32 %s18, %s30
    %s32 = ssub.s32 %s19, %s26
    %s33 = sor.u32 %s31, %s32
    %p34 = scmp.eq.s32.totalorder %s33, 0
    %s36 = sadd.s32 %s35, 1
    %s37 = scalar_select %p34, %s35, %s36
    %p40 = pneg %p34
    %p41 = scmp.eq.s32.totalorder %s11, 1
    %p42 = por %p40, %p41
    %p43 = scmp.ne.s32.totalorder %s35, %s38
    %p44 = scmp.eq.s32.totalorder %s11, 0
    %p45 = por %p43, %p44
    %p46 = scmp.ne.s32.totalorder %s35, %s38
    %p47 = scmp.eq.s32.totalorder %s16, 1
    %p48 = por %p46, %p47
    %p49 = scmp.ne.s32.totalorder %s38, %s39
    %p50 = scmp.eq.s32.totalorder %s16, 0
    %p51 = por %p49, %p50
    %p52 = scmp.ne.s32.totalorder %s38, %s39
    %p53 = scmp.eq.s32.totalorder %s17, 1
    %p54 = por %p52, %p53
    %p56 = scmp.ne.s32.totalorder %s39, %s55
    %p57 = scmp.eq.s32.totalorder %s17, 0
    %p58 = por %p56, %p57
    %s60 = sadd.s32 %s59, 1
    %p63 = scmp.eq.s32.totalorder %s11, 1
    %p64 = scmp.ne.s32.totalorder %s59, %s61
    %p65 = scmp.eq.s32.totalorder %s11, 0
    %p66 = por %p64, %p65
    %p67 = scmp.ne.s32.totalorder %s59, %s61
    %p68 = scmp.eq.s32.totalorder %s16, 1
    %p69 = por %p67, %p68
    %p70 = scmp.ne.s32.totalorder %s61, %s62
    %p71 = scmp.eq.s32.totalorder %s16, 0
    %p72 = por %p70, %p71
    %p73 = scmp.ne.s32.totalorder %s61, %s62
    %p74 = scmp.eq.s32.totalorder %s17, 1
    %p75 = por %p73, %p74
    %p77 = scmp.ne.s32.totalorder %s62, %s76
    %p78 = scmp.eq.s32.totalorder %s17, 0
    %p79 = por %p77, %p78
    %s81 = sadd.s32 %s80, 1
    %p84 = scmp.eq.s32.totalorder %s11, 1
    %p85 = scmp.ne.s32.totalorder %s80, %s82
    %p86 = scmp.eq.s32.totalorder %s11, 0
    %p87 = por %p85, %p86
    %p88 = scmp.ne.s32.totalorder %s80, %s82
    %p89 = scmp.eq.s32.totalorder %s16, 1
    %p90 = por %p88, %p89
    %p91 = scmp.ne.s32.totalorder %s82, %s83
    %p92 = scmp.eq.s32.totalorder %s16, 0
    %p93 = por %p91, %p92
    %p94 = scmp.ne.s32.totalorder %s82, %s83
    %p95 = scmp.eq.s32.totalorder %s17, 1
    %p96 = por %p94, %p95
    %p98 = scmp.ne.s32.totalorder %s83, %s97
    %p99 = scmp.eq.s32.totalorder %s17, 0
    %p100 = por %p98, %p99
    %s102 = sadd.s32 %s101, 1
    %p105 = scmp.eq.s32.totalorder %s11, 1
    %p106 = scmp.ne.s32.totalorder %s101, %s103
    %p107 = scmp.eq.s32.totalorder %s11, 0
    %p108 = por %p106, %p107
    %p109 = scmp.ne.s32.totalorder %s101, %s103
    %p110 = scmp.eq.s32.totalorder %s16, 1
    %p111 = por %p109, %p110
    %p112 = scmp.ne.s32.totalorder %s103, %s104
    %p113 = scmp.eq.s32.totalorder %s16, 0
    %p114 = por %p112, %p113
    %p115 = scmp.ne.s32.totalorder %s103, %s104
    %p116 = scmp.eq.s32.totalorder %s17, 1
    %p117 = por %p115, %p116
    %p119 = scmp.ne.s32.totalorder %s104, %s118
    %p120 = scmp.eq.s32.totalorder %s17, 0
    %p121 = por %p119, %p120
    %s123 = sadd.s32 %s122, 1
    %p126 = scmp.eq.s32.totalorder %s11, 1
    %p127 = scmp.ne.s32.totalorder %s122, %s124
    %p128 = scmp.eq.s32.totalorder %s11, 0
    %p129 = por %p127, %p128
    %p130 = scmp.ne.s32.totalorder %s122, %s124
    %p131 = scmp.eq.s32.totalorder %s16, 1
    %p132 = por %p130, %p131
    %p133 = scmp.ne.s32.totalorder %s124, %s125
    %p134 = scmp.eq.s32.totalorder %s16, 0
    %p135 = por %p133, %p134
    %p136 = scmp.ne.s32.totalorder %s124, %s125
    %p137 = scmp.eq.s32.totalorder %s17, 1
    %p138 = por %p136, %p137
    %p140 = scmp.ne.s32.totalorder %s125, %s139
    %p141 = scmp.eq.s32.totalorder %s17, 0
    %p142 = por %p140, %p141
    %s143 = ssub.s32 %s18, %s30
    %s144 = ssub.s32 %s19, %s26
    %s145 = sor.u32 %s143, %s144
    %p146 = scmp.eq.s32.totalorder %s145, 0
    %s148 = sadd.s32 %s147, 1
    %s149 = scalar_select %p146, %s147, %s148
    %p152 = pneg %p146
    %p153 = scmp.eq.s32.totalorder %s11, 1
    %p154 = por %p152, %p153
    %p155 = scmp.ne.s32.totalorder %s147, %s150
    %p156 = scmp.eq.s32.totalorder %s11, 0
    %p157 = por %p155, %p156
    %p158 = scmp.ne.s32.totalorder %s147, %s150
    %p159 = scmp.eq.s32.totalorder %s16, 1
    %p160 = por %p158, %p159
    %p161 = scmp.ne.s32.totalorder %s150, %s151
    %p162 = scmp.eq.s32.totalorder %s16, 0
    %p163 = por %p161, %p162
    %p164 = scmp.ne.s32.totalorder %s150, %s151
    %p165 = scmp.eq.s32.totalorder %s17, 1
    %p166 = por %p164, %p165
    %p168 = scmp.ne.s32.totalorder %s151, %s167
    %p169 = scmp.eq.s32.totalorder %s17, 0
    %p170 = por %p168, %p169
    %p171 = scmp.le.s32.totalorder 1, %s11
    %p172 = scmp.lt.s32.totalorder %s11, 3
    %p173 = pnand %p171, %p172
    %p174 = pneg %p173
    // Predicated region
    $region9: #{tpu_custom_call.1} parent=5 // pred_check
      _
    $region10: #{tpu_custom_call.1} parent=5 // pred_check_branch
      %176 = sbr.rel (%p173) target = $region12
    $region11: #{tpu_custom_call.1} parent=5 // pred_region
      %s177 = ssub.s32 %s11, 1
      // Predicated region
      $region13: #{tpu_custom_call.1} parent=11 // pred_check
        %p178 = pneg %p72
      $region14: #{tpu_custom_call.1} parent=11 // pred_check_branch
        %180 = sbr.rel (%p178) target = $region16
      $region15: #{tpu_custom_call.1} parent=11 // pred_region
        _
      $region16: #{tpu_custom_call.1} parent=11 // pred_fallthru
        _
      // Predicated region
      $region17: #{tpu_custom_call.1} parent=11 // pred_check
        %p181 = pneg %p93
      $region18: #{tpu_custom_call.1} parent=11 // pred_check_branch
        %183 = sbr.rel (%p181) target = $region20
      $region19: #{tpu_custom_call.1} parent=11 // pred_region
        _
      $region20: #{tpu_custom_call.1} parent=11 // pred_fallthru
        _
      // Predicated region
      $region21: #{tpu_custom_call.1} parent=11 // pred_check
        %p184 = pneg %p114
      $region22: #{tpu_custom_call.1} parent=11 // pred_check_branch
        %186 = sbr.rel (%p184) target = $region24
      $region23: #{tpu_custom_call.1} parent=11 // pred_region
        _
      $region24: #{tpu_custom_call.1} parent=11 // pred_fallthru
        _
      // Predicated region
      $region25: #{tpu_custom_call.1} parent=11 // pred_check
        %p187 = pneg %p135
      $region26: #{tpu_custom_call.1} parent=11 // pred_check_branch
        %189 = sbr.rel (%p187) target = $region28
      $region27: #{tpu_custom_call.1} parent=11 // pred_region
        _
      $region28: #{tpu_custom_call.1} parent=11 // pred_fallthru
        _
    $region12: #{tpu_custom_call.1} parent=5 // pred_fallthru
      _
    %p190 = scmp.lt.s32.totalorder %s11, 2
    // Predicated region
    $region29: #{tpu_custom_call.1} parent=5 // pred_check
      %p191 = pneg %p190
    $region30: #{tpu_custom_call.1} parent=5 // pred_check_branch
      %193 = sbr.rel (%p191) target = $region32
    $region31: #{tpu_custom_call.1} parent=5 // pred_region
      // Predicated region
      $region33: #{tpu_custom_call.1} parent=31 // pred_check
        %p194 = pneg %p45
      $region34: #{tpu_custom_call.1} parent=31 // pred_check_branch
        %196 = sbr.rel (%p194) target = $region36
      $region35: #{tpu_custom_call.1} parent=31 // pred_region
        %p197 = scmp.lt.s32.totalorder %s18, 1
        %s198 = scalar_select %p197, %s18, 1
        %p199 = scmp.lt.s32.totalorder %s19, 0
        %s200 = scalar_select %p199, %s19, 0
        %s201 = smul.addr %s200, 3
        %s202 = smul.addr %s198, 3
        %s203 = sadd.s32 %s201, %s202
        %s204 = smul.addr %s203, 8
        %s205 = scalar_lea.vmem %s0, %s204
      $region36: #{tpu_custom_call.1} parent=31 // pred_fallthru
        _
    $region32: #{tpu_custom_call.1} parent=5 // pred_fallthru
      _
    %p206 = scmp.le.s32.totalorder 1, %s11
    %p207 = scmp.lt.s32.totalorder %s11, 3
    %p208 = pnand %p206, %p207
    %p209 = pneg %p208
    // Predicated region
    $region37: #{tpu_custom_call.1} parent=5 // pred_check
      _
    $region38: #{tpu_custom_call.1} parent=5 // pred_check_branch
      %211 = sbr.rel (%p208) target = $region40
    $region39: #{tpu_custom_call.1} parent=5 // pred_region
      %s212 = ssub.s32 %s11, 1
      %p213 = scmp.lt.s32.totalorder %s20, 1
      %s214 = scalar_select %p213, %s20, 1
      %p215 = scmp.lt.s32.totalorder %s21, 0
      %s216 = scalar_select %p215, %s21, 0
      %s217 = smul.addr %s216, 3
      %s218 = smul.addr %s214, 3
      %s219 = sadd.s32 %s217, %s218
      %s220 = smul.addr %s219, 8
      %s221 = scalar_lea.vmem %s0, %s220
      %p222 = pneg %p51
      %p223 = pneg %p48
      %p224 = pneg %p72
      %p225 = pneg %p69
      %p226 = pneg %p93
      %p227 = pneg %p90
      %p228 = pneg %p114
      %p229 = pneg %p111
      %p230 = pneg %p135
      %p231 = pneg %p132
      %p232 = pneg %p163
      %p233 = pneg %p160
      %s234 = smul.u32 8, %s21
      %p235 = scmp.lt.s32.totalorder %s20, 1
      %s236 = scalar_select %p235, %s20, 1
      %p237 = scmp.lt.s32.totalorder %s234, 7
      %s238 = scalar_select %p237, %s234, 7
      %s239 = smul.addr %s236, 8
      %s240 = sadd.s32 %s238, %s239
      %s241 = smul.addr %s240, 8
      %s242 = scalar_lea.vmem %s5, %s241
      %p243 = scmp.lt.s32.totalorder %s20, 1
      %s244 = scalar_select %p243, %s20, 1
      %p245 = scmp.lt.s32.totalorder %s21, 0
      %s246 = scalar_select %p245, %s21, 0
      %s247 = smul.addr %s246, 3
      %s248 = smul.addr %s244, 3
      %s249 = sadd.s32 %s247, %s248
      %s250 = smul.addr %s249, 8
      %s251 = scalar_lea.vmem %s0, %s250
      %s252 = smul.u32 8, %s21
      %p253 = scmp.lt.s32.totalorder %s20, 1
      %s254 = scalar_select %p253, %s20, 1
      %p255 = scmp.lt.s32.totalorder %s252, 7
      %s256 = scalar_select %p255, %s252, 7
      %s257 = smul.addr %s254, 8
      %s258 = sadd.s32 %s256, %s257
      %s259 = smul.addr %s258, 8
      %s260 = scalar_lea.vmem %s5, %s259
      %s261 = smul.u32 8, %s21
      %v263 = vld [vmem:[%s251] sm:$0xff]
      %v264 = vld [vmem:[%s251 + $0x8] sm:$0xff]
      %v265 = vld [vmem:[%s251 + $0x10] sm:$0xff]
      %v269 = vrot.slane %v263, 2
      %v270 = vrot.slane %v263, 4
      %v271 = vrot.slane %v263, 6
      %v272 = vrot.slane %v264, 2
      %v273 = vrot.slane %v264, 4
      %v274 = vrot.slane %v264, 6
      %v275 = vrot.slane %v265, 2
      %v276 = vrot.slane %v265, 4
      %v277 = vrot.slane %v265, 6
      %v287 = vrot.slane %v263, 7
      %v288 = vrot.slane %v287, 2
      %v289 = vrot.slane %v269, 7
      %v290 = vrot.slane %v289, 2
      %v291 = vrot.slane %v270, 7
      %v292 = vrot.slane %v291, 2
      %v293 = vrot.slane %v271, 7
      %v294 = vrot.slane %v293, 2
      %v295 = vrot.slane %v264, 7
      %v296 = vrot.slane %v295, 2
      %v297 = vrot.slane %v272, 7
      %v298 = vrot.slane %v297, 2
      %v299 = vrot.slane %v273, 7
      %v300 = vrot.slane %v299, 2
      %v301 = vrot.slane %v274, 7
      %v302 = vrot.slane %v301, 2
      %v303 = vrot.slane %v265, 7
      %v304 = vrot.slane %v303, 2
      %v305 = vrot.slane %v275, 7
      %v306 = vrot.slane %v305, 2
      %v307 = vrot.slane %v276, 7
      %v308 = vrot.slane %v307, 2
      %v309 = vrot.slane %v277, 7
      %v310 = vrot.slane %v309, 2
      %v323 = vmax.f32 %v263, %v288
      %v324 = vmax.f32 %v269, %v290
      %v325 = vmax.f32 %v270, %v292
      %v326 = vmax.f32 %v271, %v294
      %v327 = vmax.f32 %v264, %v296
      %v328 = vmax.f32 %v272, %v298
      %v329 = vmax.f32 %v273, %v300
      %v330 = vmax.f32 %v274, %v302
      %v331 = vmax.f32 %v265, %v304
      %v332 = vmax.f32 %v275, %v306
      %v333 = vmax.f32 %v276, %v308
      %v334 = vmax.f32 %v277, %v310
      %347 = vrot.lane.b32.xlu0 %v323, 120
      %v348 = vpop.permute.xlu0 %347
      %349 = vrot.lane.b32.xlu0 %v324, 120
      %v350 = vpop.permute.xlu0 %349
      %351 = vrot.lane.b32.xlu0 %v325, 120
      %v352 = vpop.permute.xlu0 %351
      %353 = vrot.lane.b32.xlu0 %v326, 120
      %v354 = vpop.permute.xlu0 %353
      %355 = vrot.lane.b32.xlu0 %v327, 120
      %v356 = vpop.permute.xlu0 %355
      %357 = vrot.lane.b32.xlu0 %v328, 120
      %v358 = vpop.permute.xlu0 %357
      %359 = vrot.lane.b32.xlu0 %v329, 120
      %v360 = vpop.permute.xlu0 %359
      %361 = vrot.lane.b32.xlu0 %v330, 120
      %v362 = vpop.permute.xlu0 %361
      %363 = vrot.lane.b32.xlu0 %v331, 120
      %v364 = vpop.permute.xlu0 %363
      %365 = vrot.lane.b32.xlu0 %v332, 120
      %v366 = vpop.permute.xlu0 %365
      %367 = vrot.lane.b32.xlu0 %v333, 120
      %v368 = vpop.permute.xlu0 %367
      %369 = vrot.lane.b32.xlu0 %v334, 120
      %v370 = vpop.permute.xlu0 %369
      %371 = vrot.lane.b32.xlu0 %v323, 112
      %v372 = vpop.permute.xlu0 %371
      %373 = vrot.lane.b32.xlu0 %v324, 112
      %v374 = vpop.permute.xlu0 %373
      %375 = vrot.lane.b32.xlu0 %v325, 112
      %v376 = vpop.permute.xlu0 %375
      %377 = vrot.lane.b32.xlu0 %v326, 112
      %v378 = vpop.permute.xlu0 %377
      %379 = vrot.lane.b32.xlu0 %v327, 112
      %v380 = vpop.permute.xlu0 %379
      %381 = vrot.lane.b32.xlu0 %v328, 112
      %v382 = vpop.permute.xlu0 %381
      %383 = vrot.lane.b32.xlu0 %v329, 112
      %v384 = vpop.permute.xlu0 %383
      %385 = vrot.lane.b32.xlu0 %v330, 112
      %v386 = vpop.permute.xlu0 %385
      %387 = vrot.lane.b32.xlu0 %v331, 112
      %v388 = vpop.permute.xlu0 %387
      %389 = vrot.lane.b32.xlu0 %v332, 112
      %v390 = vpop.permute.xlu0 %389
      %391 = vrot.lane.b32.xlu0 %v333, 112
      %v392 = vpop.permute.xlu0 %391
      %393 = vrot.lane.b32.xlu0 %v334, 112
      %v394 = vpop.permute.xlu0 %393
      %395 = vrot.lane.b32.xlu0 %v323, 104
      %v396 = vpop.permute.xlu0 %395
      %397 = vrot.lane.b32.xlu0 %v324, 104
      %v398 = vpop.permute.xlu0 %397
      %399 = vrot.lane.b32.xlu0 %v325, 104
      %v400 = vpop.permute.xlu0 %399
      %401 = vrot.lane.b32.xlu0 %v326, 104
      %v402 = vpop.permute.xlu0 %401
      %403 = vrot.lane.b32.xlu0 %v327, 104
      %v404 = vpop.permute.xlu0 %403
      %405 = vrot.lane.b32.xlu0 %v328, 104
      %v406 = vpop.permute.xlu0 %405
      %407 = vrot.lane.b32.xlu0 %v329, 104
      %v408 = vpop.permute.xlu0 %407
      %409 = vrot.lane.b32.xlu0 %v330, 104
      %v410 = vpop.permute.xlu0 %409
      %411 = vrot.lane.b32.xlu0 %v331, 104
      %v412 = vpop.permute.xlu0 %411
      %413 = vrot.lane.b32.xlu0 %v332, 104
      %v414 = vpop.permute.xlu0 %413
      %415 = vrot.lane.b32.xlu0 %v333, 104
      %v416 = vpop.permute.xlu0 %415
      %417 = vrot.lane.b32.xlu0 %v334, 104
      %v418 = vpop.permute.xlu0 %417
      %419 = vrot.lane.b32.xlu0 %v323, 96
      %v420 = vpop.permute.xlu0 %419
      %421 = vrot.lane.b32.xlu0 %v324, 96
      %v422 = vpop.permute.xlu0 %421
      %423 = vrot.lane.b32.xlu0 %v325, 96
      %v424 = vpop.permute.xlu0 %423
      %425 = vrot.lane.b32.xlu0 %v326, 96
      %v426 = vpop.permute.xlu0 %425
      %427 = vrot.lane.b32.xlu0 %v327, 96
      %v428 = vpop.permute.xlu0 %427
      %429 = vrot.lane.b32.xlu0 %v328, 96
      %v430 = vpop.permute.xlu0 %429
      %431 = vrot.lane.b32.xlu0 %v329, 96
      %v432 = vpop.permute.xlu0 %431
      %433 = vrot.lane.b32.xlu0 %v330, 96
      %v434 = vpop.permute.xlu0 %433
      %435 = vrot.lane.b32.xlu0 %v331, 96
      %v436 = vpop.permute.xlu0 %435
      %437 = vrot.lane.b32.xlu0 %v332, 96
      %v438 = vpop.permute.xlu0 %437
      %439 = vrot.lane.b32.xlu0 %v333, 96
      %v440 = vpop.permute.xlu0 %439
      %441 = vrot.lane.b32.xlu0 %v334, 96
      %v442 = vpop.permute.xlu0 %441
      %443 = vrot.lane.b32.xlu0 %v323, 88
      %v444 = vpop.permute.xlu0 %443
      %445 = vrot.lane.b32.xlu0 %v324, 88
      %v446 = vpop.permute.xlu0 %445
      %447 = vrot.lane.b32.xlu0 %v325, 88
      %v448 = vpop.permute.xlu0 %447
      %449 = vrot.lane.b32.xlu0 %v326, 88
      %v450 = vpop.permute.xlu0 %449
      %451 = vrot.lane.b32.xlu0 %v327, 88
      %v452 = vpop.permute.xlu0 %451
      %453 = vrot.lane.b32.xlu0 %v328, 88
      %v454 = vpop.permute.xlu0 %453
      %455 = vrot.lane.b32.xlu0 %v329, 88
      %v456 = vpop.permute.xlu0 %455
      %457 = vrot.lane.b32.xlu0 %v330, 88
      %v458 = vpop.permute.xlu0 %457
      %459 = vrot.lane.b32.xlu0 %v331, 88
      %v460 = vpop.permute.xlu0 %459
      %461 = vrot.lane.b32.xlu0 %v332, 88
      %v462 = vpop.permute.xlu0 %461
      %463 = vrot.lane.b32.xlu0 %v333, 88
      %v464 = vpop.permute.xlu0 %463
      %465 = vrot.lane.b32.xlu0 %v334, 88
      %v466 = vpop.permute.xlu0 %465
      %467 = vrot.lane.b32.xlu0 %v323, 80
      %v468 = vpop.permute.xlu0 %467
      %469 = vrot.lane.b32.xlu0 %v324, 80
      %v470 = vpop.permute.xlu0 %469
      %471 = vrot.lane.b32.xlu0 %v325, 80
      %v472 = vpop.permute.xlu0 %471
      %473 = vrot.lane.b32.xlu0 %v326, 80
      %v474 = vpop.permute.xlu0 %473
      %475 = vrot.lane.b32.xlu0 %v327, 80
      %v476 = vpop.permute.xlu0 %475
      %477 = vrot.lane.b32.xlu0 %v328, 80
      %v478 = vpop.permute.xlu0 %477
      %479 = vrot.lane.b32.xlu0 %v329, 80
      %v480 = vpop.permute.xlu0 %479
      %481 = vrot.lane.b32.xlu0 %v330, 80
      %v482 = vpop.permute.xlu0 %481
      %483 = vrot.lane.b32.xlu0 %v331, 80
      %v484 = vpop.permute.xlu0 %483
      %485 = vrot.lane.b32.xlu0 %v332, 80
      %v486 = vpop.permute.xlu0 %485
      %487 = vrot.lane.b32.xlu0 %v333, 80
      %v488 = vpop.permute.xlu0 %487
      %489 = vrot.lane.b32.xlu0 %v334, 80
      %v490 = vpop.permute.xlu0 %489
      %491 = vrot.lane.b32.xlu0 %v323, 72
      %v492 = vpop.permute.xlu0 %491
      %493 = vrot.lane.b32.xlu0 %v324, 72
      %v494 = vpop.permute.xlu0 %493
      %495 = vrot.lane.b32.xlu0 %v325, 72
      %v496 = vpop.permute.xlu0 %495
      %497 = vrot.lane.b32.xlu0 %v326, 72
      %v498 = vpop.permute.xlu0 %497
      %499 = vrot.lane.b32.xlu0 %v327, 72
      %v500 = vpop.permute.xlu0 %499
      %501 = vrot.lane.b32.xlu0 %v328, 72
      %v502 = vpop.permute.xlu0 %501
      %503 = vrot.lane.b32.xlu0 %v329, 72
      %v504 = vpop.permute.xlu0 %503
      %505 = vrot.lane.b32.xlu0 %v330, 72
      %v506 = vpop.permute.xlu0 %505
      %507 = vrot.lane.b32.xlu0 %v331, 72
      %v508 = vpop.permute.xlu0 %507
      %509 = vrot.lane.b32.xlu0 %v332, 72
      %v510 = vpop.permute.xlu0 %509
      %511 = vrot.lane.b32.xlu0 %v333, 72
      %v512 = vpop.permute.xlu0 %511
      %513 = vrot.lane.b32.xlu0 %v334, 72
      %v514 = vpop.permute.xlu0 %513
      %vm515 = vcmask 1044484
      %v516 = vsel %vm515, %v323, %v323
      %vm517 = vcmask 1046534
      %v518 = vsel %vm517, %v323, %v516
      %v519 = vrot.slane %v324, 7
      %vm520 = vcmask 1041409
      %v521 = vsel %vm520, %v519, %v518
      %vm522 = vcmask 1043459
      %v523 = vsel %vm522, %v519, %v521
      %vm524 = vcmask 1045509
      %v525 = vsel %vm524, %v519, %v523
      %vm526 = vcmask 1047559
      %v527 = vsel %vm526, %v519, %v525
      %v528 = vsel %vm515, %v325, %v325
      %v529 = vsel %vm517, %v325, %v528
      %v530 = vrot.slane %v326, 7
      %v531 = vsel %vm520, %v530, %v529
      %v532 = vsel %vm522, %v530, %v531
      %v533 = vsel %vm524, %v530, %v532
      %v534 = vsel %vm526, %v530, %v533
      %v535 = vsel %vm515, %v327, %v327
      %v536 = vsel %vm517, %v327, %v535
      %v537 = vrot.slane %v328, 7
      %v538 = vsel %vm520, %v537, %v536
      %v539 = vsel %vm522, %v537, %v538
      %v540 = vsel %vm524, %v537, %v539
      %v541 = vsel %vm526, %v537, %v540
      %v542 = vsel %vm515, %v329, %v329
      %v543 = vsel %vm517, %v329, %v542
      %v544 = vrot.slane %v330, 7
      %v545 = vsel %vm520, %v544, %v543
      %v546 = vsel %vm522, %v544, %v545
      %v547 = vsel %vm524, %v544, %v546
      %v548 = vsel %vm526, %v544, %v547
      %v549 = vsel %vm515, %v331, %v331
      %v550 = vsel %vm517, %v331, %v549
      %v551 = vrot.slane %v332, 7
      %v552 = vsel %vm520, %v551, %v550
      %v553 = vsel %vm522, %v551, %v552
      %v554 = vsel %vm524, %v551, %v553
      %v555 = vsel %vm526, %v551, %v554
      %v556 = vsel %vm515, %v333, %v333
      %v557 = vsel %vm517, %v333, %v556
      %v558 = vrot.slane %v334, 7
      %v559 = vsel %vm520, %v558, %v557
      %v560 = vsel %vm522, %v558, %v559
      %v561 = vsel %vm524, %v558, %v560
      %v562 = vsel %vm526, %v558, %v561
      %v563 = vsel %vm515, %v348, %v348
      %v564 = vsel %vm517, %v348, %v563
      %v565 = vrot.slane %v350, 7
      %v566 = vsel %vm520, %v565, %v564
      %v567 = vsel %vm522, %v565, %v566
      %v568 = vsel %vm524, %v565, %v567
      %v569 = vsel %vm526, %v565, %v568
      %v570 = vsel %vm515, %v352, %v352
      %v571 = vsel %vm517, %v352, %v570
      %v572 = vrot.slane %v354, 7
      %v573 = vsel %vm520, %v572, %v571
      %v574 = vsel %vm522, %v572, %v573
      %v575 = vsel %vm524, %v572, %v574
      %v576 = vsel %vm526, %v572, %v575
      %v577 = vsel %vm515, %v356, %v356
      %v578 = vsel %vm517, %v356, %v577
      %v579 = vrot.slane %v358, 7
      %v580 = vsel %vm520, %v579, %v578
      %v581 = vsel %vm522, %v579, %v580
      %v582 = vsel %vm524, %v579, %v581
      %v583 = vsel %vm526, %v579, %v582
      %v584 = vsel %vm515, %v360, %v360
      %v585 = vsel %vm517, %v360, %v584
      %v586 = vrot.slane %v362, 7
      %v587 = vsel %vm520, %v586, %v585
      %v588 = vsel %vm522, %v586, %v587
      %v589 = vsel %vm524, %v586, %v588
      %v590 = vsel %vm526, %v586, %v589
      %v591 = vsel %vm515, %v364, %v364
      %v592 = vsel %vm517, %v364, %v591
      %v593 = vrot.slane %v366, 7
      %v594 = vsel %vm520, %v593, %v592
      %v595 = vsel %vm522, %v593, %v594
      %v596 = vsel %vm524, %v593, %v595
      %v597 = vsel %vm526, %v593, %v596
      %v598 = vsel %vm515, %v368, %v368
      %v599 = vsel %vm517, %v368, %v598
      %v600 = vrot.slane %v370, 7
      %v601 = vsel %vm520, %v600, %v599
      %v602 = vsel %vm522, %v600, %v601
      %v603 = vsel %vm524, %v600, %v602
      %v604 = vsel %vm526, %v600, %v603
      %v605 = vsel %vm515, %v372, %v372
      %v606 = vsel %vm517, %v372, %v605
      %v607 = vrot.slane %v374, 7
      %v608 = vsel %vm520, %v607, %v606
      %v609 = vsel %vm522, %v607, %v608
      %v610 = vsel %vm524, %v607, %v609
      %v611 = vsel %vm526, %v607, %v610
      %v612 = vsel %vm515, %v376, %v376
      %v613 = vsel %vm517, %v376, %v612
      %v614 = vrot.slane %v378, 7
      %v615 = vsel %vm520, %v614, %v613
      %v616 = vsel %vm522, %v614, %v615
      %v617 = vsel %vm524, %v614, %v616
      %v618 = vsel %vm526, %v614, %v617
      %v619 = vsel %vm515, %v380, %v380
      %v620 = vsel %vm517, %v380, %v619
      %v621 = vrot.slane %v382, 7
      %v622 = vsel %vm520, %v621, %v620
      %v623 = vsel %vm522, %v621, %v622
      %v624 = vsel %vm524, %v621, %v623
      %v625 = vsel %vm526, %v621, %v624
      %v626 = vsel %vm515, %v384, %v384
      %v627 = vsel %vm517, %v384, %v626
      %v628 = vrot.slane %v386, 7
      %v629 = vsel %vm520, %v628, %v627
      %v630 = vsel %vm522, %v628, %v629
      %v631 = vsel %vm524, %v628, %v630
      %v632 = vsel %vm526, %v628, %v631
      %v633 = vsel %vm515, %v388, %v388
      %v634 = vsel %vm517, %v388, %v633
      %v635 = vrot.slane %v390, 7
      %v636 = vsel %vm520, %v635, %v634
      %v637 = vsel %vm522, %v635, %v636
      %v638 = vsel %vm524, %v635, %v637
      %v639 = vsel %vm526, %v635, %v638
      %v640 = vsel %vm515, %v392, %v392
      %v641 = vsel %vm517, %v392, %v640
      %v642 = vrot.slane %v394, 7
      %v643 = vsel %vm520, %v642, %v641
      %v644 = vsel %vm522, %v642, %v643
      %v645 = vsel %vm524, %v642, %v644
      %v646 = vsel %vm526, %v642, %v645
      %v647 = vsel %vm515, %v396, %v396
      %v648 = vsel %vm517, %v396, %v647
      %v649 = vrot.slane %v398, 7
      %v650 = vsel %vm520, %v649, %v648
      %v651 = vsel %vm522, %v649, %v650
      %v652 = vsel %vm524, %v649, %v651
      %v653 = vsel %vm526, %v649, %v652
      %v654 = vsel %vm515, %v400, %v400
      %v655 = vsel %vm517, %v400, %v654
      %v656 = vrot.slane %v402, 7
      %v657 = vsel %vm520, %v656, %v655
      %v658 = vsel %vm522, %v656, %v657
      %v659 = vsel %vm524, %v656, %v658
      %v660 = vsel %vm526, %v656, %v659
      %v661 = vsel %vm515, %v404, %v404
      %v662 = vsel %vm517, %v404, %v661
      %v663 = vrot.slane %v406, 7
      %v664 = vsel %vm520, %v663, %v662
      %v665 = vsel %vm522, %v663, %v664
      %v666 = vsel %vm524, %v663, %v665
      %v667 = vsel %vm526, %v663, %v666
      %v668 = vsel %vm515, %v408, %v408
      %v669 = vsel %vm517, %v408, %v668
      %v670 = vrot.slane %v410, 7
      %v671 = vsel %vm520, %v670, %v669
      %v672 = vsel %vm522, %v670, %v671
      %v673 = vsel %vm524, %v670, %v672
      %v674 = vsel %vm526, %v670, %v673
      %v675 = vsel %vm515, %v412, %v412
      %v676 = vsel %vm517, %v412, %v675
      %v677 = vrot.slane %v414, 7
      %v678 = vsel %vm520, %v677, %v676
      %v679 = vsel %vm522, %v677, %v678
      %v680 = vsel %vm524, %v677, %v679
      %v681 = vsel %vm526, %v677, %v680
      %v682 = vsel %vm515, %v416, %v416
      %v683 = vsel %vm517, %v416, %v682
      %v684 = vrot.slane %v418, 7
      %v685 = vsel %vm520, %v684, %v683
      %v686 = vsel %vm522, %v684, %v685
      %v687 = vsel %vm524, %v684, %v686
      %v688 = vsel %vm526, %v684, %v687
      %v689 = vsel %vm515, %v420, %v420
      %v690 = vsel %vm517, %v420, %v689
      %v691 = vrot.slane %v422, 7
      %v692 = vsel %vm520, %v691, %v690
      %v693 = vsel %vm522, %v691, %v692
      %v694 = vsel %vm524, %v691, %v693
      %v695 = vsel %vm526, %v691, %v694
      %v696 = vsel %vm515, %v424, %v424
      %v697 = vsel %vm517, %v424, %v696
      %v698 = vrot.slane %v426, 7
      %v699 = vsel %vm520, %v698, %v697
      %v700 = vsel %vm522, %v698, %v699
      %v701 = vsel %vm524, %v698, %v700
      %v702 = vsel %vm526, %v698, %v701
      %v703 = vsel %vm515, %v428, %v428
      %v704 = vsel %vm517, %v428, %v703
      %v705 = vrot.slane %v430, 7
      %v706 = vsel %vm520, %v705, %v704
      %v707 = vsel %vm522, %v705, %v706
      %v708 = vsel %vm524, %v705, %v707
      %v709 = vsel %vm526, %v705, %v708
      %v710 = vsel %vm515, %v432, %v432
      %v711 = vsel %vm517, %v432, %v710
      %v712 = vrot.slane %v434, 7
      %v713 = vsel %vm520, %v712, %v711
      %v714 = vsel %vm522, %v712, %v713
      %v715 = vsel %vm524, %v712, %v714
      %v716 = vsel %vm526, %v712, %v715
      %v717 = vsel %vm515, %v436, %v436
      %v718 = vsel %vm517, %v436, %v717
      %v719 = vrot.slane %v438, 7
      %v720 = vsel %vm520, %v719, %v718
      %v721 = vsel %vm522, %v719, %v720
      %v722 = vsel %vm524, %v719, %v721
      %v723 = vsel %vm526, %v719, %v722
      %v724 = vsel %vm515, %v440, %v440
      %v725 = vsel %vm517, %v440, %v724
      %v726 = vrot.slane %v442, 7
      %v727 = vsel %vm520, %v726, %v725
      %v728 = vsel %vm522, %v726, %v727
      %v729 = vsel %vm524, %v726, %v728
      %v730 = vsel %vm526, %v726, %v729
      %v731 = vsel %vm515, %v444, %v444
      %v732 = vsel %vm517, %v444, %v731
      %v733 = vrot.slane %v446, 7
      %v734 = vsel %vm520, %v733, %v732
      %v735 = vsel %vm522, %v733, %v734
      %v736 = vsel %vm524, %v733, %v735
      %v737 = vsel %vm526, %v733, %v736
      %v738 = vsel %vm515, %v448, %v448
      %v739 = vsel %vm517, %v448, %v738
      %v740 = vrot.slane %v450, 7
      %v741 = vsel %vm520, %v740, %v739
      %v742 = vsel %vm522, %v740, %v741
      %v743 = vsel %vm524, %v740, %v742
      %v744 = vsel %vm526, %v740, %v743
      %v745 = vsel %vm515, %v452, %v452
      %v746 = vsel %vm517, %v452, %v745
      %v747 = vrot.slane %v454, 7
      %v748 = vsel %vm520, %v747, %v746
      %v749 = vsel %vm522, %v747, %v748
      %v750 = vsel %vm524, %v747, %v749
      %v751 = vsel %vm526, %v747, %v750
      %v752 = vsel %vm515, %v456, %v456
      %v753 = vsel %vm517, %v456, %v752
      %v754 = vrot.slane %v458, 7
      %v755 = vsel %vm520, %v754, %v753
      %v756 = vsel %vm522, %v754, %v755
      %v757 = vsel %vm524, %v754, %v756
      %v758 = vsel %vm526, %v754, %v757
      %v759 = vsel %vm515, %v460, %v460
      %v760 = vsel %vm517, %v460, %v759
      %v761 = vrot.slane %v462, 7
      %v762 = vsel %vm520, %v761, %v760
      %v763 = vsel %vm522, %v761, %v762
      %v764 = vsel %vm524, %v761, %v763
      %v765 = vsel %vm526, %v761, %v764
      %v766 = vsel %vm515, %v464, %v464
      %v767 = vsel %vm517, %v464, %v766
      %v768 = vrot.slane %v466, 7
      %v769 = vsel %vm520, %v768, %v767
      %v770 = vsel %vm522, %v768, %v769
      %v771 = vsel %vm524, %v768, %v770
      %v772 = vsel %vm526, %v768, %v771
      %v773 = vsel %vm515, %v468, %v468
      %v774 = vsel %vm517, %v468, %v773
      %v775 = vrot.slane %v470, 7
      %v776 = vsel %vm520, %v775, %v774
      %v777 = vsel %vm522, %v775, %v776
      %v778 = vsel %vm524, %v775, %v777
      %v779 = vsel %vm526, %v775, %v778
      %v780 = vsel %vm515, %v472, %v472
      %v781 = vsel %vm517, %v472, %v780
      %v782 = vrot.slane %v474, 7
      %v783 = vsel %vm520, %v782, %v781
      %v784 = vsel %vm522, %v782, %v783
      %v785 = vsel %vm524, %v782, %v784
      %v786 = vsel %vm526, %v782, %v785
      %v787 = vsel %vm515, %v476, %v476
      %v788 = vsel %vm517, %v476, %v787
      %v789 = vrot.slane %v478, 7
      %v790 = vsel %vm520, %v789, %v788
      %v791 = vsel %vm522, %v789, %v790
      %v792 = vsel %vm524, %v789, %v791
      %v793 = vsel %vm526, %v789, %v792
      %v794 = vsel %vm515, %v480, %v480
      %v795 = vsel %vm517, %v480, %v794
      %v796 = vrot.slane %v482, 7
      %v797 = vsel %vm520, %v796, %v795
      %v798 = vsel %vm522, %v796, %v797
      %v799 = vsel %vm524, %v796, %v798
      %v800 = vsel %vm526, %v796, %v799
      %v801 = vsel %vm515, %v484, %v484
      %v802 = vsel %vm517, %v484, %v801
      %v803 = vrot.slane %v486, 7
      %v804 = vsel %vm520, %v803, %v802
      %v805 = vsel %vm522, %v803, %v804
      %v806 = vsel %vm524, %v803, %v805
      %v807 = vsel %vm526, %v803, %v806
      %v808 = vsel %vm515, %v488, %v488
      %v809 = vsel %vm517, %v488, %v808
      %v810 = vrot.slane %v490, 7
      %v811 = vsel %vm520, %v810, %v809
      %v812 = vsel %vm522, %v810, %v811
      %v813 = vsel %vm524, %v810, %v812
      %v814 = vsel %vm526, %v810, %v813
      %v815 = vsel %vm515, %v492, %v492
      %v816 = vsel %vm517, %v492, %v815
      %v817 = vrot.slane %v494, 7
      %v818 = vsel %vm520, %v817, %v816
      %v819 = vsel %vm522, %v817, %v818
      %v820 = vsel %vm524, %v817, %v819
      %v821 = vsel %vm526, %v817, %v820
      %v822 = vsel %vm515, %v496, %v496
      %v823 = vsel %vm517, %v496, %v822
      %v824 = vrot.slane %v498, 7
      %v825 = vsel %vm520, %v824, %v823
      %v826 = vsel %vm522, %v824, %v825
      %v827 = vsel %vm524, %v824, %v826
      %v828 = vsel %vm526, %v824, %v827
      %v829 = vsel %vm515, %v500, %v500
      %v830 = vsel %vm517, %v500, %v829
      %v831 = vrot.slane %v502, 7
      %v832 = vsel %vm520, %v831, %v830
      %v833 = vsel %vm522, %v831, %v832
      %v834 = vsel %vm524, %v831, %v833
      %v835 = vsel %vm526, %v831, %v834
      %v836 = vsel %vm515, %v504, %v504
      %v837 = vsel %vm517, %v504, %v836
      %v838 = vrot.slane %v506, 7
      %v839 = vsel %vm520, %v838, %v837
      %v840 = vsel %vm522, %v838, %v839
      %v841 = vsel %vm524, %v838, %v840
      %v842 = vsel %vm526, %v838, %v841
      %v843 = vsel %vm515, %v508, %v508
      %v844 = vsel %vm517, %v508, %v843
      %v845 = vrot.slane %v510, 7
      %v846 = vsel %vm520, %v845, %v844
      %v847 = vsel %vm522, %v845, %v846
      %v848 = vsel %vm524, %v845, %v847
      %v849 = vsel %vm526, %v845, %v848
      %v850 = vsel %vm515, %v512, %v512
      %v851 = vsel %vm517, %v512, %v850
      %v852 = vrot.slane %v514, 7
      %v853 = vsel %vm520, %v852, %v851
      %v854 = vsel %vm522, %v852, %v853
      %v855 = vsel %vm524, %v852, %v854
      %v856 = vsel %vm526, %v852, %v855
      %v905 = vrot.slane %v569, 4
      %vm906 = vcmask 1047556
      %v907 = vsel %vm906, %v905, %v527
      %v909 = vunpack.c.l.s4 1934713408
      %v910 = vunpack.c.0.s8 %v909
      %v911 = vperm.slane %v907, %v910
      %v912 = vrot.slane %v911, 4
      %v913 = vsel %vm906, 0.0, %v912
      %v914 = vrot.slane %v653, 4
      %v915 = vsel %vm906, %v914, %v611
      %v917 = vunpack.c.l.s4 1934713408
      %v918 = vunpack.c.0.s8 %v917
      %v919 = vperm.slane %v915, %v918
      %v920 = vrot.slane %v919, 4
      %v921 = vsel %vm906, 0.0, %v920
      %v922 = vrot.slane %v737, 4
      %v923 = vsel %vm906, %v922, %v695
      %v925 = vunpack.c.l.s4 1934713408
      %v926 = vunpack.c.0.s8 %v925
      %v927 = vperm.slane %v923, %v926
      %v928 = vrot.slane %v927, 4
      %v929 = vsel %vm906, 0.0, %v928
      %v930 = vrot.slane %v821, 4
      %v931 = vsel %vm906, %v930, %v779
      %v933 = vunpack.c.l.s4 1934713408
      %v934 = vunpack.c.0.s8 %v933
      %v935 = vperm.slane %v931, %v934
      %v936 = vrot.slane %v935, 4
      %v937 = vsel %vm906, 0.0, %v936
      %v938 = vrot.slane %v576, 4
      %v939 = vsel %vm906, %v938, %v534
      %v941 = vunpack.c.l.s4 1934713408
      %v942 = vunpack.c.0.s8 %v941
      %v943 = vperm.slane %v939, %v942
      %v944 = vrot.slane %v943, 4
      %v945 = vsel %vm906, 0.0, %v944
      %v946 = vrot.slane %v660, 4
      %v947 = vsel %vm906, %v946, %v618
      %v949 = vunpack.c.l.s4 1934713408
      %v950 = vunpack.c.0.s8 %v949
      %v951 = vperm.slane %v947, %v950
      %v952 = vrot.slane %v951, 4
      %v953 = vsel %vm906, 0.0, %v952
      %v954 = vrot.slane %v744, 4
      %v955 = vsel %vm906, %v954, %v702
      %v957 = vunpack.c.l.s4 1934713408
      %v958 = vunpack.c.0.s8 %v957
      %v959 = vperm.slane %v955, %v958
      %v960 = vrot.slane %v959, 4
      %v961 = vsel %vm906, 0.0, %v960
      %v962 = vrot.slane %v828, 4
      %v963 = vsel %vm906, %v962, %v786
      %v965 = vunpack.c.l.s4 1934713408
      %v966 = vunpack.c.0.s8 %v965
      %v967 = vperm.slane %v963, %v966
      %v968 = vrot.slane %v967, 4
      %v969 = vsel %vm906, 0.0, %v968
      %v970 = vrot.slane %v583, 4
      %v971 = vsel %vm906, %v970, %v541
      %v973 = vunpack.c.l.s4 1934713408
      %v974 = vunpack.c.0.s8 %v973
      %v975 = vperm.slane %v971, %v974
      %v976 = vrot.slane %v975, 4
      %v977 = vsel %vm906, 0.0, %v976
      %v978 = vrot.slane %v667, 4
      %v979 = vsel %vm906, %v978, %v625
      %v981 = vunpack.c.l.s4 1934713408
      %v982 = vunpack.c.0.s8 %v981
      %v983 = vperm.slane %v979, %v982
      %v984 = vrot.slane %v983, 4
      %v985 = vsel %vm906, 0.0, %v984
      %v986 = vrot.slane %v751, 4
      %v987 = vsel %vm906, %v986, %v709
      %v989 = vunpack.c.l.s4 1934713408
      %v990 = vunpack.c.0.s8 %v989
      %v991 = vperm.slane %v987, %v990
      %v992 = vrot.slane %v991, 4
      %v993 = vsel %vm906, 0.0, %v992
      %v994 = vrot.slane %v835, 4
      %v995 = vsel %vm906, %v994, %v793
      %v997 = vunpack.c.l.s4 1934713408
      %v998 = vunpack.c.0.s8 %v997
      %v999 = vperm.slane %v995, %v998
      %v1000 = vrot.slane %v999, 4
      %v1001 = vsel %vm906, 0.0, %v1000
      %v1002 = vrot.slane %v590, 4
      %v1003 = vsel %vm906, %v1002, %v548
      %v1005 = vunpack.c.l.s4 1934713408
      %v1006 = vunpack.c.0.s8 %v1005
      %v1007 = vperm.slane %v1003, %v1006
      %v1008 = vrot.slane %v1007, 4
      %v1009 = vsel %vm906, 0.0, %v1008
      %v1010 = vrot.slane %v674, 4
      %v1011 = vsel %vm906, %v1010, %v632
      %v1013 = vunpack.c.l.s4 1934713408
      %v1014 = vunpack.c.0.s8 %v1013
      %v1015 = vperm.slane %v1011, %v1014
      %v1016 = vrot.slane %v1015, 4
      %v1017 = vsel %vm906, 0.0, %v1016
      %v1018 = vrot.slane %v758, 4
      %v1019 = vsel %vm906, %v1018, %v716
      %v1021 = vunpack.c.l.s4 1934713408
      %v1022 = vunpack.c.0.s8 %v1021
      %v1023 = vperm.slane %v1019, %v1022
      %v1024 = vrot.slane %v1023, 4
      %v1025 = vsel %vm906, 0.0, %v1024
      %v1026 = vrot.slane %v842, 4
      %v1027 = vsel %vm906, %v1026, %v800
      %v1029 = vunpack.c.l.s4 1934713408
      %v1030 = vunpack.c.0.s8 %v1029
      %v1031 = vperm.slane %v1027, %v1030
      %v1032 = vrot.slane %v1031, 4
      %v1033 = vsel %vm906, 0.0, %v1032
      %v1034 = vrot.slane %v597, 4
      %v1035 = vsel %vm906, %v1034, %v555
      %v1037 = vunpack.c.l.s4 1934713408
      %v1038 = vunpack.c.0.s8 %v1037
      %v1039 = vperm.slane %v1035, %v1038
      %v1040 = vrot.slane %v1039, 4
      %v1041 = vsel %vm906, 0.0, %v1040
      %v1042 = vrot.slane %v681, 4
      %v1043 = vsel %vm906, %v1042, %v639
      %v1045 = vunpack.c.l.s4 1934713408
      %v1046 = vunpack.c.0.s8 %v1045
      %v1047 = vperm.slane %v1043, %v1046
      %v1048 = vrot.slane %v1047, 4
      %v1049 = vsel %vm906, 0.0, %v1048
      %v1050 = vrot.slane %v765, 4
      %v1051 = vsel %vm906, %v1050, %v723
      %v1053 = vunpack.c.l.s4 1934713408
      %v1054 = vunpack.c.0.s8 %v1053
      %v1055 = vperm.slane %v1051, %v1054
      %v1056 = vrot.slane %v1055, 4
      %v1057 = vsel %vm906, 0.0, %v1056
      %v1058 = vrot.slane %v849, 4
      %v1059 = vsel %vm906, %v1058, %v807
      %v1061 = vunpack.c.l.s4 1934713408
      %v1062 = vunpack.c.0.s8 %v1061
      %v1063 = vperm.slane %v1059, %v1062
      %v1064 = vrot.slane %v1063, 4
      %v1065 = vsel %vm906, 0.0, %v1064
      %v1066 = vrot.slane %v604, 4
      %v1067 = vsel %vm906, %v1066, %v562
      %v1069 = vunpack.c.l.s4 1934713408
      %v1070 = vunpack.c.0.s8 %v1069
      %v1071 = vperm.slane %v1067, %v1070
      %v1072 = vrot.slane %v1071, 4
      %v1073 = vsel %vm906, 0.0, %v1072
      %v1074 = vrot.slane %v688, 4
      %v1075 = vsel %vm906, %v1074, %v646
      %v1077 = vunpack.c.l.s4 1934713408
      %v1078 = vunpack.c.0.s8 %v1077
      %v1079 = vperm.slane %v1075, %v1078
      %v1080 = vrot.slane %v1079, 4
      %v1081 = vsel %vm906, 0.0, %v1080
      %v1082 = vrot.slane %v772, 4
      %v1083 = vsel %vm906, %v1082, %v730
      %v1085 = vunpack.c.l.s4 1934713408
      %v1086 = vunpack.c.0.s8 %v1085
      %v1087 = vperm.slane %v1083, %v1086
      %v1088 = vrot.slane %v1087, 4
      %v1089 = vsel %vm906, 0.0, %v1088
      %v1090 = vrot.slane %v856, 4
      %v1091 = vsel %vm906, %v1090, %v814
      %v1093 = vunpack.c.l.s4 1934713408
      %v1094 = vunpack.c.0.s8 %v1093
      %v1095 = vperm.slane %v1091, %v1094
      %v1096 = vrot.slane %v1095, 4
      %v1097 = vsel %vm906, 0.0, %v1096
      %1146 = vrot.lane.b32.xlu0 %v911, 124
      %v1147 = vpop.permute.xlu0 %1146
      %1148 = vrot.lane.b32.xlu0 %v919, 124
      %v1149 = vpop.permute.xlu0 %1148
      %1150 = vrot.lane.b32.xlu0 %v927, 124
      %v1151 = vpop.permute.xlu0 %1150
      %1152 = vrot.lane.b32.xlu0 %v935, 124
      %v1153 = vpop.permute.xlu0 %1152
      %1154 = vrot.lane.b32.xlu0 %v913, 124
      %v1155 = vpop.permute.xlu0 %1154
      %1156 = vrot.lane.b32.xlu0 %v921, 124
      %v1157 = vpop.permute.xlu0 %1156
      %1158 = vrot.lane.b32.xlu0 %v929, 124
      %v1159 = vpop.permute.xlu0 %1158
      %1160 = vrot.lane.b32.xlu0 %v937, 124
      %v1161 = vpop.permute.xlu0 %1160
      %1162 = vrot.lane.b32.xlu0 %v943, 124
      %v1163 = vpop.permute.xlu0 %1162
      %1164 = vrot.lane.b32.xlu0 %v951, 124
      %v1165 = vpop.permute.xlu0 %1164
      %1166 = vrot.lane.b32.xlu0 %v959, 124
      %v1167 = vpop.permute.xlu0 %1166
      %1168 = vrot.lane.b32.xlu0 %v967, 124
      %v1169 = vpop.permute.xlu0 %1168
      %1170 = vrot.lane.b32.xlu0 %v945, 124
      %v1171 = vpop.permute.xlu0 %1170
      %1172 = vrot.lane.b32.xlu0 %v953, 124
      %v1173 = vpop.permute.xlu0 %1172
      %1174 = vrot.lane.b32.xlu0 %v961, 124
      %v1175 = vpop.permute.xlu0 %1174
      %1176 = vrot.lane.b32.xlu0 %v969, 124
      %v1177 = vpop.permute.xlu0 %1176
      %1178 = vrot.lane.b32.xlu0 %v975, 124
      %v1179 = vpop.permute.xlu0 %1178
      %1180 = vrot.lane.b32.xlu0 %v983, 124
      %v1181 = vpop.permute.xlu0 %1180
      %1182 = vrot.lane.b32.xlu0 %v991, 124
      %v1183 = vpop.permute.xlu0 %1182
      %1184 = vrot.lane.b32.xlu0 %v999, 124
      %v1185 = vpop.permute.xlu0 %1184
      %1186 = vrot.lane.b32.xlu0 %v977, 124
      %v1187 = vpop.permute.xlu0 %1186
      %1188 = vrot.lane.b32.xlu0 %v985, 124
      %v1189 = vpop.permute.xlu0 %1188
      %1190 = vrot.lane.b32.xlu0 %v993, 124
      %v1191 = vpop.permute.xlu0 %1190
      %1192 = vrot.lane.b32.xlu0 %v1001, 124
      %v1193 = vpop.permute.xlu0 %1192
      %1194 = vrot.lane.b32.xlu0 %v1007, 124
      %v1195 = vpop.permute.xlu0 %1194
      %1196 = vrot.lane.b32.xlu0 %v1015, 124
      %v1197 = vpop.permute.xlu0 %1196
      %1198 = vrot.lane.b32.xlu0 %v1023, 124
      %v1199 = vpop.permute.xlu0 %1198
      %1200 = vrot.lane.b32.xlu0 %v1031, 124
      %v1201 = vpop.permute.xlu0 %1200
      %1202 = vrot.lane.b32.xlu0 %v1009, 124
      %v1203 = vpop.permute.xlu0 %1202
      %1204 = vrot.lane.b32.xlu0 %v1017, 124
      %v1205 = vpop.permute.xlu0 %1204
      %1206 = vrot.lane.b32.xlu0 %v1025, 124
      %v1207 = vpop.permute.xlu0 %1206
      %1208 = vrot.lane.b32.xlu0 %v1033, 124
      %v1209 = vpop.permute.xlu0 %1208
      %1210 = vrot.lane.b32.xlu0 %v1039, 124
      %v1211 = vpop.permute.xlu0 %1210
      %1212 = vrot.lane.b32.xlu0 %v1047, 124
      %v1213 = vpop.permute.xlu0 %1212
      %1214 = vrot.lane.b32.xlu0 %v1055, 124
      %v1215 = vpop.permute.xlu0 %1214
      %1216 = vrot.lane.b32.xlu0 %v1063, 124
      %v1217 = vpop.permute.xlu0 %1216
      %1218 = vrot.lane.b32.xlu0 %v1041, 124
      %v1219 = vpop.permute.xlu0 %1218
      %1220 = vrot.lane.b32.xlu0 %v1049, 124
      %v1221 = vpop.permute.xlu0 %1220
      %1222 = vrot.lane.b32.xlu0 %v1057, 124
      %v1223 = vpop.permute.xlu0 %1222
      %1224 = vrot.lane.b32.xlu0 %v1065, 124
      %v1225 = vpop.permute.xlu0 %1224
      %1226 = vrot.lane.b32.xlu0 %v1071, 124
      %v1227 = vpop.permute.xlu0 %1226
      %1228 = vrot.lane.b32.xlu0 %v1079, 124
      %v1229 = vpop.permute.xlu0 %1228
      %1230 = vrot.lane.b32.xlu0 %v1087, 124
      %v1231 = vpop.permute.xlu0 %1230
      %1232 = vrot.lane.b32.xlu0 %v1095, 124
      %v1233 = vpop.permute.xlu0 %1232
      %1234 = vrot.lane.b32.xlu0 %v1073, 124
      %v1235 = vpop.permute.xlu0 %1234
      %1236 = vrot.lane.b32.xlu0 %v1081, 124
      %v1237 = vpop.permute.xlu0 %1236
      %1238 = vrot.lane.b32.xlu0 %v1089, 124
      %v1239 = vpop.permute.xlu0 %1238
      %1240 = vrot.lane.b32.xlu0 %v1097, 124
      %v1241 = vpop.permute.xlu0 %1240
      %v1290 = vmax.f32 %v911, %v1147
      %v1291 = vmax.f32 %v919, %v1149
      %v1292 = vmax.f32 %v927, %v1151
      %v1293 = vmax.f32 %v935, %v1153
      %v1294 = vmax.f32 %v913, %v1155
      %v1295 = vmax.f32 %v921, %v1157
      %v1296 = vmax.f32 %v929, %v1159
      %v1297 = vmax.f32 %v937, %v1161
      %v1298 = vmax.f32 %v943, %v1163
      %v1299 = vmax.f32 %v951, %v1165
      %v1300 = vmax.f32 %v959, %v1167
      %v1301 = vmax.f32 %v967, %v1169
      %v1302 = vmax.f32 %v945, %v1171
      %v1303 = vmax.f32 %v953, %v1173
      %v1304 = vmax.f32 %v961, %v1175
      %v1305 = vmax.f32 %v969, %v1177
      %v1306 = vmax.f32 %v975, %v1179
      %v1307 = vmax.f32 %v983, %v1181
      %v1308 = vmax.f32 %v991, %v1183
      %v1309 = vmax.f32 %v999, %v1185
      %v1310 = vmax.f32 %v977, %v1187
      %v1311 = vmax.f32 %v985, %v1189
      %v1312 = vmax.f32 %v993, %v1191
      %v1313 = vmax.f32 %v1001, %v1193
      %v1314 = vmax.f32 %v1007, %v1195
      %v1315 = vmax.f32 %v1015, %v1197
      %v1316 = vmax.f32 %v1023, %v1199
      %v1317 = vmax.f32 %v1031, %v1201
      %v1318 = vmax.f32 %v1009, %v1203
      %v1319 = vmax.f32 %v1017, %v1205
      %v1320 = vmax.f32 %v1025, %v1207
      %v1321 = vmax.f32 %v1033, %v1209
      %v1322 = vmax.f32 %v1039, %v1211
      %v1323 = vmax.f32 %v1047, %v1213
      %v1324 = vmax.f32 %v1055, %v1215
      %v1325 = vmax.f32 %v1063, %v1217
      %v1326 = vmax.f32 %v1041, %v1219
      %v1327 = vmax.f32 %v1049, %v1221
      %v1328 = vmax.f32 %v1057, %v1223
      %v1329 = vmax.f32 %v1065, %v1225
      %v1330 = vmax.f32 %v1071, %v1227
      %v1331 = vmax.f32 %v1079, %v1229
      %v1332 = vmax.f32 %v1087, %v1231
      %v1333 = vmax.f32 %v1095, %v1233
      %v1334 = vmax.f32 %v1073, %v1235
      %v1335 = vmax.f32 %v1081, %v1237
      %v1336 = vmax.f32 %v1089, %v1239
      %v1337 = vmax.f32 %v1097, %v1241
      %vm1338 = vcmask 24576
      %vm1339 = vsmask.f32 256
      %vm1340 = vmand %vm1338, %vm1339
      %v1341 = vld [vmem:[#allocation2] sm:$0x1]
      %v1342 = vsel %vm1340, 0, %v1341
      %1343 = vst [vmem:[#allocation2] sm:$0x1] %v1342
      %v1344 = vld [vmem:[#allocation2 + $0x8] sm:$0x1]
      %v1345 = vsel %vm1340, 0, %v1344
      %1346 = vst [vmem:[#allocation2 + $0x8] sm:$0x1] %v1345
      %v1347 = vld [vmem:[#allocation2 + $0x10] sm:$0x1]
      %v1348 = vsel %vm1340, 0, %v1347
      %1349 = vst [vmem:[#allocation2 + $0x10] sm:$0x1] %v1348
      %v1350 = vld [vmem:[#allocation2 + $0x18] sm:$0x1]
      %v1351 = vsel %vm1340, 0, %v1350
      %1352 = vst [vmem:[#allocation2 + $0x18] sm:$0x1] %v1351
      %v1353 = vld [vmem:[#allocation2 + $0x20] sm:$0x1]
      %v1354 = vsel %vm1340, 0, %v1353
      %1355 = vst [vmem:[#allocation2 + $0x20] sm:$0x1] %v1354
      %v1356 = vld [vmem:[#allocation2 + $0x28] sm:$0x1]
      %v1357 = vsel %vm1340, 0, %v1356
      %1358 = vst [vmem:[#allocation2 + $0x28] sm:$0x1] %v1357
      %v1359 = vld [vmem:[#allocation2 + $0x30] sm:$0x1]
      %v1360 = vsel %vm1340, 0, %v1359
      %1361 = vst [vmem:[#allocation2 + $0x30] sm:$0x1] %v1360
      %v1362 = vld [vmem:[#allocation2 + $0x38] sm:$0x1]
      %v1363 = vsel %vm1340, 0, %v1362
      %1364 = vst [vmem:[#allocation2 + $0x38] sm:$0x1] %v1363
      %v1365 = vld [vmem:[#allocation2 + $0x40] sm:$0x1]
      %v1366 = vsel %vm1340, 0, %v1365
      %1367 = vst [vmem:[#allocation2 + $0x40] sm:$0x1] %v1366
      %v1368 = vld [vmem:[#allocation2 + $0x48] sm:$0x1]
      %v1369 = vsel %vm1340, 0, %v1368
      %1370 = vst [vmem:[#allocation2 + $0x48] sm:$0x1] %v1369
      %v1371 = vld [vmem:[#allocation2 + $0x50] sm:$0x1]
      %v1372 = vsel %vm1340, 0, %v1371
      %1373 = vst [vmem:[#allocation2 + $0x50] sm:$0x1] %v1372
      %v1374 = vld [vmem:[#allocation2 + $0x58] sm:$0x1]
      %v1375 = vsel %vm1340, 0, %v1374
      %1376 = vst [vmem:[#allocation2 + $0x58] sm:$0x1] %v1375
      %vm1377 = vsmask.f32 7938
      %vm1378 = vmand %vm1338, %vm1377
      %v1379 = vld [vmem:[#allocation2 + $0x4] sm:$0x1]
      %v1380 = vsel %vm1378, 0, %v1379
      %1381 = vst [vmem:[#allocation2 + $0x4] sm:$0x1] %v1380
      %v1382 = vld [vmem:[#allocation2 + $0xc] sm:$0x1]
      %v1383 = vsel %vm1378, 0, %v1382
      %1384 = vst [vmem:[#allocation2 + $0xc] sm:$0x1] %v1383
      %v1385 = vld [vmem:[#allocation2 + $0x14] sm:$0x1]
      %v1386 = vsel %vm1378, 0, %v1385
      %1387 = vst [vmem:[#allocation2 + $0x14] sm:$0x1] %v1386
      %v1388 = vld [vmem:[#allocation2 + $0x1c] sm:$0x1]
      %v1389 = vsel %vm1378, 0, %v1388
      %1390 = vst [vmem:[#allocation2 + $0x1c] sm:$0x1] %v1389
      %v1391 = vld [vmem:[#allocation2 + $0x24] sm:$0x1]
      %v1392 = vsel %vm1378, 0, %v1391
      %1393 = vst [vmem:[#allocation2 + $0x24] sm:$0x1] %v1392
      %v1394 = vld [vmem:[#allocation2 + $0x2c] sm:$0x1]
      %v1395 = vsel %vm1378, 0, %v1394
      %1396 = vst [vmem:[#allocation2 + $0x2c] sm:$0x1] %v1395
      %v1397 = vld [vmem:[#allocation2 + $0x34] sm:$0x1]
      %v1398 = vsel %vm1378, 0, %v1397
      %1399 = vst [vmem:[#allocation2 + $0x34] sm:$0x1] %v1398
      %v1400 = vld [vmem:[#allocation2 + $0x3c] sm:$0x1]
      %v1401 = vsel %vm1378, 0, %v1400
      %1402 = vst [vmem:[#allocation2 + $0x3c] sm:$0x1] %v1401
      %v1403 = vld [vmem:[#allocation2 + $0x44] sm:$0x1]
      %v1404 = vsel %vm1378, 0, %v1403
      %1405 = vst [vmem:[#allocation2 + $0x44] sm:$0x1] %v1404
      %v1406 = vld [vmem:[#allocation2 + $0x4c] sm:$0x1]
      %v1407 = vsel %vm1378, 0, %v1406
      %1408 = vst [vmem:[#allocation2 + $0x4c] sm:$0x1] %v1407
      %v1409 = vld [vmem:[#allocation2 + $0x54] sm:$0x1]
      %v1410 = vsel %vm1378, 0, %v1409
      %1411 = vst [vmem:[#allocation2 + $0x54] sm:$0x1] %v1410
      %v1412 = vld [vmem:[#allocation2 + $0x5c] sm:$0x1]
      %v1413 = vsel %vm1378, 0, %v1412
      %1414 = vst [vmem:[#allocation2 + $0x5c] sm:$0x1] %v1413
      %1463 = vst [vmem:[#allocation1] ss:$4 sm:$0xff] %v1290
      %s1464 = scalar_lea.vmem [#allocation1], 1
      %1465 = vst [vmem:[%s1464] ss:$4 sm:$0xff] %v1291
      %s1466 = scalar_lea.vmem [#allocation1], 2
      %1467 = vst [vmem:[%s1466] ss:$4 sm:$0xff] %v1292
      %s1468 = scalar_lea.vmem [#allocation1], 3
      %1469 = vst [vmem:[%s1468] ss:$4 sm:$0xff] %v1293
      %v1470 = vld.sshfl [vmem:[#allocation1] sm:$0xff pattern:$0x73625140]
      %s1471 = scalar_lea.vmem [#allocation1], 32
      %1472 = vst [vmem:[%s1471] ss:$4 sm:$0xff] %v1294
      %s1473 = scalar_lea.vmem [#allocation1], 33
      %1474 = vst [vmem:[%s1473] ss:$4 sm:$0xff] %v1295
      %s1475 = scalar_lea.vmem [#allocation1], 34
      %1476 = vst [vmem:[%s1475] ss:$4 sm:$0xff] %v1296
      %s1477 = scalar_lea.vmem [#allocation1], 35
      %1478 = vst [vmem:[%s1477] ss:$4 sm:$0xff] %v1297
      %v1479 = vld.sshfl [vmem:[#allocation1 + $0x20] sm:$0xff pattern:$0x73625140]
      %1480 = vst [vmem:[#allocation1] ss:$4 sm:$0xff] %v1298
      %1481 = vst [vmem:[%s1464] ss:$4 sm:$0xff] %v1299
      %1482 = vst [vmem:[%s1466] ss:$4 sm:$0xff] %v1300
      %1483 = vst [vmem:[%s1468] ss:$4 sm:$0xff] %v1301
      %v1484 = vld.sshfl [vmem:[#allocation1] sm:$0xff pattern:$0x73625140]
      %1485 = vst [vmem:[%s1471] ss:$4 sm:$0xff] %v1302
      %1486 = vst [vmem:[%s1473] ss:$4 sm:$0xff] %v1303
      %1487 = vst [vmem:[%s1475] ss:$4 sm:$0xff] %v1304
      %1488 = vst [vmem:[%s1477] ss:$4 sm:$0xff] %v1305
      %v1489 = vld.sshfl [vmem:[#allocation1 + $0x20] sm:$0xff pattern:$0x73625140]
      %1490 = vst [vmem:[#allocation1] ss:$4 sm:$0xff] %v1306
      %1491 = vst [vmem:[%s1464] ss:$4 sm:$0xff] %v1307
      %1492 = vst [vmem:[%s1466] ss:$4 sm:$0xff] %v1308
      %1493 = vst [vmem:[%s1468] ss:$4 sm:$0xff] %v1309
      %v1494 = vld.sshfl [vmem:[#allocation1] sm:$0xff pattern:$0x73625140]
      %1495 = vst [vmem:[%s1471] ss:$4 sm:$0xff] %v1310
      %1496 = vst [vmem:[%s1473] ss:$4 sm:$0xff] %v1311
      %1497 = vst [vmem:[%s1475] ss:$4 sm:$0xff] %v1312
      %1498 = vst [vmem:[%s1477] ss:$4 sm:$0xff] %v1313
      %v1499 = vld.sshfl [vmem:[#allocation1 + $0x20] sm:$0xff pattern:$0x73625140]
      %1500 = vst [vmem:[#allocation1] ss:$4 sm:$0xff] %v1314
      %1501 = vst [vmem:[%s1464] ss:$4 sm:$0xff] %v1315
      %1502 = vst [vmem:[%s1466] ss:$4 sm:$0xff] %v1316
      %1503 = vst [vmem:[%s1468] ss:$4 sm:$0xff] %v1317
      %v1504 = vld.sshfl [vmem:[#allocation1] sm:$0xff pattern:$0x73625140]
      %1505 = vst [vmem:[%s1471] ss:$4 sm:$0xff] %v1318
      %1506 = vst [vmem:[%s1473] ss:$4 sm:$0xff] %v1319
      %1507 = vst [vmem:[%s1475] ss:$4 sm:$0xff] %v1320
      %1508 = vst [vmem:[%s1477] ss:$4 sm:$0xff] %v1321
      %v1509 = vld.sshfl [vmem:[#allocation1 + $0x20] sm:$0xff pattern:$0x73625140]
      %1510 = vst [vmem:[#allocation1] ss:$4 sm:$0xff] %v1322
      %1511 = vst [vmem:[%s1464] ss:$4 sm:$0xff] %v1323
      %1512 = vst [vmem:[%s1466] ss:$4 sm:$0xff] %v1324
      %1513 = vst [vmem:[%s1468] ss:$4 sm:$0xff] %v1325
      %v1514 = vld.sshfl [vmem:[#allocation1] sm:$0xff pattern:$0x73625140]
      %1515 = vst [vmem:[%s1471] ss:$4 sm:$0xff] %v1326
      %1516 = vst [vmem:[%s1473] ss:$4 sm:$0xff] %v1327
      %1517 = vst [vmem:[%s1475] ss:$4 sm:$0xff] %v1328
      %1518 = vst [vmem:[%s1477] ss:$4 sm:$0xff] %v1329
      %v1519 = vld.sshfl [vmem:[#allocation1 + $0x20] sm:$0xff pattern:$0x73625140]
      %1520 = vst [vmem:[#allocation1] ss:$4 sm:$0xff] %v1330
      %1521 = vst [vmem:[%s1464] ss:$4 sm:$0xff] %v1331
      %1522 = vst [vmem:[%s1466] ss:$4 sm:$0xff] %v1332
      %1523 = vst [vmem:[%s1468] ss:$4 sm:$0xff] %v1333
      %v1524 = vld.sshfl [vmem:[#allocation1] sm:$0xff pattern:$0x73625140]
      %1525 = vst [vmem:[%s1471] ss:$4 sm:$0xff] %v1334
      %1526 = vst [vmem:[%s1473] ss:$4 sm:$0xff] %v1335
      %1527 = vst [vmem:[%s1475] ss:$4 sm:$0xff] %v1336
      %1528 = vst [vmem:[%s1477] ss:$4 sm:$0xff] %v1337
      %v1529 = vld.sshfl [vmem:[#allocation1 + $0x20] sm:$0xff pattern:$0x73625140]
      %v1542 = vpack.c.bf16 %v1470, %v1470
      %v1543 = vpack.c.bf16 %v1479, %v1479
      %v1544 = vpack.c.bf16 %v1484, %v1484
      %v1545 = vpack.c.bf16 %v1489, %v1489
      %v1546 = vpack.c.bf16 %v1494, %v1494
      %v1547 = vpack.c.bf16 %v1499, %v1499
      %v1548 = vpack.c.bf16 %v1504, %v1504
      %v1549 = vpack.c.bf16 %v1509, %v1509
      %v1550 = vpack.c.bf16 %v1514, %v1514
      %v1551 = vpack.c.bf16 %v1519, %v1519
      %v1552 = vpack.c.bf16 %v1524, %v1524
      %v1553 = vpack.c.bf16 %v1529, %v1529
      %v1555 = vshrl.u32 %v1542, 16
      %v1557 = vrot.slane %v1555, 7
      %v1558 = vshll.u32 %v1542, 16
      %v1560 = vor.u32 %v1557, %v1558
      %v1561 = vrot.slane %v1557, 4
      %v1563 = vshrl.u32 %v1543, 16
      %v1565 = vrot.slane %v1563, 7
      %v1566 = vshll.u32 %v1543, 16
      %v1568 = vor.u32 %v1565, %v1566
      %v1569 = vrot.slane %v1565, 4
      %v1571 = vshrl.u32 %v1544, 16
      %v1573 = vrot.slane %v1571, 7
      %v1574 = vshll.u32 %v1544, 16
      %v1576 = vor.u32 %v1573, %v1574
      %v1577 = vrot.slane %v1573, 4
      %v1579 = vshrl.u32 %v1545, 16
      %v1581 = vrot.slane %v1579, 7
      %v1582 = vshll.u32 %v1545, 16
      %v1584 = vor.u32 %v1581, %v1582
      %v1585 = vrot.slane %v1581, 4
      %v1587 = vshrl.u32 %v1546, 16
      %v1589 = vrot.slane %v1587, 7
      %v1590 = vshll.u32 %v1546, 16
      %v1592 = vor.u32 %v1589, %v1590
      %v1593 = vrot.slane %v1589, 4
      %v1595 = vshrl.u32 %v1547, 16
      %v1597 = vrot.slane %v1595, 7
      %v1598 = vshll.u32 %v1547, 16
      %v1600 = vor.u32 %v1597, %v1598
      %v1601 = vrot.slane %v1597, 4
      %v1603 = vshrl.u32 %v1548, 16
      %v1605 = vrot.slane %v1603, 7
      %v1606 = vshll.u32 %v1548, 16
      %v1608 = vor.u32 %v1605, %v1606
      %v1609 = vrot.slane %v1605, 4
      %v1611 = vshrl.u32 %v1549, 16
      %v1613 = vrot.slane %v1611, 7
      %v1614 = vshll.u32 %v1549, 16
      %v1616 = vor.u32 %v1613, %v1614
      %v1617 = vrot.slane %v1613, 4
      %v1619 = vshrl.u32 %v1550, 16
      %v1621 = vrot.slane %v1619, 7
      %v1622 = vshll.u32 %v1550, 16
      %v1624 = vor.u32 %v1621, %v1622
      %v1625 = vrot.slane %v1621, 4
      %v1627 = vshrl.u32 %v1551, 16
      %v1629 = vrot.slane %v1627, 7
      %v1630 = vshll.u32 %v1551, 16
      %v1632 = vor.u32 %v1629, %v1630
      %v1633 = vrot.slane %v1629, 4
      %v1635 = vshrl.u32 %v1552, 16
      %v1637 = vrot.slane %v1635, 7
      %v1638 = vshll.u32 %v1552, 16
      %v1640 = vor.u32 %v1637, %v1638
      %v1641 = vrot.slane %v1637, 4
      %v1643 = vshrl.u32 %v1553, 16
      %v1645 = vrot.slane %v1643, 7
      %v1646 = vshll.u32 %v1553, 16
      %v1648 = vor.u32 %v1645, %v1646
      %v1649 = vrot.slane %v1645, 4
      %vm1674 = vcmask 27648
      %vm1675 = vmand %vm1674, %vm1377
      %v1676 = vld [vmem:[#allocation2] sm:$0xf]
      %v1677 = vsel %vm1675, %v1560, %v1676
      %1678 = vst [vmem:[#allocation2] sm:$0xf] %v1677
      %v1679 = vld [vmem:[#allocation2 + $0x4] sm:$0x1]
      %v1680 = vsel %vm1340, %v1561, %v1679
      %1681 = vst [vmem:[#allocation2 + $0x4] sm:$0x1] %v1680
      %v1682 = vld [vmem:[#allocation2 + $0x8] sm:$0xf]
      %v1683 = vsel %vm1675, %v1568, %v1682
      %1684 = vst [vmem:[#allocation2 + $0x8] sm:$0xf] %v1683
      %v1685 = vld [vmem:[#allocation2 + $0xc] sm:$0x1]
      %v1686 = vsel %vm1340, %v1569, %v1685
      %1687 = vst [vmem:[#allocation2 + $0xc] sm:$0x1] %v1686
      %v1688 = vld [vmem:[#allocation2 + $0x10] sm:$0xf]
      %v1689 = vsel %vm1675, %v1576, %v1688
      %1690 = vst [vmem:[#allocation2 + $0x10] sm:$0xf] %v1689
      %v1691 = vld [vmem:[#allocation2 + $0x14] sm:$0x1]
      %v1692 = vsel %vm1340, %v1577, %v1691
      %1693 = vst [vmem:[#allocation2 + $0x14] sm:$0x1] %v1692
      %v1694 = vld [vmem:[#allocation2 + $0x18] sm:$0xf]
      %v1695 = vsel %vm1675, %v1584, %v1694
      %1696 = vst [vmem:[#allocation2 + $0x18] sm:$0xf] %v1695
      %v1697 = vld [vmem:[#allocation2 + $0x1c] sm:$0x1]
      %v1698 = vsel %vm1340, %v1585, %v1697
      %1699 = vst [vmem:[#allocation2 + $0x1c] sm:$0x1] %v1698
      %v1700 = vld [vmem:[#allocation2 + $0x20] sm:$0xf]
      %v1701 = vsel %vm1675, %v1592, %v1700
      %1702 = vst [vmem:[#allocation2 + $0x20] sm:$0xf] %v1701
      %v1703 = vld [vmem:[#allocation2 + $0x24] sm:$0x1]
      %v1704 = vsel %vm1340, %v1593, %v1703
      %1705 = vst [vmem:[#allocation2 + $0x24] sm:$0x1] %v1704
      %v1706 = vld [vmem:[#allocation2 + $0x28] sm:$0xf]
      %v1707 = vsel %vm1675, %v1600, %v1706
      %1708 = vst [vmem:[#allocation2 + $0x28] sm:$0xf] %v1707
      %v1709 = vld [vmem:[#allocation2 + $0x2c] sm:$0x1]
      %v1710 = vsel %vm1340, %v1601, %v1709
      %1711 = vst [vmem:[#allocation2 + $0x2c] sm:$0x1] %v1710
      %v1712 = vld [vmem:[#allocation2 + $0x30] sm:$0xf]
      %v1713 = vsel %vm1675, %v1608, %v1712
      %1714 = vst [vmem:[#allocation2 + $0x30] sm:$0xf] %v1713
      %v1715 = vld [vmem:[#allocation2 + $0x34] sm:$0x1]
      %v1716 = vsel %vm1340, %v1609, %v1715
      %1717 = vst [vmem:[#allocation2 + $0x34] sm:$0x1] %v1716
      %v1718 = vld [vmem:[#allocation2 + $0x38] sm:$0xf]
      %v1719 = vsel %vm1675, %v1616, %v1718
      %1720 = vst [vmem:[#allocation2 + $0x38] sm:$0xf] %v1719
      %v1721 = vld [vmem:[#allocation2 + $0x3c] sm:$0x1]
      %v1722 = vsel %vm1340, %v1617, %v1721
      %1723 = vst [vmem:[#allocation2 + $0x3c] sm:$0x1] %v1722
      %v1724 = vld [vmem:[#allocation2 + $0x40] sm:$0xf]
      %v1725 = vsel %vm1675, %v1624, %v1724
      %1726 = vst [vmem:[#allocation2 + $0x40] sm:$0xf] %v1725
      %v1727 = vld [vmem:[#allocation2 + $0x44] sm:$0x1]
      %v1728 = vsel %vm1340, %v1625, %v1727
      %1729 = vst [vmem:[#allocation2 + $0x44] sm:$0x1] %v1728
      %v1730 = vld [vmem:[#allocation2 + $0x48] sm:$0xf]
      %v1731 = vsel %vm1675, %v1632, %v1730
      %1732 = vst [vmem:[#allocation2 + $0x48] sm:$0xf] %v1731
      %v1733 = vld [vmem:[#allocation2 + $0x4c] sm:$0x1]
      %v1734 = vsel %vm1340, %v1633, %v1733
      %1735 = vst [vmem:[#allocation2 + $0x4c] sm:$0x1] %v1734
      %v1736 = vld [vmem:[#allocation2 + $0x50] sm:$0xf]
      %v1737 = vsel %vm1675, %v1640, %v1736
      %1738 = vst [vmem:[#allocation2 + $0x50] sm:$0xf] %v1737
      %v1739 = vld [vmem:[#allocation2 + $0x54] sm:$0x1]
      %v1740 = vsel %vm1340, %v1641, %v1739
      %1741 = vst [vmem:[#allocation2 + $0x54] sm:$0x1] %v1740
      %v1742 = vld [vmem:[#allocation2 + $0x58] sm:$0xf]
      %v1743 = vsel %vm1675, %v1648, %v1742
      %1744 = vst [vmem:[#allocation2 + $0x58] sm:$0xf] %v1743
      %v1745 = vld [vmem:[#allocation2 + $0x5c] sm:$0x1]
      %v1746 = vsel %vm1340, %v1649, %v1745
      %1747 = vst [vmem:[#allocation2 + $0x5c] sm:$0x1] %v1746
      %v1748 = vld [vmem:[#allocation2] sm:$0xf]
      %v1749 = vld [vmem:[#allocation2 + $0x8] sm:$0xf]
      %v1750 = vld [vmem:[#allocation2 + $0x10] sm:$0xf]
      %v1751 = vld [vmem:[#allocation2 + $0x18] sm:$0xf]
      %v1752 = vld [vmem:[#allocation2 + $0x20] sm:$0xf]
      %v1753 = vld [vmem:[#allocation2 + $0x28] sm:$0xf]
      %v1754 = vld [vmem:[#allocation2 + $0x30] sm:$0xf]
      %v1755 = vld [vmem:[#allocation2 + $0x38] sm:$0xf]
      %v1756 = vld [vmem:[#allocation2 + $0x40] sm:$0xf]
      %v1757 = vld [vmem:[#allocation2 + $0x48] sm:$0xf]
      %v1758 = vld [vmem:[%s1] sm:$0x3]
      %v1759 = vld [vmem:[#allocation2 + $0x4] sm:$0x1]
      %v1760 = vld [vmem:[#allocation2 + $0xc] sm:$0x1]
      %v1761 = vld [vmem:[#allocation2 + $0x14] sm:$0x1]
      %v1762 = vld [vmem:[#allocation2 + $0x1c] sm:$0x1]
      %v1763 = vld [vmem:[#allocation2 + $0x24] sm:$0x1]
      %v1764 = vld [vmem:[#allocation2 + $0x2c] sm:$0x1]
      %v1765 = vld [vmem:[#allocation2 + $0x34] sm:$0x1]
      %v1766 = vld [vmem:[#allocation2 + $0x3c] sm:$0x1]
      %v1767 = vld [vmem:[#allocation2 + $0x44] sm:$0x1]
      %v1768 = vld [vmem:[#allocation2 + $0x4c] sm:$0x1]
      %vm1769 = vsmask.f32 3328
      %vm1770 = vsmask.f32 7440
      %vm1771 = vmor %vm1769, %vm1770
      %v1773 = vshrl.u32 %v1748, 16
      %v1775 = vrot.slane %v1773, 4
      %v1776 = vshll.u32 %v1748, 16
      %v1778 = vrot.slane %v1776, 5
      %v1779 = vor.u32 %v1775, %v1778
      %v1780 = vrot.slane %v1779, 4
      %v1782 = vshll.u32 %v1759, 16
      %v1784 = vrot.slane %v1782, 5
      %v1785 = vsel %vm1771, %v1780, %v1784
      %v1787 = vshrl.u32 %v1749, 16
      %v1789 = vrot.slane %v1787, 4
      %v1790 = vshll.u32 %v1749, 16
      %v1792 = vrot.slane %v1790, 5
      %v1793 = vor.u32 %v1789, %v1792
      %v1794 = vrot.slane %v1793, 4
      %v1796 = vshll.u32 %v1760, 16
      %v1798 = vrot.slane %v1796, 5
      %v1799 = vsel %vm1771, %v1794, %v1798
      %v1801 = vshrl.u32 %v1750, 16
      %v1803 = vrot.slane %v1801, 4
      %v1804 = vshll.u32 %v1750, 16
      %v1806 = vrot.slane %v1804, 5
      %v1807 = vor.u32 %v1803, %v1806
      %v1808 = vrot.slane %v1807, 4
      %v1810 = vshll.u32 %v1761, 16
      %v1812 = vrot.slane %v1810, 5
      %v1813 = vsel %vm1771, %v1808, %v1812
      %v1815 = vshrl.u32 %v1751, 16
      %v1817 = vrot.slane %v1815, 4
      %v1818 = vshll.u32 %v1751, 16
      %v1820 = vrot.slane %v1818, 5
      %v1821 = vor.u32 %v1817, %v1820
      %v1822 = vrot.slane %v1821, 4
      %v1824 = vshll.u32 %v1762, 16
      %v1826 = vrot.slane %v1824, 5
      %v1827 = vsel %vm1771, %v1822, %v1826
      %v1829 = vshrl.u32 %v1752, 16
      %v1831 = vrot.slane %v1829, 4
      %v1832 = vshll.u32 %v1752, 16
      %v1834 = vrot.slane %v1832, 5
      %v1835 = vor.u32 %v1831, %v1834
      %v1836 = vrot.slane %v1835, 4
      %v1838 = vshll.u32 %v1763, 16
      %v1840 = vrot.slane %v1838, 5
      %v1841 = vsel %vm1771, %v1836, %v1840
      %v1843 = vshrl.u32 %v1753, 16
      %v1845 = vrot.slane %v1843, 4
      %v1846 = vshll.u32 %v1753, 16
      %v1848 = vrot.slane %v1846, 5
      %v1849 = vor.u32 %v1845, %v1848
      %v1850 = vrot.slane %v1849, 4
      %v1852 = vshll.u32 %v1764, 16
      %v1854 = vrot.slane %v1852, 5
      %v1855 = vsel %vm1771, %v1850, %v1854
      %v1857 = vshrl.u32 %v1754, 16
      %v1859 = vrot.slane %v1857, 4
      %v1860 = vshll.u32 %v1754, 16
      %v1862 = vrot.slane %v1860, 5
      %v1863 = vor.u32 %v1859, %v1862
      %v1864 = vrot.slane %v1863, 4
      %v1866 = vshll.u32 %v1765, 16
      %v1868 = vrot.slane %v1866, 5
      %v1869 = vsel %vm1771, %v1864, %v1868
      %v1871 = vshrl.u32 %v1755, 16
      %v1873 = vrot.slane %v1871, 4
      %v1874 = vshll.u32 %v1755, 16
      %v1876 = vrot.slane %v1874, 5
      %v1877 = vor.u32 %v1873, %v1876
      %v1878 = vrot.slane %v1877, 4
      %v1880 = vshll.u32 %v1766, 16
      %v1882 = vrot.slane %v1880, 5
      %v1883 = vsel %vm1771, %v1878, %v1882
      %v1885 = vshrl.u32 %v1756, 16
      %v1887 = vrot.slane %v1885, 4
      %v1888 = vshll.u32 %v1756, 16
      %v1890 = vrot.slane %v1888, 5
      %v1891 = vor.u32 %v1887, %v1890
      %v1892 = vrot.slane %v1891, 4
      %v1894 = vshll.u32 %v1767, 16
      %v1896 = vrot.slane %v1894, 5
      %v1897 = vsel %vm1771, %v1892, %v1896
      %v1899 = vshrl.u32 %v1757, 16
      %v1901 = vrot.slane %v1899, 4
      %v1902 = vshll.u32 %v1757, 16
      %v1904 = vrot.slane %v1902, 5
      %v1905 = vor.u32 %v1901, %v1904
      %v1906 = vrot.slane %v1905, 4
      %v1908 = vshll.u32 %v1768, 16
      %v1910 = vrot.slane %v1908, 5
      %v1911 = vsel %vm1771, %v1906, %v1910
      %v1912 = vld [vmem:[%s1] sm:$0xc]
      %v1913 = vunpack.c.l.b16 %v1785
      %v1914 = vunpack.c.l.b16 %v1799
      %v1915 = vunpack.c.l.b16 %v1813
      %v1916 = vunpack.c.l.b16 %v1827
      %v1917 = vunpack.c.l.b16 %v1841
      %v1918 = vunpack.c.l.b16 %v1855
      %v1919 = vunpack.c.l.b16 %v1869
      %v1920 = vunpack.c.l.b16 %v1883
      %v1921 = vunpack.c.l.b16 %v1897
      %v1922 = vunpack.c.l.b16 %v1911
      %v1923 = vpack.c.b16 %v1914, %v1913
      %v1924 = vpack.c.b16 %v1916, %v1915
      %v1925 = vpack.c.b16 %v1918, %v1917
      %v1926 = vpack.c.b16 %v1920, %v1919
      %v1927 = vpack.c.b16 %v1922, %v1921
      %v1929 = vunpack.c.l.b16 %v1912
      %v1930 = vpack.c.b16 %v1929, %v1929
      %v1931 = vrot.slane %v1930, 2
      %vm1932 = vcmask 31744
      %v1934 = vsel %vm1932, %v1923, 0
      %v1937 = vsel %vm1932, %v1924, 0
      %v1940 = vsel %vm1932, %v1925, 0
      %v1943 = vsel %vm1932, %v1926, 0
      %v1946 = vsel %vm1932, %v1927, 0
      %vm1948 = vcmask 1041408
      %v1950 = vsel %vm1948, %v1931, 0
      %1952 = vmatpush.bf16.msra.mxu0 0
      %1953 = vmatpush.bf16.msra.mxu0 0
      %1954 = vmatpush.bf16.msra.mxu0 0
      %1955 = vmatpush.bf16.msra.mxu0 0
      %1956 = vmatpush.bf16.msra.mxu0 0
      %1957 = vmatpush.bf16.msra.mxu0 0
      %1958 = vmatpush.bf16.msra.mxu0 0
      %1959 = vmatpush.bf16.msra.mxu0 %v1950
      %1960 = vmatmul.bf16.gmra.mxu0 %v1934
      %v1961 = vpop.f32.mrf.mxu0
      %v1962 = vadd.f32 0.0, %v1961
      %v1963 = vpop.f32.mrf.mxu0
      %v1964 = vadd.f32 0.0, %v1963
      %1965 = vmatmul.bf16.gmra.mxu0 %v1937
      %v1966 = vpop.f32.mrf.mxu0
      %v1967 = vadd.f32 0.0, %v1966
      %v1968 = vpop.f32.mrf.mxu0
      %v1969 = vadd.f32 0.0, %v1968
      %1970 = vmatmul.bf16.gmra.mxu0 %v1940
      %v1971 = vpop.f32.mrf.mxu0
      %v1972 = vadd.f32 0.0, %v1971
      %v1973 = vpop.f32.mrf.mxu0
      %v1974 = vadd.f32 0.0, %v1973
      %1975 = vmatmul.bf16.gmra.mxu0 %v1943
      %v1976 = vpop.f32.mrf.mxu0
      %v1977 = vadd.f32 0.0, %v1976
      %v1978 = vpop.f32.mrf.mxu0
      %v1979 = vadd.f32 0.0, %v1978
      %1980 = vmatmul.bf16.gmra.mxu0 %v1946
      %v1981 = vpop.f32.mrf.mxu0
      %v1982 = vadd.f32 0.0, %v1981
      %v1983 = vpop.f32.mrf.mxu0
      %v1984 = vadd.f32 0.0, %v1983
      %1985 = vdwg.mxu0
      %v1996 = vunpack.c.l.b16 %v1748
      %v1997 = vunpack.c.l.b16 %v1749
      %v1998 = vunpack.c.l.b16 %v1750
      %v1999 = vunpack.c.l.b16 %v1751
      %v2000 = vunpack.c.l.b16 %v1752
      %v2001 = vunpack.c.l.b16 %v1753
      %v2002 = vunpack.c.l.b16 %v1754
      %v2003 = vunpack.c.l.b16 %v1755
      %v2004 = vunpack.c.l.b16 %v1756
      %v2005 = vunpack.c.l.b16 %v1757
      %v2006 = vpack.c.b16 %v1997, %v1996
      %v2007 = vpack.c.b16 %v1999, %v1998
      %v2008 = vpack.c.b16 %v2001, %v2000
      %v2009 = vpack.c.b16 %v2003, %v2002
      %v2010 = vpack.c.b16 %v2005, %v2004
      %v2012 = vsel %vm1932, %v2006, 0
      %v2015 = vsel %vm1932, %v2007, 0
      %v2018 = vsel %vm1932, %v2008, 0
      %v2021 = vsel %vm1932, %v2009, 0
      %v2024 = vsel %vm1932, %v2010, 0
      %v2027 = vsel %vm1948, %v1758, 0
      %2029 = vmatpush.bf16.msra.mxu0 0
      %2030 = vmatpush.bf16.msra.mxu0 0
      %2031 = vmatpush.bf16.msra.mxu0 0
      %2032 = vmatpush.bf16.msra.mxu0 0
      %2033 = vmatpush.bf16.msra.mxu0 0
      %2034 = vmatpush.bf16.msra.mxu0 0
      %2035 = vmatpush.bf16.msra.mxu0 0
      %2036 = vmatpush.bf16.msra.mxu0 %v2027
      %2037 = vmatmul.bf16.gmra.mxu0 %v2012
      %v2038 = vpop.f32.mrf.mxu0
      %v2039 = vadd.f32 %v1962, %v2038
      %v2040 = vpop.f32.mrf.mxu0
      %v2041 = vadd.f32 %v1964, %v2040
      %2042 = vmatmul.bf16.gmra.mxu0 %v2015
      %v2043 = vpop.f32.mrf.mxu0
      %v2044 = vadd.f32 %v1967, %v2043
      %v2045 = vpop.f32.mrf.mxu0
      %v2046 = vadd.f32 %v1969, %v2045
      %2047 = vmatmul.bf16.gmra.mxu0 %v2018
      %v2048 = vpop.f32.mrf.mxu0
      %v2049 = vadd.f32 %v1972, %v2048
      %v2050 = vpop.f32.mrf.mxu0
      %v2051 = vadd.f32 %v1974, %v2050
      %2052 = vmatmul.bf16.gmra.mxu0 %v2021
      %v2053 = vpop.f32.mrf.mxu0
      %v2054 = vadd.f32 %v1977, %v2053
      %v2055 = vpop.f32.mrf.mxu0
      %v2056 = vadd.f32 %v1979, %v2055
      %2057 = vmatmul.bf16.gmra.mxu0 %v2024
      %v2058 = vpop.f32.mrf.mxu0
      %v2059 = vadd.f32 %v1982, %v2058
      %v2060 = vpop.f32.mrf.mxu0
      %v2061 = vadd.f32 %v1984, %v2060
      %2062 = vdwg.mxu0
      %v2063 = vld [vmem:[#allocation2] sm:$0xe]
      %v2064 = vld [vmem:[#allocation2 + $0x8] sm:$0xe]
      %v2065 = vld [vmem:[#allocation2 + $0x10] sm:$0xe]
      %v2066 = vld [vmem:[#allocation2 + $0x18] sm:$0xe]
      %v2067 = vld [vmem:[#allocation2 + $0x20] sm:$0xe]
      %v2068 = vld [vmem:[#allocation2 + $0x28] sm:$0xe]
      %v2069 = vld [vmem:[#allocation2 + $0x30] sm:$0xe]
      %v2070 = vld [vmem:[#allocation2 + $0x38] sm:$0xe]
      %v2071 = vld [vmem:[#allocation2 + $0x40] sm:$0xe]
      %v2072 = vld [vmem:[#allocation2 + $0x48] sm:$0xe]
      %vm2093 = vcmask 1042432
      %vm2094 = vcmask 1046532
      %vm2095 = vmor %vm2093, %vm2094
      %v2096 = vrot.slane %v2063, 5
      %v2097 = vrot.slane %v2096, 4
      %v2098 = vrot.slane %v1759, 5
      %v2099 = vsel %vm2095, %v2097, %v2098
      %v2100 = vrot.slane %v2064, 5
      %v2101 = vrot.slane %v2100, 4
      %v2102 = vrot.slane %v1760, 5
      %v2103 = vsel %vm2095, %v2101, %v2102
      %v2104 = vrot.slane %v2065, 5
      %v2105 = vrot.slane %v2104, 4
      %v2106 = vrot.slane %v1761, 5
      %v2107 = vsel %vm2095, %v2105, %v2106
      %v2108 = vrot.slane %v2066, 5
      %v2109 = vrot.slane %v2108, 4
      %v2110 = vrot.slane %v1762, 5
      %v2111 = vsel %vm2095, %v2109, %v2110
      %v2112 = vrot.slane %v2067, 5
      %v2113 = vrot.slane %v2112, 4
      %v2114 = vrot.slane %v1763, 5
      %v2115 = vsel %vm2095, %v2113, %v2114
      %v2116 = vrot.slane %v2068, 5
      %v2117 = vrot.slane %v2116, 4
      %v2118 = vrot.slane %v1764, 5
      %v2119 = vsel %vm2095, %v2117, %v2118
      %v2120 = vrot.slane %v2069, 5
      %v2121 = vrot.slane %v2120, 4
      %v2122 = vrot.slane %v1765, 5
      %v2123 = vsel %vm2095, %v2121, %v2122
      %v2124 = vrot.slane %v2070, 5
      %v2125 = vrot.slane %v2124, 4
      %v2126 = vrot.slane %v1766, 5
      %v2127 = vsel %vm2095, %v2125, %v2126
      %v2128 = vrot.slane %v2071, 5
      %v2129 = vrot.slane %v2128, 4
      %v2130 = vrot.slane %v1767, 5
      %v2131 = vsel %vm2095, %v2129, %v2130
      %v2132 = vrot.slane %v2072, 5
      %v2133 = vrot.slane %v2132, 4
      %v2134 = vrot.slane %v1768, 5
      %v2135 = vsel %vm2095, %v2133, %v2134
      %v2136 = vld [vmem:[%s1 + $0x4] sm:$0x3]
      %v2137 = vunpack.c.l.b16 %v2099
      %v2138 = vunpack.c.l.b16 %v2103
      %v2139 = vunpack.c.l.b16 %v2107
      %v2140 = vunpack.c.l.b16 %v2111
      %v2141 = vunpack.c.l.b16 %v2115
      %v2142 = vunpack.c.l.b16 %v2119
      %v2143 = vunpack.c.l.b16 %v2123
      %v2144 = vunpack.c.l.b16 %v2127
      %v2145 = vunpack.c.l.b16 %v2131
      %v2146 = vunpack.c.l.b16 %v2135
      %v2147 = vpack.c.b16 %v2138, %v2137
      %v2148 = vpack.c.b16 %v2140, %v2139
      %v2149 = vpack.c.b16 %v2142, %v2141
      %v2150 = vpack.c.b16 %v2144, %v2143
      %v2151 = vpack.c.b16 %v2146, %v2145
      %v2153 = vsel %vm1932, %v2147, 0
      %v2156 = vsel %vm1932, %v2148, 0
      %v2159 = vsel %vm1932, %v2149, 0
      %v2162 = vsel %vm1932, %v2150, 0
      %v2165 = vsel %vm1932, %v2151, 0
      %v2168 = vsel %vm1948, %v2136, 0
      %2170 = vmatpush.bf16.msra.mxu0 0
      %2171 = vmatpush.bf16.msra.mxu0 0
      %2172 = vmatpush.bf16.msra.mxu0 0
      %2173 = vmatpush.bf16.msra.mxu0 0
      %2174 = vmatpush.bf16.msra.mxu0 0
      %2175 = vmatpush.bf16.msra.mxu0 0
      %2176 = vmatpush.bf16.msra.mxu0 0
      %2177 = vmatpush.bf16.msra.mxu0 %v2168
      %2178 = vmatmul.bf16.gmra.mxu0 %v2153
      %v2179 = vpop.f32.mrf.mxu0
      %v2180 = vadd.f32 0.0, %v2179
      %v2181 = vpop.f32.mrf.mxu0
      %v2182 = vadd.f32 0.0, %v2181
      %2183 = vmatmul.bf16.gmra.mxu0 %v2156
      %v2184 = vpop.f32.mrf.mxu0
      %v2185 = vadd.f32 0.0, %v2184
      %v2186 = vpop.f32.mrf.mxu0
      %v2187 = vadd.f32 0.0, %v2186
      %2188 = vmatmul.bf16.gmra.mxu0 %v2159
      %v2189 = vpop.f32.mrf.mxu0
      %v2190 = vadd.f32 0.0, %v2189
      %v2191 = vpop.f32.mrf.mxu0
      %v2192 = vadd.f32 0.0, %v2191
      %2193 = vmatmul.bf16.gmra.mxu0 %v2162
      %v2194 = vpop.f32.mrf.mxu0
      %v2195 = vadd.f32 0.0, %v2194
      %v2196 = vpop.f32.mrf.mxu0
      %v2197 = vadd.f32 0.0, %v2196
      %2198 = vmatmul.bf16.gmra.mxu0 %v2165
      %v2199 = vpop.f32.mrf.mxu0
      %v2200 = vadd.f32 0.0, %v2199
      %v2201 = vpop.f32.mrf.mxu0
      %v2202 = vadd.f32 0.0, %v2201
      %2203 = vdwg.mxu0
      %v2204 = vadd.f32 %v2039, %v2180
      %v2205 = vadd.f32 %v2041, %v2182
      %v2206 = vadd.f32 %v2044, %v2185
      %v2207 = vadd.f32 %v2046, %v2187
      %v2208 = vadd.f32 %v2049, %v2190
      %v2209 = vadd.f32 %v2051, %v2192
      %v2210 = vadd.f32 %v2054, %v2195
      %v2211 = vadd.f32 %v2056, %v2197
      %v2212 = vadd.f32 %v2059, %v2200
      %v2213 = vadd.f32 %v2061, %v2202
      %s2214 = scalar_lea.vmem [#allocation2], 8
      %v2215 = vld [vmem:[%s2214] sm:$0xf]
      %v2216 = vld [vmem:[%s2214 + $0x8] sm:$0xf]
      %v2217 = vld [vmem:[%s2214 + $0x10] sm:$0xf]
      %v2218 = vld [vmem:[%s2214 + $0x18] sm:$0xf]
      %v2219 = vld [vmem:[%s2214 + $0x20] sm:$0xf]
      %v2220 = vld [vmem:[%s2214 + $0x28] sm:$0xf]
      %v2221 = vld [vmem:[%s2214 + $0x30] sm:$0xf]
      %v2222 = vld [vmem:[%s2214 + $0x38] sm:$0xf]
      %v2223 = vld [vmem:[%s2214 + $0x40] sm:$0xf]
      %v2224 = vld [vmem:[%s2214 + $0x48] sm:$0xf]
      %v2225 = vld [vmem:[%s1 + $0x4] sm:$0xc]
      %v2236 = vunpack.c.l.b16 %v2215
      %v2237 = vunpack.c.l.b16 %v2216
      %v2238 = vunpack.c.l.b16 %v2217
      %v2239 = vunpack.c.l.b16 %v2218
      %v2240 = vunpack.c.l.b16 %v2219
      %v2241 = vunpack.c.l.b16 %v2220
      %v2242 = vunpack.c.l.b16 %v2221
      %v2243 = vunpack.c.l.b16 %v2222
      %v2244 = vunpack.c.l.b16 %v2223
      %v2245 = vunpack.c.l.b16 %v2224
      %v2246 = vpack.c.b16 %v2237, %v2236
      %v2247 = vpack.c.b16 %v2239, %v2238
      %v2248 = vpack.c.b16 %v2241, %v2240
      %v2249 = vpack.c.b16 %v2243, %v2242
      %v2250 = vpack.c.b16 %v2245, %v2244
      %v2252 = vunpack.c.l.b16 %v2225
      %v2253 = vpack.c.b16 %v2252, %v2252
      %v2254 = vrot.slane %v2253, 2
      %v2256 = vsel %vm1932, %v2246, 0
      %v2259 = vsel %vm1932, %v2247, 0
      %v2262 = vsel %vm1932, %v2248, 0
      %v2265 = vsel %vm1932, %v2249, 0
      %v2268 = vsel %vm1932, %v2250, 0
      %v2271 = vsel %vm1948, %v2254, 0
      %2273 = vmatpush.bf16.msra.mxu0 0
      %2274 = vmatpush.bf16.msra.mxu0 0
      %2275 = vmatpush.bf16.msra.mxu0 0
      %2276 = vmatpush.bf16.msra.mxu0 0
      %2277 = vmatpush.bf16.msra.mxu0 0
      %2278 = vmatpush.bf16.msra.mxu0 0
      %2279 = vmatpush.bf16.msra.mxu0 0
      %2280 = vmatpush.bf16.msra.mxu0 %v2271
      %2281 = vmatmul.bf16.gmra.mxu0 %v2256
      %v2282 = vpop.f32.mrf.mxu0
      %v2283 = vadd.f32 0.0, %v2282
      %v2284 = vpop.f32.mrf.mxu0
      %v2285 = vadd.f32 0.0, %v2284
      %2286 = vmatmul.bf16.gmra.mxu0 %v2259
      %v2287 = vpop.f32.mrf.mxu0
      %v2288 = vadd.f32 0.0, %v2287
      %v2289 = vpop.f32.mrf.mxu0
      %v2290 = vadd.f32 0.0, %v2289
      %2291 = vmatmul.bf16.gmra.mxu0 %v2262
      %v2292 = vpop.f32.mrf.mxu0
      %v2293 = vadd.f32 0.0, %v2292
      %v2294 = vpop.f32.mrf.mxu0
      %v2295 = vadd.f32 0.0, %v2294
      %2296 = vmatmul.bf16.gmra.mxu0 %v2265
      %v2297 = vpop.f32.mrf.mxu0
      %v2298 = vadd.f32 0.0, %v2297
      %v2299 = vpop.f32.mrf.mxu0
      %v2300 = vadd.f32 0.0, %v2299
      %2301 = vmatmul.bf16.gmra.mxu0 %v2268
      %v2302 = vpop.f32.mrf.mxu0
      %v2303 = vadd.f32 0.0, %v2302
      %v2304 = vpop.f32.mrf.mxu0
      %v2305 = vadd.f32 0.0, %v2304
      %2306 = vdwg.mxu0
      %v2307 = vadd.f32 %v2204, %v2283
      %v2308 = vadd.f32 %v2205, %v2285
      %v2309 = vadd.f32 %v2206, %v2288
      %v2310 = vadd.f32 %v2207, %v2290
      %v2311 = vadd.f32 %v2208, %v2293
      %v2312 = vadd.f32 %v2209, %v2295
      %v2313 = vadd.f32 %v2210, %v2298
      %v2314 = vadd.f32 %v2211, %v2300
      %v2315 = vadd.f32 %v2212, %v2303
      %v2316 = vadd.f32 %v2213, %v2305
      %v2317 = vld [vmem:[%s2214] sm:$0xf]
      %v2318 = vld [vmem:[%s2214 + $0x4] sm:$0x1]
      %v2319 = vld [vmem:[%s2214 + $0x8] sm:$0xf]
      %v2320 = vld [vmem:[%s2214 + $0xc] sm:$0x1]
      %v2321 = vld [vmem:[%s2214 + $0x10] sm:$0xf]
      %v2322 = vld [vmem:[%s2214 + $0x14] sm:$0x1]
      %v2323 = vld [vmem:[%s2214 + $0x18] sm:$0xf]
      %v2324 = vld [vmem:[%s2214 + $0x1c] sm:$0x1]
      %v2325 = vld [vmem:[%s2214 + $0x20] sm:$0xf]
      %v2326 = vld [vmem:[%s2214 + $0x24] sm:$0x1]
      %v2327 = vld [vmem:[%s2214 + $0x28] sm:$0xf]
      %v2328 = vld [vmem:[%s2214 + $0x2c] sm:$0x1]
      %v2329 = vld [vmem:[%s2214 + $0x30] sm:$0xf]
      %v2330 = vld [vmem:[%s2214 + $0x34] sm:$0x1]
      %v2331 = vld [vmem:[%s2214 + $0x38] sm:$0xf]
      %v2332 = vld [vmem:[%s2214 + $0x3c] sm:$0x1]
      %v2333 = vld [vmem:[%s2214 + $0x40] sm:$0xf]
      %v2334 = vld [vmem:[%s2214 + $0x44] sm:$0x1]
      %v2335 = vld [vmem:[%s2214 + $0x48] sm:$0xf]
      %v2336 = vld [vmem:[%s2214 + $0x4c] sm:$0x1]
      %v2338 = vshrl.u32 %v2317, 16
      %v2340 = vrot.slane %v2338, 4
      %v2341 = vshll.u32 %v2317, 16
      %v2343 = vrot.slane %v2341, 5
      %v2344 = vor.u32 %v2340, %v2343
      %v2345 = vrot.slane %v2344, 4
      %v2347 = vshll.u32 %v2318, 16
      %v2349 = vrot.slane %v2347, 5
      %v2350 = vsel %vm1771, %v2345, %v2349
      %v2352 = vshrl.u32 %v2319, 16
      %v2354 = vrot.slane %v2352, 4
      %v2355 = vshll.u32 %v2319, 16
      %v2357 = vrot.slane %v2355, 5
      %v2358 = vor.u32 %v2354, %v2357
      %v2359 = vrot.slane %v2358, 4
      %v2361 = vshll.u32 %v2320, 16
      %v2363 = vrot.slane %v2361, 5
      %v2364 = vsel %vm1771, %v2359, %v2363
      %v2366 = vshrl.u32 %v2321, 16
      %v2368 = vrot.slane %v2366, 4
      %v2369 = vshll.u32 %v2321, 16
      %v2371 = vrot.slane %v2369, 5
      %v2372 = vor.u32 %v2368, %v2371
      %v2373 = vrot.slane %v2372, 4
      %v2375 = vshll.u32 %v2322, 16
      %v2377 = vrot.slane %v2375, 5
      %v2378 = vsel %vm1771, %v2373, %v2377
      %v2380 = vshrl.u32 %v2323, 16
      %v2382 = vrot.slane %v2380, 4
      %v2383 = vshll.u32 %v2323, 16
      %v2385 = vrot.slane %v2383, 5
      %v2386 = vor.u32 %v2382, %v2385
      %v2387 = vrot.slane %v2386, 4
      %v2389 = vshll.u32 %v2324, 16
      %v2391 = vrot.slane %v2389, 5
      %v2392 = vsel %vm1771, %v2387, %v2391
      %v2394 = vshrl.u32 %v2325, 16
      %v2396 = vrot.slane %v2394, 4
      %v2397 = vshll.u32 %v2325, 16
      %v2399 = vrot.slane %v2397, 5
      %v2400 = vor.u32 %v2396, %v2399
      %v2401 = vrot.slane %v2400, 4
      %v2403 = vshll.u32 %v2326, 16
      %v2405 = vrot.slane %v2403, 5
      %v2406 = vsel %vm1771, %v2401, %v2405
      %v2408 = vshrl.u32 %v2327, 16
      %v2410 = vrot.slane %v2408, 4
      %v2411 = vshll.u32 %v2327, 16
      %v2413 = vrot.slane %v2411, 5
      %v2414 = vor.u32 %v2410, %v2413
      %v2415 = vrot.slane %v2414, 4
      %v2417 = vshll.u32 %v2328, 16
      %v2419 = vrot.slane %v2417, 5
      %v2420 = vsel %vm1771, %v2415, %v2419
      %v2422 = vshrl.u32 %v2329, 16
      %v2424 = vrot.slane %v2422, 4
      %v2425 = vshll.u32 %v2329, 16
      %v2427 = vrot.slane %v2425, 5
      %v2428 = vor.u32 %v2424, %v2427
      %v2429 = vrot.slane %v2428, 4
      %v2431 = vshll.u32 %v2330, 16
      %v2433 = vrot.slane %v2431, 5
      %v2434 = vsel %vm1771, %v2429, %v2433
      %v2436 = vshrl.u32 %v2331, 16
      %v2438 = vrot.slane %v2436, 4
      %v2439 = vshll.u32 %v2331, 16
      %v2441 = vrot.slane %v2439, 5
      %v2442 = vor.u32 %v2438, %v2441
      %v2443 = vrot.slane %v2442, 4
      %v2445 = vshll.u32 %v2332, 16
      %v2447 = vrot.slane %v2445, 5
      %v2448 = vsel %vm1771, %v2443, %v2447
      %v2450 = vshrl.u32 %v2333, 16
      %v2452 = vrot.slane %v2450, 4
      %v2453 = vshll.u32 %v2333, 16
      %v2455 = vrot.slane %v2453, 5
      %v2456 = vor.u32 %v2452, %v2455
      %v2457 = vrot.slane %v2456, 4
      %v2459 = vshll.u32 %v2334, 16
      %v2461 = vrot.slane %v2459, 5
      %v2462 = vsel %vm1771, %v2457, %v2461
      %v2464 = vshrl.u32 %v2335, 16
      %v2466 = vrot.slane %v2464, 4
      %v2467 = vshll.u32 %v2335, 16
      %v2469 = vrot.slane %v2467, 5
      %v2470 = vor.u32 %v2466, %v2469
      %v2471 = vrot.slane %v2470, 4
      %v2473 = vshll.u32 %v2336, 16
      %v2475 = vrot.slane %v2473, 5
      %v2476 = vsel %vm1771, %v2471, %v2475
      %v2477 = vld [vmem:[%s1 + $0x8] sm:$0x3]
      %v2478 = vunpack.c.l.b16 %v2350
      %v2479 = vunpack.c.l.b16 %v2364
      %v2480 = vunpack.c.l.b16 %v2378
      %v2481 = vunpack.c.l.b16 %v2392
      %v2482 = vunpack.c.l.b16 %v2406
      %v2483 = vunpack.c.l.b16 %v2420
      %v2484 = vunpack.c.l.b16 %v2434
      %v2485 = vunpack.c.l.b16 %v2448
      %v2486 = vunpack.c.l.b16 %v2462
      %v2487 = vunpack.c.l.b16 %v2476
      %v2488 = vpack.c.b16 %v2479, %v2478
      %v2489 = vpack.c.b16 %v2481, %v2480
      %v2490 = vpack.c.b16 %v2483, %v2482
      %v2491 = vpack.c.b16 %v2485, %v2484
      %v2492 = vpack.c.b16 %v2487, %v2486
      %v2494 = vsel %vm1932, %v2488, 0
      %v2497 = vsel %vm1932, %v2489, 0
      %v2500 = vsel %vm1932, %v2490, 0
      %v2503 = vsel %vm1932, %v2491, 0
      %v2506 = vsel %vm1932, %v2492, 0
      %v2509 = vsel %vm1948, %v2477, 0
      %2511 = vmatpush.bf16.msra.mxu0 0
      %2512 = vmatpush.bf16.msra.mxu0 0
      %2513 = vmatpush.bf16.msra.mxu0 0
      %2514 = vmatpush.bf16.msra.mxu0 0
      %2515 = vmatpush.bf16.msra.mxu0 0
      %2516 = vmatpush.bf16.msra.mxu0 0
      %2517 = vmatpush.bf16.msra.mxu0 0
      %2518 = vmatpush.bf16.msra.mxu0 %v2509
      %2519 = vmatmul.bf16.gmra.mxu0 %v2494
      %v2520 = vpop.f32.mrf.mxu0
      %v2521 = vadd.f32 0.0, %v2520
      %v2522 = vpop.f32.mrf.mxu0
      %v2523 = vadd.f32 0.0, %v2522
      %2524 = vmatmul.bf16.gmra.mxu0 %v2497
      %v2525 = vpop.f32.mrf.mxu0
      %v2526 = vadd.f32 0.0, %v2525
      %v2527 = vpop.f32.mrf.mxu0
      %v2528 = vadd.f32 0.0, %v2527
      %2529 = vmatmul.bf16.gmra.mxu0 %v2500
      %v2530 = vpop.f32.mrf.mxu0
      %v2531 = vadd.f32 0.0, %v2530
      %v2532 = vpop.f32.mrf.mxu0
      %v2533 = vadd.f32 0.0, %v2532
      %2534 = vmatmul.bf16.gmra.mxu0 %v2503
      %v2535 = vpop.f32.mrf.mxu0
      %v2536 = vadd.f32 0.0, %v2535
      %v2537 = vpop.f32.mrf.mxu0
      %v2538 = vadd.f32 0.0, %v2537
      %2539 = vmatmul.bf16.gmra.mxu0 %v2506
      %v2540 = vpop.f32.mrf.mxu0
      %v2541 = vadd.f32 0.0, %v2540
      %v2542 = vpop.f32.mrf.mxu0
      %v2543 = vadd.f32 0.0, %v2542
      %2544 = vdwg.mxu0
      %v2545 = vadd.f32 %v2307, %v2521
      %v2546 = vadd.f32 %v2308, %v2523
      %v2547 = vadd.f32 %v2309, %v2526
      %v2548 = vadd.f32 %v2310, %v2528
      %v2549 = vadd.f32 %v2311, %v2531
      %v2550 = vadd.f32 %v2312, %v2533
      %v2551 = vadd.f32 %v2313, %v2536
      %v2552 = vadd.f32 %v2314, %v2538
      %v2553 = vadd.f32 %v2315, %v2541
      %v2554 = vadd.f32 %v2316, %v2543
      %v2555 = vld [vmem:[%s2214] sm:$0xe]
      %v2556 = vld [vmem:[%s2214 + $0x8] sm:$0xe]
      %v2557 = vld [vmem:[%s2214 + $0x10] sm:$0xe]
      %v2558 = vld [vmem:[%s2214 + $0x18] sm:$0xe]
      %v2559 = vld [vmem:[%s2214 + $0x20] sm:$0xe]
      %v2560 = vld [vmem:[%s2214 + $0x28] sm:$0xe]
      %v2561 = vld [vmem:[%s2214 + $0x30] sm:$0xe]
      %v2562 = vld [vmem:[%s2214 + $0x38] sm:$0xe]
      %v2563 = vld [vmem:[%s2214 + $0x40] sm:$0xe]
      %v2564 = vld [vmem:[%s2214 + $0x48] sm:$0xe]
      %v2585 = vrot.slane %v2555, 5
      %v2586 = vrot.slane %v2585, 4
      %v2587 = vrot.slane %v2318, 5
      %v2588 = vsel %vm2095, %v2586, %v2587
      %v2589 = vrot.slane %v2556, 5
      %v2590 = vrot.slane %v2589, 4
      %v2591 = vrot.slane %v2320, 5
      %v2592 = vsel %vm2095, %v2590, %v2591
      %v2593 = vrot.slane %v2557, 5
      %v2594 = vrot.slane %v2593, 4
      %v2595 = vrot.slane %v2322, 5
      %v2596 = vsel %vm2095, %v2594, %v2595
      %v2597 = vrot.slane %v2558, 5
      %v2598 = vrot.slane %v2597, 4
      %v2599 = vrot.slane %v2324, 5
      %v2600 = vsel %vm2095, %v2598, %v2599
      %v2601 = vrot.slane %v2559, 5
      %v2602 = vrot.slane %v2601, 4
      %v2603 = vrot.slane %v2326, 5
      %v2604 = vsel %vm2095, %v2602, %v2603
      %v2605 = vrot.slane %v2560, 5
      %v2606 = vrot.slane %v2605, 4
      %v2607 = vrot.slane %v2328, 5
      %v2608 = vsel %vm2095, %v2606, %v2607
      %v2609 = vrot.slane %v2561, 5
      %v2610 = vrot.slane %v2609, 4
      %v2611 = vrot.slane %v2330, 5
      %v2612 = vsel %vm2095, %v2610, %v2611
      %v2613 = vrot.slane %v2562, 5
      %v2614 = vrot.slane %v2613, 4
      %v2615 = vrot.slane %v2332, 5
      %v2616 = vsel %vm2095, %v2614, %v2615
      %v2617 = vrot.slane %v2563, 5
      %v2618 = vrot.slane %v2617, 4
      %v2619 = vrot.slane %v2334, 5
      %v2620 = vsel %vm2095, %v2618, %v2619
      %v2621 = vrot.slane %v2564, 5
      %v2622 = vrot.slane %v2621, 4
      %v2623 = vrot.slane %v2336, 5
      %v2624 = vsel %vm2095, %v2622, %v2623
      %v2625 = vld [vmem:[%s1 + $0x8] sm:$0xc]
      %v2626 = vunpack.c.l.b16 %v2588
      %v2627 = vunpack.c.l.b16 %v2592
      %v2628 = vunpack.c.l.b16 %v2596
      %v2629 = vunpack.c.l.b16 %v2600
      %v2630 = vunpack.c.l.b16 %v2604
      %v2631 = vunpack.c.l.b16 %v2608
      %v2632 = vunpack.c.l.b16 %v2612
      %v2633 = vunpack.c.l.b16 %v2616
      %v2634 = vunpack.c.l.b16 %v2620
      %v2635 = vunpack.c.l.b16 %v2624
      %v2636 = vpack.c.b16 %v2627, %v2626
      %v2637 = vpack.c.b16 %v2629, %v2628
      %v2638 = vpack.c.b16 %v2631, %v2630
      %v2639 = vpack.c.b16 %v2633, %v2632
      %v2640 = vpack.c.b16 %v2635, %v2634
      %v2642 = vunpack.c.l.b16 %v2625
      %v2643 = vpack.c.b16 %v2642, %v2642
      %v2644 = vrot.slane %v2643, 2
      %v2646 = vsel %vm1932, %v2636, 0
      %v2649 = vsel %vm1932, %v2637, 0
      %v2652 = vsel %vm1932, %v2638, 0
      %v2655 = vsel %vm1932, %v2639, 0
      %v2658 = vsel %vm1932, %v2640, 0
      %v2661 = vsel %vm1948, %v2644, 0
      %2663 = vmatpush.bf16.msra.mxu0 0
      %2664 = vmatpush.bf16.msra.mxu0 0
      %2665 = vmatpush.bf16.msra.mxu0 0
      %2666 = vmatpush.bf16.msra.mxu0 0
      %2667 = vmatpush.bf16.msra.mxu0 0
      %2668 = vmatpush.bf16.msra.mxu0 0
      %2669 = vmatpush.bf16.msra.mxu0 0
      %2670 = vmatpush.bf16.msra.mxu0 %v2661
      %2671 = vmatmul.bf16.gmra.mxu0 %v2646
      %v2672 = vpop.f32.mrf.mxu0
      %v2673 = vadd.f32 0.0, %v2672
      %v2674 = vpop.f32.mrf.mxu0
      %v2675 = vadd.f32 0.0, %v2674
      %2676 = vmatmul.bf16.gmra.mxu0 %v2649
      %v2677 = vpop.f32.mrf.mxu0
      %v2678 = vadd.f32 0.0, %v2677
      %v2679 = vpop.f32.mrf.mxu0
      %v2680 = vadd.f32 0.0, %v2679
      %2681 = vmatmul.bf16.gmra.mxu0 %v2652
      %v2682 = vpop.f32.mrf.mxu0
      %v2683 = vadd.f32 0.0, %v2682
      %v2684 = vpop.f32.mrf.mxu0
      %v2685 = vadd.f32 0.0, %v2684
      %2686 = vmatmul.bf16.gmra.mxu0 %v2655
      %v2687 = vpop.f32.mrf.mxu0
      %v2688 = vadd.f32 0.0, %v2687
      %v2689 = vpop.f32.mrf.mxu0
      %v2690 = vadd.f32 0.0, %v2689
      %2691 = vmatmul.bf16.gmra.mxu0 %v2658
      %v2692 = vpop.f32.mrf.mxu0
      %v2693 = vadd.f32 0.0, %v2692
      %v2694 = vpop.f32.mrf.mxu0
      %v2695 = vadd.f32 0.0, %v2694
      %2696 = vdwg.mxu0
      %v2697 = vadd.f32 %v2545, %v2673
      %v2698 = vadd.f32 %v2546, %v2675
      %v2699 = vadd.f32 %v2547, %v2678
      %v2700 = vadd.f32 %v2548, %v2680
      %v2701 = vadd.f32 %v2549, %v2683
      %v2702 = vadd.f32 %v2550, %v2685
      %v2703 = vadd.f32 %v2551, %v2688
      %v2704 = vadd.f32 %v2552, %v2690
      %v2705 = vadd.f32 %v2553, %v2693
      %v2706 = vadd.f32 %v2554, %v2695
      %s2707 = scalar_lea.vmem [#allocation2], 16
      %v2708 = vld [vmem:[%s2707] sm:$0xf]
      %v2709 = vld [vmem:[%s2707 + $0x8] sm:$0xf]
      %v2710 = vld [vmem:[%s2707 + $0x10] sm:$0xf]
      %v2711 = vld [vmem:[%s2707 + $0x18] sm:$0xf]
      %v2712 = vld [vmem:[%s2707 + $0x20] sm:$0xf]
      %v2713 = vld [vmem:[%s2707 + $0x28] sm:$0xf]
      %v2714 = vld [vmem:[%s2707 + $0x30] sm:$0xf]
      %v2715 = vld [vmem:[%s2707 + $0x38] sm:$0xf]
      %v2716 = vld [vmem:[%s2707 + $0x40] sm:$0xf]
      %v2717 = vld [vmem:[%s2707 + $0x48] sm:$0xf]
      %v2718 = vld [vmem:[%s1 + $0xc] sm:$0x3]
      %v2729 = vunpack.c.l.b16 %v2708
      %v2730 = vunpack.c.l.b16 %v2709
      %v2731 = vunpack.c.l.b16 %v2710
      %v2732 = vunpack.c.l.b16 %v2711
      %v2733 = vunpack.c.l.b16 %v2712
      %v2734 = vunpack.c.l.b16 %v2713
      %v2735 = vunpack.c.l.b16 %v2714
      %v2736 = vunpack.c.l.b16 %v2715
      %v2737 = vunpack.c.l.b16 %v2716
      %v2738 = vunpack.c.l.b16 %v2717
      %v2739 = vpack.c.b16 %v2730, %v2729
      %v2740 = vpack.c.b16 %v2732, %v2731
      %v2741 = vpack.c.b16 %v2734, %v2733
      %v2742 = vpack.c.b16 %v2736, %v2735
      %v2743 = vpack.c.b16 %v2738, %v2737
      %v2745 = vsel %vm1932, %v2739, 0
      %v2748 = vsel %vm1932, %v2740, 0
      %v2751 = vsel %vm1932, %v2741, 0
      %v2754 = vsel %vm1932, %v2742, 0
      %v2757 = vsel %vm1932, %v2743, 0
      %v2760 = vsel %vm1948, %v2718, 0
      %2762 = vmatpush.bf16.msra.mxu0 0
      %2763 = vmatpush.bf16.msra.mxu0 0
      %2764 = vmatpush.bf16.msra.mxu0 0
      %2765 = vmatpush.bf16.msra.mxu0 0
      %2766 = vmatpush.bf16.msra.mxu0 0
      %2767 = vmatpush.bf16.msra.mxu0 0
      %2768 = vmatpush.bf16.msra.mxu0 0
      %2769 = vmatpush.bf16.msra.mxu0 %v2760
      %2770 = vmatmul.bf16.gmra.mxu0 %v2745
      %v2771 = vpop.f32.mrf.mxu0
      %v2772 = vadd.f32 0.0, %v2771
      %v2773 = vpop.f32.mrf.mxu0
      %v2774 = vadd.f32 0.0, %v2773
      %2775 = vmatmul.bf16.gmra.mxu0 %v2748
      %v2776 = vpop.f32.mrf.mxu0
      %v2777 = vadd.f32 0.0, %v2776
      %v2778 = vpop.f32.mrf.mxu0
      %v2779 = vadd.f32 0.0, %v2778
      %2780 = vmatmul.bf16.gmra.mxu0 %v2751
      %v2781 = vpop.f32.mrf.mxu0
      %v2782 = vadd.f32 0.0, %v2781
      %v2783 = vpop.f32.mrf.mxu0
      %v2784 = vadd.f32 0.0, %v2783
      %2785 = vmatmul.bf16.gmra.mxu0 %v2754
      %v2786 = vpop.f32.mrf.mxu0
      %v2787 = vadd.f32 0.0, %v2786
      %v2788 = vpop.f32.mrf.mxu0
      %v2789 = vadd.f32 0.0, %v2788
      %2790 = vmatmul.bf16.gmra.mxu0 %v2757
      %v2791 = vpop.f32.mrf.mxu0
      %v2792 = vadd.f32 0.0, %v2791
      %v2793 = vpop.f32.mrf.mxu0
      %v2794 = vadd.f32 0.0, %v2793
      %2795 = vdwg.mxu0
      %v2796 = vadd.f32 %v2697, %v2772
      %v2797 = vadd.f32 %v2698, %v2774
      %v2798 = vadd.f32 %v2699, %v2777
      %v2799 = vadd.f32 %v2700, %v2779
      %v2800 = vadd.f32 %v2701, %v2782
      %v2801 = vadd.f32 %v2702, %v2784
      %v2802 = vadd.f32 %v2703, %v2787
      %v2803 = vadd.f32 %v2704, %v2789
      %v2804 = vadd.f32 %v2705, %v2792
      %v2805 = vadd.f32 %v2706, %v2794
      %v2806 = vld [vmem:[%s2707] sm:$0xf]
      %v2807 = vld [vmem:[%s2707 + $0x4] sm:$0x1]
      %v2808 = vld [vmem:[%s2707 + $0x8] sm:$0xf]
      %v2809 = vld [vmem:[%s2707 + $0xc] sm:$0x1]
      %v2810 = vld [vmem:[%s2707 + $0x10] sm:$0xf]
      %v2811 = vld [vmem:[%s2707 + $0x14] sm:$0x1]
      %v2812 = vld [vmem:[%s2707 + $0x18] sm:$0xf]
      %v2813 = vld [vmem:[%s2707 + $0x1c] sm:$0x1]
      %v2814 = vld [vmem:[%s2707 + $0x20] sm:$0xf]
      %v2815 = vld [vmem:[%s2707 + $0x24] sm:$0x1]
      %v2816 = vld [vmem:[%s2707 + $0x28] sm:$0xf]
      %v2817 = vld [vmem:[%s2707 + $0x2c] sm:$0x1]
      %v2818 = vld [vmem:[%s2707 + $0x30] sm:$0xf]
      %v2819 = vld [vmem:[%s2707 + $0x34] sm:$0x1]
      %v2820 = vld [vmem:[%s2707 + $0x38] sm:$0xf]
      %v2821 = vld [vmem:[%s2707 + $0x3c] sm:$0x1]
      %v2822 = vld [vmem:[%s2707 + $0x40] sm:$0xf]
      %v2823 = vld [vmem:[%s2707 + $0x44] sm:$0x1]
      %v2824 = vld [vmem:[%s2707 + $0x48] sm:$0xf]
      %v2825 = vld [vmem:[%s2707 + $0x4c] sm:$0x1]
      %v2827 = vshrl.u32 %v2806, 16
      %v2829 = vrot.slane %v2827, 4
      %v2830 = vshll.u32 %v2806, 16
      %v2832 = vrot.slane %v2830, 5
      %v2833 = vor.u32 %v2829, %v2832
      %v2834 = vrot.slane %v2833, 4
      %v2836 = vshll.u32 %v2807, 16
      %v2838 = vrot.slane %v2836, 5
      %v2839 = vsel %vm1771, %v2834, %v2838
      %v2841 = vshrl.u32 %v2808, 16
      %v2843 = vrot.slane %v2841, 4
      %v2844 = vshll.u32 %v2808, 16
      %v2846 = vrot.slane %v2844, 5
      %v2847 = vor.u32 %v2843, %v2846
      %v2848 = vrot.slane %v2847, 4
      %v2850 = vshll.u32 %v2809, 16
      %v2852 = vrot.slane %v2850, 5
      %v2853 = vsel %vm1771, %v2848, %v2852
      %v2855 = vshrl.u32 %v2810, 16
      %v2857 = vrot.slane %v2855, 4
      %v2858 = vshll.u32 %v2810, 16
      %v2860 = vrot.slane %v2858, 5
      %v2861 = vor.u32 %v2857, %v2860
      %v2862 = vrot.slane %v2861, 4
      %v2864 = vshll.u32 %v2811, 16
      %v2866 = vrot.slane %v2864, 5
      %v2867 = vsel %vm1771, %v2862, %v2866
      %v2869 = vshrl.u32 %v2812, 16
      %v2871 = vrot.slane %v2869, 4
      %v2872 = vshll.u32 %v2812, 16
      %v2874 = vrot.slane %v2872, 5
      %v2875 = vor.u32 %v2871, %v2874
      %v2876 = vrot.slane %v2875, 4
      %v2878 = vshll.u32 %v2813, 16
      %v2880 = vrot.slane %v2878, 5
      %v2881 = vsel %vm1771, %v2876, %v2880
      %v2883 = vshrl.u32 %v2814, 16
      %v2885 = vrot.slane %v2883, 4
      %v2886 = vshll.u32 %v2814, 16
      %v2888 = vrot.slane %v2886, 5
      %v2889 = vor.u32 %v2885, %v2888
      %v2890 = vrot.slane %v2889, 4
      %v2892 = vshll.u32 %v2815, 16
      %v2894 = vrot.slane %v2892, 5
      %v2895 = vsel %vm1771, %v2890, %v2894
      %v2897 = vshrl.u32 %v2816, 16
      %v2899 = vrot.slane %v2897, 4
      %v2900 = vshll.u32 %v2816, 16
      %v2902 = vrot.slane %v2900, 5
      %v2903 = vor.u32 %v2899, %v2902
      %v2904 = vrot.slane %v2903, 4
      %v2906 = vshll.u32 %v2817, 16
      %v2908 = vrot.slane %v2906, 5
      %v2909 = vsel %vm1771, %v2904, %v2908
      %v2911 = vshrl.u32 %v2818, 16
      %v2913 = vrot.slane %v2911, 4
      %v2914 = vshll.u32 %v2818, 16
      %v2916 = vrot.slane %v2914, 5
      %v2917 = vor.u32 %v2913, %v2916
      %v2918 = vrot.slane %v2917, 4
      %v2920 = vshll.u32 %v2819, 16
      %v2922 = vrot.slane %v2920, 5
      %v2923 = vsel %vm1771, %v2918, %v2922
      %v2925 = vshrl.u32 %v2820, 16
      %v2927 = vrot.slane %v2925, 4
      %v2928 = vshll.u32 %v2820, 16
      %v2930 = vrot.slane %v2928, 5
      %v2931 = vor.u32 %v2927, %v2930
      %v2932 = vrot.slane %v2931, 4
      %v2934 = vshll.u32 %v2821, 16
      %v2936 = vrot.slane %v2934, 5
      %v2937 = vsel %vm1771, %v2932, %v2936
      %v2939 = vshrl.u32 %v2822, 16
      %v2941 = vrot.slane %v2939, 4
      %v2942 = vshll.u32 %v2822, 16
      %v2944 = vrot.slane %v2942, 5
      %v2945 = vor.u32 %v2941, %v2944
      %v2946 = vrot.slane %v2945, 4
      %v2948 = vshll.u32 %v2823, 16
      %v2950 = vrot.slane %v2948, 5
      %v2951 = vsel %vm1771, %v2946, %v2950
      %v2953 = vshrl.u32 %v2824, 16
      %v2955 = vrot.slane %v2953, 4
      %v2956 = vshll.u32 %v2824, 16
      %v2958 = vrot.slane %v2956, 5
      %v2959 = vor.u32 %v2955, %v2958
      %v2960 = vrot.slane %v2959, 4
      %v2962 = vshll.u32 %v2825, 16
      %v2964 = vrot.slane %v2962, 5
      %v2965 = vsel %vm1771, %v2960, %v2964
      %v2966 = vld [vmem:[%s1 + $0xc] sm:$0xc]
      %v2967 = vunpack.c.l.b16 %v2839
      %v2968 = vunpack.c.l.b16 %v2853
      %v2969 = vunpack.c.l.b16 %v2867
      %v2970 = vunpack.c.l.b16 %v2881
      %v2971 = vunpack.c.l.b16 %v2895
      %v2972 = vunpack.c.l.b16 %v2909
      %v2973 = vunpack.c.l.b16 %v2923
      %v2974 = vunpack.c.l.b16 %v2937
      %v2975 = vunpack.c.l.b16 %v2951
      %v2976 = vunpack.c.l.b16 %v2965
      %v2977 = vpack.c.b16 %v2968, %v2967
      %v2978 = vpack.c.b16 %v2970, %v2969
      %v2979 = vpack.c.b16 %v2972, %v2971
      %v2980 = vpack.c.b16 %v2974, %v2973
      %v2981 = vpack.c.b16 %v2976, %v2975
      %v2983 = vunpack.c.l.b16 %v2966
      %v2984 = vpack.c.b16 %v2983, %v2983
      %v2985 = vrot.slane %v2984, 2
      %v2987 = vsel %vm1932, %v2977, 0
      %v2990 = vsel %vm1932, %v2978, 0
      %v2993 = vsel %vm1932, %v2979, 0
      %v2996 = vsel %vm1932, %v2980, 0
      %v2999 = vsel %vm1932, %v2981, 0
      %v3002 = vsel %vm1948, %v2985, 0
      %3004 = vmatpush.bf16.msra.mxu0 0
      %3005 = vmatpush.bf16.msra.mxu0 0
      %3006 = vmatpush.bf16.msra.mxu0 0
      %3007 = vmatpush.bf16.msra.mxu0 0
      %3008 = vmatpush.bf16.msra.mxu0 0
      %3009 = vmatpush.bf16.msra.mxu0 0
      %3010 = vmatpush.bf16.msra.mxu0 0
      %3011 = vmatpush.bf16.msra.mxu0 %v3002
      %3012 = vmatmul.bf16.gmra.mxu0 %v2987
      %v3013 = vpop.f32.mrf.mxu0
      %v3014 = vadd.f32 0.0, %v3013
      %v3015 = vpop.f32.mrf.mxu0
      %v3016 = vadd.f32 0.0, %v3015
      %3017 = vmatmul.bf16.gmra.mxu0 %v2990
      %v3018 = vpop.f32.mrf.mxu0
      %v3019 = vadd.f32 0.0, %v3018
      %v3020 = vpop.f32.mrf.mxu0
      %v3021 = vadd.f32 0.0, %v3020
      %3022 = vmatmul.bf16.gmra.mxu0 %v2993
      %v3023 = vpop.f32.mrf.mxu0
      %v3024 = vadd.f32 0.0, %v3023
      %v3025 = vpop.f32.mrf.mxu0
      %v3026 = vadd.f32 0.0, %v3025
      %3027 = vmatmul.bf16.gmra.mxu0 %v2996
      %v3028 = vpop.f32.mrf.mxu0
      %v3029 = vadd.f32 0.0, %v3028
      %v3030 = vpop.f32.mrf.mxu0
      %v3031 = vadd.f32 0.0, %v3030
      %3032 = vmatmul.bf16.gmra.mxu0 %v2999
      %v3033 = vpop.f32.mrf.mxu0
      %v3034 = vadd.f32 0.0, %v3033
      %v3035 = vpop.f32.mrf.mxu0
      %v3036 = vadd.f32 0.0, %v3035
      %3037 = vdwg.mxu0
      %v3038 = vadd.f32 %v2796, %v3014
      %v3039 = vadd.f32 %v2797, %v3016
      %v3040 = vadd.f32 %v2798, %v3019
      %v3041 = vadd.f32 %v2799, %v3021
      %v3042 = vadd.f32 %v2800, %v3024
      %v3043 = vadd.f32 %v2801, %v3026
      %v3044 = vadd.f32 %v2802, %v3029
      %v3045 = vadd.f32 %v2803, %v3031
      %v3046 = vadd.f32 %v2804, %v3034
      %v3047 = vadd.f32 %v2805, %v3036
      %v3048 = vld [vmem:[%s2707] sm:$0xe]
      %v3049 = vld [vmem:[%s2707 + $0x8] sm:$0xe]
      %v3050 = vld [vmem:[%s2707 + $0x10] sm:$0xe]
      %v3051 = vld [vmem:[%s2707 + $0x18] sm:$0xe]
      %v3052 = vld [vmem:[%s2707 + $0x20] sm:$0xe]
      %v3053 = vld [vmem:[%s2707 + $0x28] sm:$0xe]
      %v3054 = vld [vmem:[%s2707 + $0x30] sm:$0xe]
      %v3055 = vld [vmem:[%s2707 + $0x38] sm:$0xe]
      %v3056 = vld [vmem:[%s2707 + $0x40] sm:$0xe]
      %v3057 = vld [vmem:[%s2707 + $0x48] sm:$0xe]
      %v3078 = vrot.slane %v3048, 5
      %v3079 = vrot.slane %v3078, 4
      %v3080 = vrot.slane %v2807, 5
      %v3081 = vsel %vm2095, %v3079, %v3080
      %v3082 = vrot.slane %v3049, 5
      %v3083 = vrot.slane %v3082, 4
      %v3084 = vrot.slane %v2809, 5
      %v3085 = vsel %vm2095, %v3083, %v3084
      %v3086 = vrot.slane %v3050, 5
      %v3087 = vrot.slane %v3086, 4
      %v3088 = vrot.slane %v2811, 5
      %v3089 = vsel %vm2095, %v3087, %v3088
      %v3090 = vrot.slane %v3051, 5
      %v3091 = vrot.slane %v3090, 4
      %v3092 = vrot.slane %v2813, 5
      %v3093 = vsel %vm2095, %v3091, %v3092
      %v3094 = vrot.slane %v3052, 5
      %v3095 = vrot.slane %v3094, 4
      %v3096 = vrot.slane %v2815, 5
      %v3097 = vsel %vm2095, %v3095, %v3096
      %v3098 = vrot.slane %v3053, 5
      %v3099 = vrot.slane %v3098, 4
      %v3100 = vrot.slane %v2817, 5
      %v3101 = vsel %vm2095, %v3099, %v3100
      %v3102 = vrot.slane %v3054, 5
      %v3103 = vrot.slane %v3102, 4
      %v3104 = vrot.slane %v2819, 5
      %v3105 = vsel %vm2095, %v3103, %v3104
      %v3106 = vrot.slane %v3055, 5
      %v3107 = vrot.slane %v3106, 4
      %v3108 = vrot.slane %v2821, 5
      %v3109 = vsel %vm2095, %v3107, %v3108
      %v3110 = vrot.slane %v3056, 5
      %v3111 = vrot.slane %v3110, 4
      %v3112 = vrot.slane %v2823, 5
      %v3113 = vsel %vm2095, %v3111, %v3112
      %v3114 = vrot.slane %v3057, 5
      %v3115 = vrot.slane %v3114, 4
      %v3116 = vrot.slane %v2825, 5
      %v3117 = vsel %vm2095, %v3115, %v3116
      %v3118 = vld [vmem:[%s1 + $0x10] sm:$0x3]
      %v3119 = vunpack.c.l.b16 %v3081
      %v3120 = vunpack.c.l.b16 %v3085
      %v3121 = vunpack.c.l.b16 %v3089
      %v3122 = vunpack.c.l.b16 %v3093
      %v3123 = vunpack.c.l.b16 %v3097
      %v3124 = vunpack.c.l.b16 %v3101
      %v3125 = vunpack.c.l.b16 %v3105
      %v3126 = vunpack.c.l.b16 %v3109
      %v3127 = vunpack.c.l.b16 %v3113
      %v3128 = vunpack.c.l.b16 %v3117
      %v3129 = vpack.c.b16 %v3120, %v3119
      %v3130 = vpack.c.b16 %v3122, %v3121
      %v3131 = vpack.c.b16 %v3124, %v3123
      %v3132 = vpack.c.b16 %v3126, %v3125
      %v3133 = vpack.c.b16 %v3128, %v3127
      %v3135 = vsel %vm1932, %v3129, 0
      %v3138 = vsel %vm1932, %v3130, 0
      %v3141 = vsel %vm1932, %v3131, 0
      %v3144 = vsel %vm1932, %v3132, 0
      %v3147 = vsel %vm1932, %v3133, 0
      %v3150 = vsel %vm1948, %v3118, 0
      %3152 = vmatpush.bf16.msra.mxu0 0
      %3153 = vmatpush.bf16.msra.mxu0 0
      %3154 = vmatpush.bf16.msra.mxu0 0
      %3155 = vmatpush.bf16.msra.mxu0 0
      %3156 = vmatpush.bf16.msra.mxu0 0
      %3157 = vmatpush.bf16.msra.mxu0 0
      %3158 = vmatpush.bf16.msra.mxu0 0
      %3159 = vmatpush.bf16.msra.mxu0 %v3150
      %3160 = vmatmul.bf16.gmra.mxu0 %v3135
      %v3161 = vpop.f32.mrf.mxu0
      %v3162 = vadd.f32 0.0, %v3161
      %v3163 = vpop.f32.mrf.mxu0
      %v3164 = vadd.f32 0.0, %v3163
      %3165 = vmatmul.bf16.gmra.mxu0 %v3138
      %v3166 = vpop.f32.mrf.mxu0
      %v3167 = vadd.f32 0.0, %v3166
      %v3168 = vpop.f32.mrf.mxu0
      %v3169 = vadd.f32 0.0, %v3168
      %3170 = vmatmul.bf16.gmra.mxu0 %v3141
      %v3171 = vpop.f32.mrf.mxu0
      %v3172 = vadd.f32 0.0, %v3171
      %v3173 = vpop.f32.mrf.mxu0
      %v3174 = vadd.f32 0.0, %v3173
      %3175 = vmatmul.bf16.gmra.mxu0 %v3144
      %v3176 = vpop.f32.mrf.mxu0
      %v3177 = vadd.f32 0.0, %v3176
      %v3178 = vpop.f32.mrf.mxu0
      %v3179 = vadd.f32 0.0, %v3178
      %3180 = vmatmul.bf16.gmra.mxu0 %v3147
      %v3181 = vpop.f32.mrf.mxu0
      %v3182 = vadd.f32 0.0, %v3181
      %v3183 = vpop.f32.mrf.mxu0
      %v3184 = vadd.f32 0.0, %v3183
      %3185 = vdwg.mxu0
      %v3186 = vadd.f32 %v3038, %v3162
      %v3187 = vadd.f32 %v3039, %v3164
      %v3188 = vadd.f32 %v3040, %v3167
      %v3189 = vadd.f32 %v3041, %v3169
      %v3190 = vadd.f32 %v3042, %v3172
      %v3191 = vadd.f32 %v3043, %v3174
      %v3192 = vadd.f32 %v3044, %v3177
      %v3193 = vadd.f32 %v3045, %v3179
      %v3194 = vadd.f32 %v3046, %v3182
      %v3195 = vadd.f32 %v3047, %v3184
      %v3196 = vld [vmem:[%s2] sm:$0x1]
      %v3198 = vperm.slane %v3196, 0
      %v3200 = vadd.f32 %v3186, %v3198
      %v3201 = vadd.f32 %v3187, %v3198
      %v3202 = vadd.f32 %v3188, %v3198
      %v3203 = vadd.f32 %v3189, %v3198
      %v3204 = vadd.f32 %v3190, %v3198
      %v3205 = vadd.f32 %v3191, %v3198
      %v3206 = vadd.f32 %v3192, %v3198
      %v3207 = vadd.f32 %v3193, %v3198
      %v3208 = vadd.f32 %v3194, %v3198
      %v3209 = vadd.f32 %v3195, %v3198
      %v3210 = vmax.f32 %v3200, 0.0
      %v3211 = vmax.f32 %v3201, 0.0
      %v3212 = vmax.f32 %v3202, 0.0
      %v3213 = vmax.f32 %v3203, 0.0
      %v3214 = vmax.f32 %v3204, 0.0
      %v3215 = vmax.f32 %v3205, 0.0
      %v3216 = vmax.f32 %v3206, 0.0
      %v3217 = vmax.f32 %v3207, 0.0
      %v3218 = vmax.f32 %v3208, 0.0
      %v3219 = vmax.f32 %v3209, 0.0
      %vm3220 = vcmask 57344
      %vm3221 = vmand %vm3220, %vm1339
      %v3222 = vld [vmem:[#allocation3] sm:$0x1]
      %v3223 = vsel %vm3221, 0, %v3222
      %3224 = vst [vmem:[#allocation3] sm:$0x1] %v3223
      %v3225 = vld [vmem:[#allocation3 + $0x8] sm:$0x1]
      %v3226 = vsel %vm3221, 0, %v3225
      %3227 = vst [vmem:[#allocation3 + $0x8] sm:$0x1] %v3226
      %v3228 = vld [vmem:[#allocation3 + $0x10] sm:$0x1]
      %v3229 = vsel %vm3221, 0, %v3228
      %3230 = vst [vmem:[#allocation3 + $0x10] sm:$0x1] %v3229
      %v3231 = vld [vmem:[#allocation3 + $0x18] sm:$0x1]
      %v3232 = vsel %vm3221, 0, %v3231
      %3233 = vst [vmem:[#allocation3 + $0x18] sm:$0x1] %v3232
      %v3234 = vld [vmem:[#allocation3 + $0x20] sm:$0x1]
      %v3235 = vsel %vm3221, 0, %v3234
      %3236 = vst [vmem:[#allocation3 + $0x20] sm:$0x1] %v3235
      %v3237 = vld [vmem:[#allocation3 + $0x28] sm:$0x1]
      %v3238 = vsel %vm3221, 0, %v3237
      %3239 = vst [vmem:[#allocation3 + $0x28] sm:$0x1] %v3238
      %v3240 = vld [vmem:[#allocation3 + $0x30] sm:$0x1]
      %v3241 = vsel %vm3221, 0, %v3240
      %3242 = vst [vmem:[#allocation3 + $0x30] sm:$0x1] %v3241
      %v3243 = vld [vmem:[#allocation3 + $0x38] sm:$0x1]
      %v3244 = vsel %vm3221, 0, %v3243
      %3245 = vst [vmem:[#allocation3 + $0x38] sm:$0x1] %v3244
      %v3246 = vld [vmem:[#allocation3 + $0x40] sm:$0x1]
      %v3247 = vsel %vm3221, 0, %v3246
      %3248 = vst [vmem:[#allocation3 + $0x40] sm:$0x1] %v3247
      %v3249 = vld [vmem:[#allocation3 + $0x48] sm:$0x1]
      %v3250 = vsel %vm3221, 0, %v3249
      %3251 = vst [vmem:[#allocation3 + $0x48] sm:$0x1] %v3250
      %vm3252 = vmand %vm3220, %vm1377
      %v3253 = vld [vmem:[#allocation3 + $0x4] sm:$0x1]
      %v3254 = vsel %vm3252, 0, %v3253
      %3255 = vst [vmem:[#allocation3 + $0x4] sm:$0x1] %v3254
      %v3256 = vld [vmem:[#allocation3 + $0xc] sm:$0x1]
      %v3257 = vsel %vm3252, 0, %v3256
      %3258 = vst [vmem:[#allocation3 + $0xc] sm:$0x1] %v3257
      %v3259 = vld [vmem:[#allocation3 + $0x14] sm:$0x1]
      %v3260 = vsel %vm3252, 0, %v3259
      %3261 = vst [vmem:[#allocation3 + $0x14] sm:$0x1] %v3260
      %v3262 = vld [vmem:[#allocation3 + $0x1c] sm:$0x1]
      %v3263 = vsel %vm3252, 0, %v3262
      %3264 = vst [vmem:[#allocation3 + $0x1c] sm:$0x1] %v3263
      %v3265 = vld [vmem:[#allocation3 + $0x24] sm:$0x1]
      %v3266 = vsel %vm3252, 0, %v3265
      %3267 = vst [vmem:[#allocation3 + $0x24] sm:$0x1] %v3266
      %v3268 = vld [vmem:[#allocation3 + $0x2c] sm:$0x1]
      %v3269 = vsel %vm3252, 0, %v3268
      %3270 = vst [vmem:[#allocation3 + $0x2c] sm:$0x1] %v3269
      %v3271 = vld [vmem:[#allocation3 + $0x34] sm:$0x1]
      %v3272 = vsel %vm3252, 0, %v3271
      %3273 = vst [vmem:[#allocation3 + $0x34] sm:$0x1] %v3272
      %v3274 = vld [vmem:[#allocation3 + $0x3c] sm:$0x1]
      %v3275 = vsel %vm3252, 0, %v3274
      %3276 = vst [vmem:[#allocation3 + $0x3c] sm:$0x1] %v3275
      %v3277 = vld [vmem:[#allocation3 + $0x44] sm:$0x1]
      %v3278 = vsel %vm3252, 0, %v3277
      %3279 = vst [vmem:[#allocation3 + $0x44] sm:$0x1] %v3278
      %v3280 = vld [vmem:[#allocation3 + $0x4c] sm:$0x1]
      %v3281 = vsel %vm3252, 0, %v3280
      %3282 = vst [vmem:[#allocation3 + $0x4c] sm:$0x1] %v3281
      %v3283 = vpack.c.bf16 %v3210, %v3210
      %v3284 = vpack.c.bf16 %v3211, %v3211
      %v3285 = vpack.c.bf16 %v3212, %v3212
      %v3286 = vpack.c.bf16 %v3213, %v3213
      %v3287 = vpack.c.bf16 %v3214, %v3214
      %v3288 = vpack.c.bf16 %v3215, %v3215
      %v3289 = vpack.c.bf16 %v3216, %v3216
      %v3290 = vpack.c.bf16 %v3217, %v3217
      %v3291 = vpack.c.bf16 %v3218, %v3218
      %v3292 = vpack.c.bf16 %v3219, %v3219
      %v3294 = vshrl.u32 %v3283, 16
      %v3296 = vrot.slane %v3294, 7
      %v3297 = vshll.u32 %v3283, 16
      %v3299 = vor.u32 %v3296, %v3297
      %v3300 = vrot.slane %v3296, 4
      %v3302 = vshrl.u32 %v3284, 16
      %v3304 = vrot.slane %v3302, 7
      %v3305 = vshll.u32 %v3284, 16
      %v3307 = vor.u32 %v3304, %v3305
      %v3308 = vrot.slane %v3304, 4
      %v3310 = vshrl.u32 %v3285, 16
      %v3312 = vrot.slane %v3310, 7
      %v3313 = vshll.u32 %v3285, 16
      %v3315 = vor.u32 %v3312, %v3313
      %v3316 = vrot.slane %v3312, 4
      %v3318 = vshrl.u32 %v3286, 16
      %v3320 = vrot.slane %v3318, 7
      %v3321 = vshll.u32 %v3286, 16
      %v3323 = vor.u32 %v3320, %v3321
      %v3324 = vrot.slane %v3320, 4
      %v3326 = vshrl.u32 %v3287, 16
      %v3328 = vrot.slane %v3326, 7
      %v3329 = vshll.u32 %v3287, 16
      %v3331 = vor.u32 %v3328, %v3329
      %v3332 = vrot.slane %v3328, 4
      %v3334 = vshrl.u32 %v3288, 16
      %v3336 = vrot.slane %v3334, 7
      %v3337 = vshll.u32 %v3288, 16
      %v3339 = vor.u32 %v3336, %v3337
      %v3340 = vrot.slane %v3336, 4
      %v3342 = vshrl.u32 %v3289, 16
      %v3344 = vrot.slane %v3342, 7
      %v3345 = vshll.u32 %v3289, 16
      %v3347 = vor.u32 %v3344, %v3345
      %v3348 = vrot.slane %v3344, 4
      %v3350 = vshrl.u32 %v3290, 16
      %v3352 = vrot.slane %v3350, 7
      %v3353 = vshll.u32 %v3290, 16
      %v3355 = vor.u32 %v3352, %v3353
      %v3356 = vrot.slane %v3352, 4
      %v3358 = vshrl.u32 %v3291, 16
      %v3360 = vrot.slane %v3358, 7
      %v3361 = vshll.u32 %v3291, 16
      %v3363 = vor.u32 %v3360, %v3361
      %v3364 = vrot.slane %v3360, 4
      %v3366 = vshrl.u32 %v3292, 16
      %v3368 = vrot.slane %v3366, 7
      %v3369 = vshll.u32 %v3292, 16
      %v3371 = vor.u32 %v3368, %v3369
      %v3372 = vrot.slane %v3368, 4
      %vm3393 = vcmask 60416
      %vm3394 = vmand %vm3393, %vm1377
      %v3395 = vld [vmem:[#allocation3] sm:$0xf]
      %v3396 = vsel %vm3394, %v3299, %v3395
      %3397 = vst [vmem:[#allocation3] sm:$0xf] %v3396
      %v3398 = vld [vmem:[#allocation3 + $0x4] sm:$0x1]
      %v3399 = vsel %vm3221, %v3300, %v3398
      %3400 = vst [vmem:[#allocation3 + $0x4] sm:$0x1] %v3399
      %v3401 = vld [vmem:[#allocation3 + $0x8] sm:$0xf]
      %v3402 = vsel %vm3394, %v3307, %v3401
      %3403 = vst [vmem:[#allocation3 + $0x8] sm:$0xf] %v3402
      %v3404 = vld [vmem:[#allocation3 + $0xc] sm:$0x1]
      %v3405 = vsel %vm3221, %v3308, %v3404
      %3406 = vst [vmem:[#allocation3 + $0xc] sm:$0x1] %v3405
      %v3407 = vld [vmem:[#allocation3 + $0x10] sm:$0xf]
      %v3408 = vsel %vm3394, %v3315, %v3407
      %3409 = vst [vmem:[#allocation3 + $0x10] sm:$0xf] %v3408
      %v3410 = vld [vmem:[#allocation3 + $0x14] sm:$0x1]
      %v3411 = vsel %vm3221, %v3316, %v3410
      %3412 = vst [vmem:[#allocation3 + $0x14] sm:$0x1] %v3411
      %v3413 = vld [vmem:[#allocation3 + $0x18] sm:$0xf]
      %v3414 = vsel %vm3394, %v3323, %v3413
      %3415 = vst [vmem:[#allocation3 + $0x18] sm:$0xf] %v3414
      %v3416 = vld [vmem:[#allocation3 + $0x1c] sm:$0x1]
      %v3417 = vsel %vm3221, %v3324, %v3416
      %3418 = vst [vmem:[#allocation3 + $0x1c] sm:$0x1] %v3417
      %v3419 = vld [vmem:[#allocation3 + $0x20] sm:$0xf]
      %v3420 = vsel %vm3394, %v3331, %v3419
      %3421 = vst [vmem:[#allocation3 + $0x20] sm:$0xf] %v3420
      %v3422 = vld [vmem:[#allocation3 + $0x24] sm:$0x1]
      %v3423 = vsel %vm3221, %v3332, %v3422
      %3424 = vst [vmem:[#allocation3 + $0x24] sm:$0x1] %v3423
      %v3425 = vld [vmem:[#allocation3 + $0x28] sm:$0xf]
      %v3426 = vsel %vm3394, %v3339, %v3425
      %3427 = vst [vmem:[#allocation3 + $0x28] sm:$0xf] %v3426
      %v3428 = vld [vmem:[#allocation3 + $0x2c] sm:$0x1]
      %v3429 = vsel %vm3221, %v3340, %v3428
      %3430 = vst [vmem:[#allocation3 + $0x2c] sm:$0x1] %v3429
      %v3431 = vld [vmem:[#allocation3 + $0x30] sm:$0xf]
      %v3432 = vsel %vm3394, %v3347, %v3431
      %3433 = vst [vmem:[#allocation3 + $0x30] sm:$0xf] %v3432
      %v3434 = vld [vmem:[#allocation3 + $0x34] sm:$0x1]
      %v3435 = vsel %vm3221, %v3348, %v3434
      %3436 = vst [vmem:[#allocation3 + $0x34] sm:$0x1] %v3435
      %v3437 = vld [vmem:[#allocation3 + $0x38] sm:$0xf]
      %v3438 = vsel %vm3394, %v3355, %v3437
      %3439 = vst [vmem:[#allocation3 + $0x38] sm:$0xf] %v3438
      %v3440 = vld [vmem:[#allocation3 + $0x3c] sm:$0x1]
      %v3441 = vsel %vm3221, %v3356, %v3440
      %3442 = vst [vmem:[#allocation3 + $0x3c] sm:$0x1] %v3441
      %v3443 = vld [vmem:[#allocation3 + $0x40] sm:$0xf]
      %v3444 = vsel %vm3394, %v3363, %v3443
      %3445 = vst [vmem:[#allocation3 + $0x40] sm:$0xf] %v3444
      %v3446 = vld [vmem:[#allocation3 + $0x44] sm:$0x1]
      %v3447 = vsel %vm3221, %v3364, %v3446
      %3448 = vst [vmem:[#allocation3 + $0x44] sm:$0x1] %v3447
      %v3449 = vld [vmem:[#allocation3 + $0x48] sm:$0xf]
      %v3450 = vsel %vm3394, %v3371, %v3449
      %3451 = vst [vmem:[#allocation3 + $0x48] sm:$0xf] %v3450
      %v3452 = vld [vmem:[#allocation3 + $0x4c] sm:$0x1]
      %v3453 = vsel %vm3221, %v3372, %v3452
      %3454 = vst [vmem:[#allocation3 + $0x4c] sm:$0x1] %v3453
      %p3455 = scmp.eq.s32.totalorder %s21, 0
      // Predicated region
      $region41: #{tpu_custom_call.1} parent=39 // pred_check
        %p3456 = pneg %p3455
      $region42: #{tpu_custom_call.1} parent=39 // pred_check_branch
        %3458 = sbr.rel (%p3456) target = $region44
      $region43: #{tpu_custom_call.1} parent=39 // pred_region
        %vm3459 = vcmask 60416
        %3460 = vst.msk [vmem:[#allocation3] sm:$0xf] %vm3459, 0
        %vm3461 = vcmask 57344
        %3462 = vst.msk [vmem:[#allocation3 + $0x4] sm:$0x1] %vm3461, 0
        %s3463 = scalar_lea.vmem [#allocation3], 72
        %3464 = vst.msk [vmem:[%s3463] sm:$0xf] %vm3459, 0
        %3465 = vst.msk [vmem:[%s3463 + $0x4] sm:$0x1] %vm3461, 0
      $region44: #{tpu_custom_call.1} parent=39 // pred_fallthru
        _
      %v3466 = vld [vmem:[#allocation3] sm:$0xf]
      %v3467 = vld [vmem:[#allocation3 + $0x8] sm:$0xf]
      %v3468 = vld [vmem:[#allocation3 + $0x10] sm:$0xf]
      %v3469 = vld [vmem:[#allocation3 + $0x18] sm:$0xf]
      %v3470 = vld [vmem:[#allocation3 + $0x20] sm:$0xf]
      %v3471 = vld [vmem:[#allocation3 + $0x28] sm:$0xf]
      %v3472 = vld [vmem:[#allocation3 + $0x30] sm:$0xf]
      %v3473 = vld [vmem:[#allocation3 + $0x38] sm:$0xf]
      %v3474 = vld [vmem:[%s3] sm:$0xf]
      %v3475 = vld [vmem:[#allocation3 + $0x4] sm:$0x1]
      %v3476 = vld [vmem:[#allocation3 + $0xc] sm:$0x1]
      %v3477 = vld [vmem:[#allocation3 + $0x14] sm:$0x1]
      %v3478 = vld [vmem:[#allocation3 + $0x1c] sm:$0x1]
      %v3479 = vld [vmem:[#allocation3 + $0x24] sm:$0x1]
      %v3480 = vld [vmem:[#allocation3 + $0x2c] sm:$0x1]
      %v3481 = vld [vmem:[#allocation3 + $0x34] sm:$0x1]
      %v3482 = vld [vmem:[#allocation3 + $0x3c] sm:$0x1]
      %v3484 = vshrl.u32 %v3466, 16
      %v3486 = vrot.slane %v3484, 4
      %v3487 = vshll.u32 %v3466, 16
      %v3489 = vrot.slane %v3487, 5
      %v3490 = vor.u32 %v3486, %v3489
      %v3491 = vrot.slane %v3490, 4
      %v3493 = vshll.u32 %v3475, 16
      %v3495 = vrot.slane %v3493, 5
      %v3496 = vsel %vm1771, %v3491, %v3495
      %v3498 = vshrl.u32 %v3467, 16
      %v3500 = vrot.slane %v3498, 4
      %v3501 = vshll.u32 %v3467, 16
      %v3503 = vrot.slane %v3501, 5
      %v3504 = vor.u32 %v3500, %v3503
      %v3505 = vrot.slane %v3504, 4
      %v3507 = vshll.u32 %v3476, 16
      %v3509 = vrot.slane %v3507, 5
      %v3510 = vsel %vm1771, %v3505, %v3509
      %v3512 = vshrl.u32 %v3468, 16
      %v3514 = vrot.slane %v3512, 4
      %v3515 = vshll.u32 %v3468, 16
      %v3517 = vrot.slane %v3515, 5
      %v3518 = vor.u32 %v3514, %v3517
      %v3519 = vrot.slane %v3518, 4
      %v3521 = vshll.u32 %v3477, 16
      %v3523 = vrot.slane %v3521, 5
      %v3524 = vsel %vm1771, %v3519, %v3523
      %v3526 = vshrl.u32 %v3469, 16
      %v3528 = vrot.slane %v3526, 4
      %v3529 = vshll.u32 %v3469, 16
      %v3531 = vrot.slane %v3529, 5
      %v3532 = vor.u32 %v3528, %v3531
      %v3533 = vrot.slane %v3532, 4
      %v3535 = vshll.u32 %v3478, 16
      %v3537 = vrot.slane %v3535, 5
      %v3538 = vsel %vm1771, %v3533, %v3537
      %v3540 = vshrl.u32 %v3470, 16
      %v3542 = vrot.slane %v3540, 4
      %v3543 = vshll.u32 %v3470, 16
      %v3545 = vrot.slane %v3543, 5
      %v3546 = vor.u32 %v3542, %v3545
      %v3547 = vrot.slane %v3546, 4
      %v3549 = vshll.u32 %v3479, 16
      %v3551 = vrot.slane %v3549, 5
      %v3552 = vsel %vm1771, %v3547, %v3551
      %v3554 = vshrl.u32 %v3471, 16
      %v3556 = vrot.slane %v3554, 4
      %v3557 = vshll.u32 %v3471, 16
      %v3559 = vrot.slane %v3557, 5
      %v3560 = vor.u32 %v3556, %v3559
      %v3561 = vrot.slane %v3560, 4
      %v3563 = vshll.u32 %v3480, 16
      %v3565 = vrot.slane %v3563, 5
      %v3566 = vsel %vm1771, %v3561, %v3565
      %v3568 = vshrl.u32 %v3472, 16
      %v3570 = vrot.slane %v3568, 4
      %v3571 = vshll.u32 %v3472, 16
      %v3573 = vrot.slane %v3571, 5
      %v3574 = vor.u32 %v3570, %v3573
      %v3575 = vrot.slane %v3574, 4
      %v3577 = vshll.u32 %v3481, 16
      %v3579 = vrot.slane %v3577, 5
      %v3580 = vsel %vm1771, %v3575, %v3579
      %v3582 = vshrl.u32 %v3473, 16
      %v3584 = vrot.slane %v3582, 4
      %v3585 = vshll.u32 %v3473, 16
      %v3587 = vrot.slane %v3585, 5
      %v3588 = vor.u32 %v3584, %v3587
      %v3589 = vrot.slane %v3588, 4
      %v3591 = vshll.u32 %v3482, 16
      %v3593 = vrot.slane %v3591, 5
      %v3594 = vsel %vm1771, %v3589, %v3593
      %v3595 = vld [vmem:[%s3 + $0x4] sm:$0xf]
      %v3596 = vunpack.c.l.b16 %v3496
      %v3597 = vunpack.c.l.b16 %v3510
      %v3598 = vunpack.c.l.b16 %v3524
      %v3599 = vunpack.c.l.b16 %v3538
      %v3600 = vunpack.c.l.b16 %v3552
      %v3601 = vunpack.c.l.b16 %v3566
      %v3602 = vunpack.c.l.b16 %v3580
      %v3603 = vunpack.c.l.b16 %v3594
      %v3604 = vpack.c.b16 %v3597, %v3596
      %v3605 = vpack.c.b16 %v3599, %v3598
      %v3606 = vpack.c.b16 %v3601, %v3600
      %v3607 = vpack.c.b16 %v3603, %v3602
      %vm3608 = vcmask 64512
      %v3610 = vsel %vm3608, %v3604, 0
      %v3613 = vsel %vm3608, %v3605, 0
      %v3616 = vsel %vm3608, %v3606, 0
      %v3619 = vsel %vm3608, %v3607, 0
      %vm3621 = vcmask 1043456
      %v3623 = vsel %vm3621, %v3595, 0
      %3625 = vmatpush.bf16.msra.mxu0 0
      %3626 = vmatpush.bf16.msra.mxu0 0
      %3627 = vmatpush.bf16.msra.mxu0 0
      %3628 = vmatpush.bf16.msra.mxu0 0
      %3629 = vmatpush.bf16.msra.mxu0 0
      %3630 = vmatpush.bf16.msra.mxu0 0
      %3631 = vmatpush.bf16.msra.mxu0 0
      %3632 = vmatpush.bf16.msra.mxu0 %v3623
      %3633 = vmatmul.bf16.gmra.mxu0 %v3610
      %v3634 = vpop.f32.mrf.mxu0
      %v3635 = vadd.f32 0.0, %v3634
      %v3636 = vpop.f32.mrf.mxu0
      %v3637 = vadd.f32 0.0, %v3636
      %3638 = vmatmul.bf16.gmra.mxu0 %v3613
      %v3639 = vpop.f32.mrf.mxu0
      %v3640 = vadd.f32 0.0, %v3639
      %v3641 = vpop.f32.mrf.mxu0
      %v3642 = vadd.f32 0.0, %v3641
      %3643 = vmatmul.bf16.gmra.mxu0 %v3616
      %v3644 = vpop.f32.mrf.mxu0
      %v3645 = vadd.f32 0.0, %v3644
      %v3646 = vpop.f32.mrf.mxu0
      %v3647 = vadd.f32 0.0, %v3646
      %3648 = vmatmul.bf16.gmra.mxu0 %v3619
      %v3649 = vpop.f32.mrf.mxu0
      %v3650 = vadd.f32 0.0, %v3649
      %v3651 = vpop.f32.mrf.mxu0
      %v3652 = vadd.f32 0.0, %v3651
      %3653 = vdwg.mxu0
      %v3662 = vunpack.c.l.b16 %v3466
      %v3663 = vunpack.c.l.b16 %v3467
      %v3664 = vunpack.c.l.b16 %v3468
      %v3665 = vunpack.c.l.b16 %v3469
      %v3666 = vunpack.c.l.b16 %v3470
      %v3667 = vunpack.c.l.b16 %v3471
      %v3668 = vunpack.c.l.b16 %v3472
      %v3669 = vunpack.c.l.b16 %v3473
      %v3670 = vpack.c.b16 %v3663, %v3662
      %v3671 = vpack.c.b16 %v3665, %v3664
      %v3672 = vpack.c.b16 %v3667, %v3666
      %v3673 = vpack.c.b16 %v3669, %v3668
      %v3675 = vsel %vm3608, %v3670, 0
      %v3678 = vsel %vm3608, %v3671, 0
      %v3681 = vsel %vm3608, %v3672, 0
      %v3684 = vsel %vm3608, %v3673, 0
      %v3687 = vsel %vm3621, %v3474, 0
      %3689 = vmatpush.bf16.msra.mxu0 0
      %3690 = vmatpush.bf16.msra.mxu0 0
      %3691 = vmatpush.bf16.msra.mxu0 0
      %3692 = vmatpush.bf16.msra.mxu0 0
      %3693 = vmatpush.bf16.msra.mxu0 0
      %3694 = vmatpush.bf16.msra.mxu0 0
      %3695 = vmatpush.bf16.msra.mxu0 0
      %3696 = vmatpush.bf16.msra.mxu0 %v3687
      %3697 = vmatmul.bf16.gmra.mxu0 %v3675
      %v3698 = vpop.f32.mrf.mxu0
      %v3699 = vadd.f32 %v3635, %v3698
      %v3700 = vpop.f32.mrf.mxu0
      %v3701 = vadd.f32 %v3637, %v3700
      %3702 = vmatmul.bf16.gmra.mxu0 %v3678
      %v3703 = vpop.f32.mrf.mxu0
      %v3704 = vadd.f32 %v3640, %v3703
      %v3705 = vpop.f32.mrf.mxu0
      %v3706 = vadd.f32 %v3642, %v3705
      %3707 = vmatmul.bf16.gmra.mxu0 %v3681
      %v3708 = vpop.f32.mrf.mxu0
      %v3709 = vadd.f32 %v3645, %v3708
      %v3710 = vpop.f32.mrf.mxu0
      %v3711 = vadd.f32 %v3647, %v3710
      %3712 = vmatmul.bf16.gmra.mxu0 %v3684
      %v3713 = vpop.f32.mrf.mxu0
      %v3714 = vadd.f32 %v3650, %v3713
      %v3715 = vpop.f32.mrf.mxu0
      %v3716 = vadd.f32 %v3652, %v3715
      %3717 = vdwg.mxu0
      %v3718 = vld [vmem:[#allocation3] sm:$0xe]
      %v3719 = vld [vmem:[#allocation3 + $0x8] sm:$0xe]
      %v3720 = vld [vmem:[#allocation3 + $0x10] sm:$0xe]
      %v3721 = vld [vmem:[#allocation3 + $0x18] sm:$0xe]
      %v3722 = vld [vmem:[#allocation3 + $0x20] sm:$0xe]
      %v3723 = vld [vmem:[#allocation3 + $0x28] sm:$0xe]
      %v3724 = vld [vmem:[#allocation3 + $0x30] sm:$0xe]
      %v3725 = vld [vmem:[#allocation3 + $0x38] sm:$0xe]
      %v3742 = vrot.slane %v3718, 5
      %v3743 = vrot.slane %v3742, 4
      %v3744 = vrot.slane %v3475, 5
      %v3745 = vsel %vm2095, %v3743, %v3744
      %v3746 = vrot.slane %v3719, 5
      %v3747 = vrot.slane %v3746, 4
      %v3748 = vrot.slane %v3476, 5
      %v3749 = vsel %vm2095, %v3747, %v3748
      %v3750 = vrot.slane %v3720, 5
      %v3751 = vrot.slane %v3750, 4
      %v3752 = vrot.slane %v3477, 5
      %v3753 = vsel %vm2095, %v3751, %v3752
      %v3754 = vrot.slane %v3721, 5
      %v3755 = vrot.slane %v3754, 4
      %v3756 = vrot.slane %v3478, 5
      %v3757 = vsel %vm2095, %v3755, %v3756
      %v3758 = vrot.slane %v3722, 5
      %v3759 = vrot.slane %v3758, 4
      %v3760 = vrot.slane %v3479, 5
      %v3761 = vsel %vm2095, %v3759, %v3760
      %v3762 = vrot.slane %v3723, 5
      %v3763 = vrot.slane %v3762, 4
      %v3764 = vrot.slane %v3480, 5
      %v3765 = vsel %vm2095, %v3763, %v3764
      %v3766 = vrot.slane %v3724, 5
      %v3767 = vrot.slane %v3766, 4
      %v3768 = vrot.slane %v3481, 5
      %v3769 = vsel %vm2095, %v3767, %v3768
      %v3770 = vrot.slane %v3725, 5
      %v3771 = vrot.slane %v3770, 4
      %v3772 = vrot.slane %v3482, 5
      %v3773 = vsel %vm2095, %v3771, %v3772
      %v3774 = vld [vmem:[%s3 + $0x8] sm:$0xf]
      %v3775 = vunpack.c.l.b16 %v3745
      %v3776 = vunpack.c.l.b16 %v3749
      %v3777 = vunpack.c.l.b16 %v3753
      %v3778 = vunpack.c.l.b16 %v3757
      %v3779 = vunpack.c.l.b16 %v3761
      %v3780 = vunpack.c.l.b16 %v3765
      %v3781 = vunpack.c.l.b16 %v3769
      %v3782 = vunpack.c.l.b16 %v3773
      %v3783 = vpack.c.b16 %v3776, %v3775
      %v3784 = vpack.c.b16 %v3778, %v3777
      %v3785 = vpack.c.b16 %v3780, %v3779
      %v3786 = vpack.c.b16 %v3782, %v3781
      %v3788 = vsel %vm3608, %v3783, 0
      %v3791 = vsel %vm3608, %v3784, 0
      %v3794 = vsel %vm3608, %v3785, 0
      %v3797 = vsel %vm3608, %v3786, 0
      %v3800 = vsel %vm3621, %v3774, 0
      %3802 = vmatpush.bf16.msra.mxu0 0
      %3803 = vmatpush.bf16.msra.mxu0 0
      %3804 = vmatpush.bf16.msra.mxu0 0
      %3805 = vmatpush.bf16.msra.mxu0 0
      %3806 = vmatpush.bf16.msra.mxu0 0
      %3807 = vmatpush.bf16.msra.mxu0 0
      %3808 = vmatpush.bf16.msra.mxu0 0
      %3809 = vmatpush.bf16.msra.mxu0 %v3800
      %3810 = vmatmul.bf16.gmra.mxu0 %v3788
      %v3811 = vpop.f32.mrf.mxu0
      %v3812 = vadd.f32 0.0, %v3811
      %v3813 = vpop.f32.mrf.mxu0
      %v3814 = vadd.f32 0.0, %v3813
      %3815 = vmatmul.bf16.gmra.mxu0 %v3791
      %v3816 = vpop.f32.mrf.mxu0
      %v3817 = vadd.f32 0.0, %v3816
      %v3818 = vpop.f32.mrf.mxu0
      %v3819 = vadd.f32 0.0, %v3818
      %3820 = vmatmul.bf16.gmra.mxu0 %v3794
      %v3821 = vpop.f32.mrf.mxu0
      %v3822 = vadd.f32 0.0, %v3821
      %v3823 = vpop.f32.mrf.mxu0
      %v3824 = vadd.f32 0.0, %v3823
      %3825 = vmatmul.bf16.gmra.mxu0 %v3797
      %v3826 = vpop.f32.mrf.mxu0
      %v3827 = vadd.f32 0.0, %v3826
      %v3828 = vpop.f32.mrf.mxu0
      %v3829 = vadd.f32 0.0, %v3828
      %3830 = vdwg.mxu0
      %v3831 = vadd.f32 %v3699, %v3812
      %v3832 = vadd.f32 %v3701, %v3814
      %v3833 = vadd.f32 %v3704, %v3817
      %v3834 = vadd.f32 %v3706, %v3819
      %v3835 = vadd.f32 %v3709, %v3822
      %v3836 = vadd.f32 %v3711, %v3824
      %v3837 = vadd.f32 %v3714, %v3827
      %v3838 = vadd.f32 %v3716, %v3829
      %s3839 = scalar_lea.vmem [#allocation3], 8
      %v3840 = vld [vmem:[%s3839] sm:$0xf]
      %v3841 = vld [vmem:[%s3839 + $0x8] sm:$0xf]
      %v3842 = vld [vmem:[%s3839 + $0x10] sm:$0xf]
      %v3843 = vld [vmem:[%s3839 + $0x18] sm:$0xf]
      %v3844 = vld [vmem:[%s3839 + $0x20] sm:$0xf]
      %v3845 = vld [vmem:[%s3839 + $0x28] sm:$0xf]
      %v3846 = vld [vmem:[%s3839 + $0x30] sm:$0xf]
      %v3847 = vld [vmem:[%s3839 + $0x38] sm:$0xf]
      %v3848 = vld [vmem:[%s3 + $0xc] sm:$0xf]
      %v3857 = vunpack.c.l.b16 %v3840
      %v3858 = vunpack.c.l.b16 %v3841
      %v3859 = vunpack.c.l.b16 %v3842
      %v3860 = vunpack.c.l.b16 %v3843
      %v3861 = vunpack.c.l.b16 %v3844
      %v3862 = vunpack.c.l.b16 %v3845
      %v3863 = vunpack.c.l.b16 %v3846
      %v3864 = vunpack.c.l.b16 %v3847
      %v3865 = vpack.c.b16 %v3858, %v3857
      %v3866 = vpack.c.b16 %v3860, %v3859
      %v3867 = vpack.c.b16 %v3862, %v3861
      %v3868 = vpack.c.b16 %v3864, %v3863
      %v3870 = vsel %vm3608, %v3865, 0
      %v3873 = vsel %vm3608, %v3866, 0
      %v3876 = vsel %vm3608, %v3867, 0
      %v3879 = vsel %vm3608, %v3868, 0
      %v3882 = vsel %vm3621, %v3848, 0
      %3884 = vmatpush.bf16.msra.mxu0 0
      %3885 = vmatpush.bf16.msra.mxu0 0
      %3886 = vmatpush.bf16.msra.mxu0 0
      %3887 = vmatpush.bf16.msra.mxu0 0
      %3888 = vmatpush.bf16.msra.mxu0 0
      %3889 = vmatpush.bf16.msra.mxu0 0
      %3890 = vmatpush.bf16.msra.mxu0 0
      %3891 = vmatpush.bf16.msra.mxu0 %v3882
      %3892 = vmatmul.bf16.gmra.mxu0 %v3870
      %v3893 = vpop.f32.mrf.mxu0
      %v3894 = vadd.f32 0.0, %v3893
      %v3895 = vpop.f32.mrf.mxu0
      %v3896 = vadd.f32 0.0, %v3895
      %3897 = vmatmul.bf16.gmra.mxu0 %v3873
      %v3898 = vpop.f32.mrf.mxu0
      %v3899 = vadd.f32 0.0, %v3898
      %v3900 = vpop.f32.mrf.mxu0
      %v3901 = vadd.f32 0.0, %v3900
      %3902 = vmatmul.bf16.gmra.mxu0 %v3876
      %v3903 = vpop.f32.mrf.mxu0
      %v3904 = vadd.f32 0.0, %v3903
      %v3905 = vpop.f32.mrf.mxu0
      %v3906 = vadd.f32 0.0, %v3905
      %3907 = vmatmul.bf16.gmra.mxu0 %v3879
      %v3908 = vpop.f32.mrf.mxu0
      %v3909 = vadd.f32 0.0, %v3908
      %v3910 = vpop.f32.mrf.mxu0
      %v3911 = vadd.f32 0.0, %v3910
      %3912 = vdwg.mxu0
      %v3913 = vadd.f32 %v3831, %v3894
      %v3914 = vadd.f32 %v3832, %v3896
      %v3915 = vadd.f32 %v3833, %v3899
      %v3916 = vadd.f32 %v3834, %v3901
      %v3917 = vadd.f32 %v3835, %v3904
      %v3918 = vadd.f32 %v3836, %v3906
      %v3919 = vadd.f32 %v3837, %v3909
      %v3920 = vadd.f32 %v3838, %v3911
      %v3921 = vld [vmem:[%s3839] sm:$0xf]
      %v3922 = vld [vmem:[%s3839 + $0x4] sm:$0x1]
      %v3923 = vld [vmem:[%s3839 + $0x8] sm:$0xf]
      %v3924 = vld [vmem:[%s3839 + $0xc] sm:$0x1]
      %v3925 = vld [vmem:[%s3839 + $0x10] sm:$0xf]
      %v3926 = vld [vmem:[%s3839 + $0x14] sm:$0x1]
      %v3927 = vld [vmem:[%s3839 + $0x18] sm:$0xf]
      %v3928 = vld [vmem:[%s3839 + $0x1c] sm:$0x1]
      %v3929 = vld [vmem:[%s3839 + $0x20] sm:$0xf]
      %v3930 = vld [vmem:[%s3839 + $0x24] sm:$0x1]
      %v3931 = vld [vmem:[%s3839 + $0x28] sm:$0xf]
      %v3932 = vld [vmem:[%s3839 + $0x2c] sm:$0x1]
      %v3933 = vld [vmem:[%s3839 + $0x30] sm:$0xf]
      %v3934 = vld [vmem:[%s3839 + $0x34] sm:$0x1]
      %v3935 = vld [vmem:[%s3839 + $0x38] sm:$0xf]
      %v3936 = vld [vmem:[%s3839 + $0x3c] sm:$0x1]
      %v3938 = vshrl.u32 %v3921, 16
      %v3940 = vrot.slane %v3938, 4
      %v3941 = vshll.u32 %v3921, 16
      %v3943 = vrot.slane %v3941, 5
      %v3944 = vor.u32 %v3940, %v3943
      %v3945 = vrot.slane %v3944, 4
      %v3947 = vshll.u32 %v3922, 16
      %v3949 = vrot.slane %v3947, 5
      %v3950 = vsel %vm1771, %v3945, %v3949
      %v3952 = vshrl.u32 %v3923, 16
      %v3954 = vrot.slane %v3952, 4
      %v3955 = vshll.u32 %v3923, 16
      %v3957 = vrot.slane %v3955, 5
      %v3958 = vor.u32 %v3954, %v3957
      %v3959 = vrot.slane %v3958, 4
      %v3961 = vshll.u32 %v3924, 16
      %v3963 = vrot.slane %v3961, 5
      %v3964 = vsel %vm1771, %v3959, %v3963
      %v3966 = vshrl.u32 %v3925, 16
      %v3968 = vrot.slane %v3966, 4
      %v3969 = vshll.u32 %v3925, 16
      %v3971 = vrot.slane %v3969, 5
      %v3972 = vor.u32 %v3968, %v3971
      %v3973 = vrot.slane %v3972, 4
      %v3975 = vshll.u32 %v3926, 16
      %v3977 = vrot.slane %v3975, 5
      %v3978 = vsel %vm1771, %v3973, %v3977
      %v3980 = vshrl.u32 %v3927, 16
      %v3982 = vrot.slane %v3980, 4
      %v3983 = vshll.u32 %v3927, 16
      %v3985 = vrot.slane %v3983, 5
      %v3986 = vor.u32 %v3982, %v3985
      %v3987 = vrot.slane %v3986, 4
      %v3989 = vshll.u32 %v3928, 16
      %v3991 = vrot.slane %v3989, 5
      %v3992 = vsel %vm1771, %v3987, %v3991
      %v3994 = vshrl.u32 %v3929, 16
      %v3996 = vrot.slane %v3994, 4
      %v3997 = vshll.u32 %v3929, 16
      %v3999 = vrot.slane %v3997, 5
      %v4000 = vor.u32 %v3996, %v3999
      %v4001 = vrot.slane %v4000, 4
      %v4003 = vshll.u32 %v3930, 16
      %v4005 = vrot.slane %v4003, 5
      %v4006 = vsel %vm1771, %v4001, %v4005
      %v4008 = vshrl.u32 %v3931, 16
      %v4010 = vrot.slane %v4008, 4
      %v4011 = vshll.u32 %v3931, 16
      %v4013 = vrot.slane %v4011, 5
      %v4014 = vor.u32 %v4010, %v4013
      %v4015 = vrot.slane %v4014, 4
      %v4017 = vshll.u32 %v3932, 16
      %v4019 = vrot.slane %v4017, 5
      %v4020 = vsel %vm1771, %v4015, %v4019
      %v4022 = vshrl.u32 %v3933, 16
      %v4024 = vrot.slane %v4022, 4
      %v4025 = vshll.u32 %v3933, 16
      %v4027 = vrot.slane %v4025, 5
      %v4028 = vor.u32 %v4024, %v4027
      %v4029 = vrot.slane %v4028, 4
      %v4031 = vshll.u32 %v3934, 16
      %v4033 = vrot.slane %v4031, 5
      %v4034 = vsel %vm1771, %v4029, %v4033
      %v4036 = vshrl.u32 %v3935, 16
      %v4038 = vrot.slane %v4036, 4
      %v4039 = vshll.u32 %v3935, 16
      %v4041 = vrot.slane %v4039, 5
      %v4042 = vor.u32 %v4038, %v4041
      %v4043 = vrot.slane %v4042, 4
      %v4045 = vshll.u32 %v3936, 16
      %v4047 = vrot.slane %v4045, 5
      %v4048 = vsel %vm1771, %v4043, %v4047
      %v4049 = vld [vmem:[%s3 + $0x10] sm:$0xf]
      %v4050 = vunpack.c.l.b16 %v3950
      %v4051 = vunpack.c.l.b16 %v3964
      %v4052 = vunpack.c.l.b16 %v3978
      %v4053 = vunpack.c.l.b16 %v3992
      %v4054 = vunpack.c.l.b16 %v4006
      %v4055 = vunpack.c.l.b16 %v4020
      %v4056 = vunpack.c.l.b16 %v4034
      %v4057 = vunpack.c.l.b16 %v4048
      %v4058 = vpack.c.b16 %v4051, %v4050
      %v4059 = vpack.c.b16 %v4053, %v4052
      %v4060 = vpack.c.b16 %v4055, %v4054
      %v4061 = vpack.c.b16 %v4057, %v4056
      %v4063 = vsel %vm3608, %v4058, 0
      %v4066 = vsel %vm3608, %v4059, 0
      %v4069 = vsel %vm3608, %v4060, 0
      %v4072 = vsel %vm3608, %v4061, 0
      %v4075 = vsel %vm3621, %v4049, 0
      %4077 = vmatpush.bf16.msra.mxu0 0
      %4078 = vmatpush.bf16.msra.mxu0 0
      %4079 = vmatpush.bf16.msra.mxu0 0
      %4080 = vmatpush.bf16.msra.mxu0 0
      %4081 = vmatpush.bf16.msra.mxu0 0
      %4082 = vmatpush.bf16.msra.mxu0 0
      %4083 = vmatpush.bf16.msra.mxu0 0
      %4084 = vmatpush.bf16.msra.mxu0 %v4075
      %4085 = vmatmul.bf16.gmra.mxu0 %v4063
      %v4086 = vpop.f32.mrf.mxu0
      %v4087 = vadd.f32 0.0, %v4086
      %v4088 = vpop.f32.mrf.mxu0
      %v4089 = vadd.f32 0.0, %v4088
      %4090 = vmatmul.bf16.gmra.mxu0 %v4066
      %v4091 = vpop.f32.mrf.mxu0
      %v4092 = vadd.f32 0.0, %v4091
      %v4093 = vpop.f32.mrf.mxu0
      %v4094 = vadd.f32 0.0, %v4093
      %4095 = vmatmul.bf16.gmra.mxu0 %v4069
      %v4096 = vpop.f32.mrf.mxu0
      %v4097 = vadd.f32 0.0, %v4096
      %v4098 = vpop.f32.mrf.mxu0
      %v4099 = vadd.f32 0.0, %v4098
      %4100 = vmatmul.bf16.gmra.mxu0 %v4072
      %v4101 = vpop.f32.mrf.mxu0
      %v4102 = vadd.f32 0.0, %v4101
      %v4103 = vpop.f32.mrf.mxu0
      %v4104 = vadd.f32 0.0, %v4103
      %4105 = vdwg.mxu0
      %v4106 = vadd.f32 %v3913, %v4087
      %v4107 = vadd.f32 %v3914, %v4089
      %v4108 = vadd.f32 %v3915, %v4092
      %v4109 = vadd.f32 %v3916, %v4094
      %v4110 = vadd.f32 %v3917, %v4097
      %v4111 = vadd.f32 %v3918, %v4099
      %v4112 = vadd.f32 %v3919, %v4102
      %v4113 = vadd.f32 %v3920, %v4104
      %v4114 = vld [vmem:[%s3839] sm:$0xe]
      %v4115 = vld [vmem:[%s3839 + $0x8] sm:$0xe]
      %v4116 = vld [vmem:[%s3839 + $0x10] sm:$0xe]
      %v4117 = vld [vmem:[%s3839 + $0x18] sm:$0xe]
      %v4118 = vld [vmem:[%s3839 + $0x20] sm:$0xe]
      %v4119 = vld [vmem:[%s3839 + $0x28] sm:$0xe]
      %v4120 = vld [vmem:[%s3839 + $0x30] sm:$0xe]
      %v4121 = vld [vmem:[%s3839 + $0x38] sm:$0xe]
      %v4138 = vrot.slane %v4114, 5
      %v4139 = vrot.slane %v4138, 4
      %v4140 = vrot.slane %v3922, 5
      %v4141 = vsel %vm2095, %v4139, %v4140
      %v4142 = vrot.slane %v4115, 5
      %v4143 = vrot.slane %v4142, 4
      %v4144 = vrot.slane %v3924, 5
      %v4145 = vsel %vm2095, %v4143, %v4144
      %v4146 = vrot.slane %v4116, 5
      %v4147 = vrot.slane %v4146, 4
      %v4148 = vrot.slane %v3926, 5
      %v4149 = vsel %vm2095, %v4147, %v4148
      %v4150 = vrot.slane %v4117, 5
      %v4151 = vrot.slane %v4150, 4
      %v4152 = vrot.slane %v3928, 5
      %v4153 = vsel %vm2095, %v4151, %v4152
      %v4154 = vrot.slane %v4118, 5
      %v4155 = vrot.slane %v4154, 4
      %v4156 = vrot.slane %v3930, 5
      %v4157 = vsel %vm2095, %v4155, %v4156
      %v4158 = vrot.slane %v4119, 5
      %v4159 = vrot.slane %v4158, 4
      %v4160 = vrot.slane %v3932, 5
      %v4161 = vsel %vm2095, %v4159, %v4160
      %v4162 = vrot.slane %v4120, 5
      %v4163 = vrot.slane %v4162, 4
      %v4164 = vrot.slane %v3934, 5
      %v4165 = vsel %vm2095, %v4163, %v4164
      %v4166 = vrot.slane %v4121, 5
      %v4167 = vrot.slane %v4166, 4
      %v4168 = vrot.slane %v3936, 5
      %v4169 = vsel %vm2095, %v4167, %v4168
      %v4170 = vld [vmem:[%s3 + $0x14] sm:$0xf]
      %v4171 = vunpack.c.l.b16 %v4141
      %v4172 = vunpack.c.l.b16 %v4145
      %v4173 = vunpack.c.l.b16 %v4149
      %v4174 = vunpack.c.l.b16 %v4153
      %v4175 = vunpack.c.l.b16 %v4157
      %v4176 = vunpack.c.l.b16 %v4161
      %v4177 = vunpack.c.l.b16 %v4165
      %v4178 = vunpack.c.l.b16 %v4169
      %v4179 = vpack.c.b16 %v4172, %v4171
      %v4180 = vpack.c.b16 %v4174, %v4173
      %v4181 = vpack.c.b16 %v4176, %v4175
      %v4182 = vpack.c.b16 %v4178, %v4177
      %v4184 = vsel %vm3608, %v4179, 0
      %v4187 = vsel %vm3608, %v4180, 0
      %v4190 = vsel %vm3608, %v4181, 0
      %v4193 = vsel %vm3608, %v4182, 0
      %v4196 = vsel %vm3621, %v4170, 0
      %4198 = vmatpush.bf16.msra.mxu0 0
      %4199 = vmatpush.bf16.msra.mxu0 0
      %4200 = vmatpush.bf16.msra.mxu0 0
      %4201 = vmatpush.bf16.msra.mxu0 0
      %4202 = vmatpush.bf16.msra.mxu0 0
      %4203 = vmatpush.bf16.msra.mxu0 0
      %4204 = vmatpush.bf16.msra.mxu0 0
      %4205 = vmatpush.bf16.msra.mxu0 %v4196
      %4206 = vmatmul.bf16.gmra.mxu0 %v4184
      %v4207 = vpop.f32.mrf.mxu0
      %v4208 = vadd.f32 0.0, %v4207
      %v4209 = vpop.f32.mrf.mxu0
      %v4210 = vadd.f32 0.0, %v4209
      %4211 = vmatmul.bf16.gmra.mxu0 %v4187
      %v4212 = vpop.f32.mrf.mxu0
      %v4213 = vadd.f32 0.0, %v4212
      %v4214 = vpop.f32.mrf.mxu0
      %v4215 = vadd.f32 0.0, %v4214
      %4216 = vmatmul.bf16.gmra.mxu0 %v4190
      %v4217 = vpop.f32.mrf.mxu0
      %v4218 = vadd.f32 0.0, %v4217
      %v4219 = vpop.f32.mrf.mxu0
      %v4220 = vadd.f32 0.0, %v4219
      %4221 = vmatmul.bf16.gmra.mxu0 %v4193
      %v4222 = vpop.f32.mrf.mxu0
      %v4223 = vadd.f32 0.0, %v4222
      %v4224 = vpop.f32.mrf.mxu0
      %v4225 = vadd.f32 0.0, %v4224
      %4226 = vdwg.mxu0
      %v4227 = vadd.f32 %v4106, %v4208
      %v4228 = vadd.f32 %v4107, %v4210
      %v4229 = vadd.f32 %v4108, %v4213
      %v4230 = vadd.f32 %v4109, %v4215
      %v4231 = vadd.f32 %v4110, %v4218
      %v4232 = vadd.f32 %v4111, %v4220
      %v4233 = vadd.f32 %v4112, %v4223
      %v4234 = vadd.f32 %v4113, %v4225
      %s4235 = scalar_lea.vmem [#allocation3], 16
      %v4236 = vld [vmem:[%s4235] sm:$0xf]
      %v4237 = vld [vmem:[%s4235 + $0x8] sm:$0xf]
      %v4238 = vld [vmem:[%s4235 + $0x10] sm:$0xf]
      %v4239 = vld [vmem:[%s4235 + $0x18] sm:$0xf]
      %v4240 = vld [vmem:[%s4235 + $0x20] sm:$0xf]
      %v4241 = vld [vmem:[%s4235 + $0x28] sm:$0xf]
      %v4242 = vld [vmem:[%s4235 + $0x30] sm:$0xf]
      %v4243 = vld [vmem:[%s4235 + $0x38] sm:$0xf]
      %v4244 = vld [vmem:[%s3 + $0x18] sm:$0xf]
      %v4253 = vunpack.c.l.b16 %v4236
      %v4254 = vunpack.c.l.b16 %v4237
      %v4255 = vunpack.c.l.b16 %v4238
      %v4256 = vunpack.c.l.b16 %v4239
      %v4257 = vunpack.c.l.b16 %v4240
      %v4258 = vunpack.c.l.b16 %v4241
      %v4259 = vunpack.c.l.b16 %v4242
      %v4260 = vunpack.c.l.b16 %v4243
      %v4261 = vpack.c.b16 %v4254, %v4253
      %v4262 = vpack.c.b16 %v4256, %v4255
      %v4263 = vpack.c.b16 %v4258, %v4257
      %v4264 = vpack.c.b16 %v4260, %v4259
      %v4266 = vsel %vm3608, %v4261, 0
      %v4269 = vsel %vm3608, %v4262, 0
      %v4272 = vsel %vm3608, %v4263, 0
      %v4275 = vsel %vm3608, %v4264, 0
      %v4278 = vsel %vm3621, %v4244, 0
      %4280 = vmatpush.bf16.msra.mxu0 0
      %4281 = vmatpush.bf16.msra.mxu0 0
      %4282 = vmatpush.bf16.msra.mxu0 0
      %4283 = vmatpush.bf16.msra.mxu0 0
      %4284 = vmatpush.bf16.msra.mxu0 0
      %4285 = vmatpush.bf16.msra.mxu0 0
      %4286 = vmatpush.bf16.msra.mxu0 0
      %4287 = vmatpush.bf16.msra.mxu0 %v4278
      %4288 = vmatmul.bf16.gmra.mxu0 %v4266
      %v4289 = vpop.f32.mrf.mxu0
      %v4290 = vadd.f32 0.0, %v4289
      %v4291 = vpop.f32.mrf.mxu0
      %v4292 = vadd.f32 0.0, %v4291
      %4293 = vmatmul.bf16.gmra.mxu0 %v4269
      %v4294 = vpop.f32.mrf.mxu0
      %v4295 = vadd.f32 0.0, %v4294
      %v4296 = vpop.f32.mrf.mxu0
      %v4297 = vadd.f32 0.0, %v4296
      %4298 = vmatmul.bf16.gmra.mxu0 %v4272
      %v4299 = vpop.f32.mrf.mxu0
      %v4300 = vadd.f32 0.0, %v4299
      %v4301 = vpop.f32.mrf.mxu0
      %v4302 = vadd.f32 0.0, %v4301
      %4303 = vmatmul.bf16.gmra.mxu0 %v4275
      %v4304 = vpop.f32.mrf.mxu0
      %v4305 = vadd.f32 0.0, %v4304
      %v4306 = vpop.f32.mrf.mxu0
      %v4307 = vadd.f32 0.0, %v4306
      %4308 = vdwg.mxu0
      %v4309 = vadd.f32 %v4227, %v4290
      %v4310 = vadd.f32 %v4228, %v4292
      %v4311 = vadd.f32 %v4229, %v4295
      %v4312 = vadd.f32 %v4230, %v4297
      %v4313 = vadd.f32 %v4231, %v4300
      %v4314 = vadd.f32 %v4232, %v4302
      %v4315 = vadd.f32 %v4233, %v4305
      %v4316 = vadd.f32 %v4234, %v4307
      %v4317 = vld [vmem:[%s4235] sm:$0xf]
      %v4318 = vld [vmem:[%s4235 + $0x4] sm:$0x1]
      %v4319 = vld [vmem:[%s4235 + $0x8] sm:$0xf]
      %v4320 = vld [vmem:[%s4235 + $0xc] sm:$0x1]
      %v4321 = vld [vmem:[%s4235 + $0x10] sm:$0xf]
      %v4322 = vld [vmem:[%s4235 + $0x14] sm:$0x1]
      %v4323 = vld [vmem:[%s4235 + $0x18] sm:$0xf]
      %v4324 = vld [vmem:[%s4235 + $0x1c] sm:$0x1]
      %v4325 = vld [vmem:[%s4235 + $0x20] sm:$0xf]
      %v4326 = vld [vmem:[%s4235 + $0x24] sm:$0x1]
      %v4327 = vld [vmem:[%s4235 + $0x28] sm:$0xf]
      %v4328 = vld [vmem:[%s4235 + $0x2c] sm:$0x1]
      %v4329 = vld [vmem:[%s4235 + $0x30] sm:$0xf]
      %v4330 = vld [vmem:[%s4235 + $0x34] sm:$0x1]
      %v4331 = vld [vmem:[%s4235 + $0x38] sm:$0xf]
      %v4332 = vld [vmem:[%s4235 + $0x3c] sm:$0x1]
      %v4334 = vshrl.u32 %v4317, 16
      %v4336 = vrot.slane %v4334, 4
      %v4337 = vshll.u32 %v4317, 16
      %v4339 = vrot.slane %v4337, 5
      %v4340 = vor.u32 %v4336, %v4339
      %v4341 = vrot.slane %v4340, 4
      %v4343 = vshll.u32 %v4318, 16
      %v4345 = vrot.slane %v4343, 5
      %v4346 = vsel %vm1771, %v4341, %v4345
      %v4348 = vshrl.u32 %v4319, 16
      %v4350 = vrot.slane %v4348, 4
      %v4351 = vshll.u32 %v4319, 16
      %v4353 = vrot.slane %v4351, 5
      %v4354 = vor.u32 %v4350, %v4353
      %v4355 = vrot.slane %v4354, 4
      %v4357 = vshll.u32 %v4320, 16
      %v4359 = vrot.slane %v4357, 5
      %v4360 = vsel %vm1771, %v4355, %v4359
      %v4362 = vshrl.u32 %v4321, 16
      %v4364 = vrot.slane %v4362, 4
      %v4365 = vshll.u32 %v4321, 16
      %v4367 = vrot.slane %v4365, 5
      %v4368 = vor.u32 %v4364, %v4367
      %v4369 = vrot.slane %v4368, 4
      %v4371 = vshll.u32 %v4322, 16
      %v4373 = vrot.slane %v4371, 5
      %v4374 = vsel %vm1771, %v4369, %v4373
      %v4376 = vshrl.u32 %v4323, 16
      %v4378 = vrot.slane %v4376, 4
      %v4379 = vshll.u32 %v4323, 16
      %v4381 = vrot.slane %v4379, 5
      %v4382 = vor.u32 %v4378, %v4381
      %v4383 = vrot.slane %v4382, 4
      %v4385 = vshll.u32 %v4324, 16
      %v4387 = vrot.slane %v4385, 5
      %v4388 = vsel %vm1771, %v4383, %v4387
      %v4390 = vshrl.u32 %v4325, 16
      %v4392 = vrot.slane %v4390, 4
      %v4393 = vshll.u32 %v4325, 16
      %v4395 = vrot.slane %v4393, 5
      %v4396 = vor.u32 %v4392, %v4395
      %v4397 = vrot.slane %v4396, 4
      %v4399 = vshll.u32 %v4326, 16
      %v4401 = vrot.slane %v4399, 5
      %v4402 = vsel %vm1771, %v4397, %v4401
      %v4404 = vshrl.u32 %v4327, 16
      %v4406 = vrot.slane %v4404, 4
      %v4407 = vshll.u32 %v4327, 16
      %v4409 = vrot.slane %v4407, 5
      %v4410 = vor.u32 %v4406, %v4409
      %v4411 = vrot.slane %v4410, 4
      %v4413 = vshll.u32 %v4328, 16
      %v4415 = vrot.slane %v4413, 5
      %v4416 = vsel %vm1771, %v4411, %v4415
      %v4418 = vshrl.u32 %v4329, 16
      %v4420 = vrot.slane %v4418, 4
      %v4421 = vshll.u32 %v4329, 16
      %v4423 = vrot.slane %v4421, 5
      %v4424 = vor.u32 %v4420, %v4423
      %v4425 = vrot.slane %v4424, 4
      %v4427 = vshll.u32 %v4330, 16
      %v4429 = vrot.slane %v4427, 5
      %v4430 = vsel %vm1771, %v4425, %v4429
      %v4432 = vshrl.u32 %v4331, 16
      %v4434 = vrot.slane %v4432, 4
      %v4435 = vshll.u32 %v4331, 16
      %v4437 = vrot.slane %v4435, 5
      %v4438 = vor.u32 %v4434, %v4437
      %v4439 = vrot.slane %v4438, 4
      %v4441 = vshll.u32 %v4332, 16
      %v4443 = vrot.slane %v4441, 5
      %v4444 = vsel %vm1771, %v4439, %v4443
      %v4445 = vld [vmem:[%s3 + $0x1c] sm:$0xf]
      %v4446 = vunpack.c.l.b16 %v4346
      %v4447 = vunpack.c.l.b16 %v4360
      %v4448 = vunpack.c.l.b16 %v4374
      %v4449 = vunpack.c.l.b16 %v4388
      %v4450 = vunpack.c.l.b16 %v4402
      %v4451 = vunpack.c.l.b16 %v4416
      %v4452 = vunpack.c.l.b16 %v4430
      %v4453 = vunpack.c.l.b16 %v4444
      %v4454 = vpack.c.b16 %v4447, %v4446
      %v4455 = vpack.c.b16 %v4449, %v4448
      %v4456 = vpack.c.b16 %v4451, %v4450
      %v4457 = vpack.c.b16 %v4453, %v4452
      %v4459 = vsel %vm3608, %v4454, 0
      %v4462 = vsel %vm3608, %v4455, 0
      %v4465 = vsel %vm3608, %v4456, 0
      %v4468 = vsel %vm3608, %v4457, 0
      %v4471 = vsel %vm3621, %v4445, 0
      %4473 = vmatpush.bf16.msra.mxu0 0
      %4474 = vmatpush.bf16.msra.mxu0 0
      %4475 = vmatpush.bf16.msra.mxu0 0
      %4476 = vmatpush.bf16.msra.mxu0 0
      %4477 = vmatpush.bf16.msra.mxu0 0
      %4478 = vmatpush.bf16.msra.mxu0 0
      %4479 = vmatpush.bf16.msra.mxu0 0
      %4480 = vmatpush.bf16.msra.mxu0 %v4471
      %4481 = vmatmul.bf16.gmra.mxu0 %v4459
      %v4482 = vpop.f32.mrf.mxu0
      %v4483 = vadd.f32 0.0, %v4482
      %v4484 = vpop.f32.mrf.mxu0
      %v4485 = vadd.f32 0.0, %v4484
      %4486 = vmatmul.bf16.gmra.mxu0 %v4462
      %v4487 = vpop.f32.mrf.mxu0
      %v4488 = vadd.f32 0.0, %v4487
      %v4489 = vpop.f32.mrf.mxu0
      %v4490 = vadd.f32 0.0, %v4489
      %4491 = vmatmul.bf16.gmra.mxu0 %v4465
      %v4492 = vpop.f32.mrf.mxu0
      %v4493 = vadd.f32 0.0, %v4492
      %v4494 = vpop.f32.mrf.mxu0
      %v4495 = vadd.f32 0.0, %v4494
      %4496 = vmatmul.bf16.gmra.mxu0 %v4468
      %v4497 = vpop.f32.mrf.mxu0
      %v4498 = vadd.f32 0.0, %v4497
      %v4499 = vpop.f32.mrf.mxu0
      %v4500 = vadd.f32 0.0, %v4499
      %4501 = vdwg.mxu0
      %v4502 = vadd.f32 %v4309, %v4483
      %v4503 = vadd.f32 %v4310, %v4485
      %v4504 = vadd.f32 %v4311, %v4488
      %v4505 = vadd.f32 %v4312, %v4490
      %v4506 = vadd.f32 %v4313, %v4493
      %v4507 = vadd.f32 %v4314, %v4495
      %v4508 = vadd.f32 %v4315, %v4498
      %v4509 = vadd.f32 %v4316, %v4500
      %v4510 = vld [vmem:[%s4235] sm:$0xe]
      %v4511 = vld [vmem:[%s4235 + $0x8] sm:$0xe]
      %v4512 = vld [vmem:[%s4235 + $0x10] sm:$0xe]
      %v4513 = vld [vmem:[%s4235 + $0x18] sm:$0xe]
      %v4514 = vld [vmem:[%s4235 + $0x20] sm:$0xe]
      %v4515 = vld [vmem:[%s4235 + $0x28] sm:$0xe]
      %v4516 = vld [vmem:[%s4235 + $0x30] sm:$0xe]
      %v4517 = vld [vmem:[%s4235 + $0x38] sm:$0xe]
      %v4534 = vrot.slane %v4510, 5
      %v4535 = vrot.slane %v4534, 4
      %v4536 = vrot.slane %v4318, 5
      %v4537 = vsel %vm2095, %v4535, %v4536
      %v4538 = vrot.slane %v4511, 5
      %v4539 = vrot.slane %v4538, 4
      %v4540 = vrot.slane %v4320, 5
      %v4541 = vsel %vm2095, %v4539, %v4540
      %v4542 = vrot.slane %v4512, 5
      %v4543 = vrot.slane %v4542, 4
      %v4544 = vrot.slane %v4322, 5
      %v4545 = vsel %vm2095, %v4543, %v4544
      %v4546 = vrot.slane %v4513, 5
      %v4547 = vrot.slane %v4546, 4
      %v4548 = vrot.slane %v4324, 5
      %v4549 = vsel %vm2095, %v4547, %v4548
      %v4550 = vrot.slane %v4514, 5
      %v4551 = vrot.slane %v4550, 4
      %v4552 = vrot.slane %v4326, 5
      %v4553 = vsel %vm2095, %v4551, %v4552
      %v4554 = vrot.slane %v4515, 5
      %v4555 = vrot.slane %v4554, 4
      %v4556 = vrot.slane %v4328, 5
      %v4557 = vsel %vm2095, %v4555, %v4556
      %v4558 = vrot.slane %v4516, 5
      %v4559 = vrot.slane %v4558, 4
      %v4560 = vrot.slane %v4330, 5
      %v4561 = vsel %vm2095, %v4559, %v4560
      %v4562 = vrot.slane %v4517, 5
      %v4563 = vrot.slane %v4562, 4
      %v4564 = vrot.slane %v4332, 5
      %v4565 = vsel %vm2095, %v4563, %v4564
      %v4566 = vld [vmem:[%s3 + $0x20] sm:$0xf]
      %v4567 = vunpack.c.l.b16 %v4537
      %v4568 = vunpack.c.l.b16 %v4541
      %v4569 = vunpack.c.l.b16 %v4545
      %v4570 = vunpack.c.l.b16 %v4549
      %v4571 = vunpack.c.l.b16 %v4553
      %v4572 = vunpack.c.l.b16 %v4557
      %v4573 = vunpack.c.l.b16 %v4561
      %v4574 = vunpack.c.l.b16 %v4565
      %v4575 = vpack.c.b16 %v4568, %v4567
      %v4576 = vpack.c.b16 %v4570, %v4569
      %v4577 = vpack.c.b16 %v4572, %v4571
      %v4578 = vpack.c.b16 %v4574, %v4573
      %v4580 = vsel %vm3608, %v4575, 0
      %v4583 = vsel %vm3608, %v4576, 0
      %v4586 = vsel %vm3608, %v4577, 0
      %v4589 = vsel %vm3608, %v4578, 0
      %v4592 = vsel %vm3621, %v4566, 0
      %4594 = vmatpush.bf16.msra.mxu0 0
      %4595 = vmatpush.bf16.msra.mxu0 0
      %4596 = vmatpush.bf16.msra.mxu0 0
      %4597 = vmatpush.bf16.msra.mxu0 0
      %4598 = vmatpush.bf16.msra.mxu0 0
      %4599 = vmatpush.bf16.msra.mxu0 0
      %4600 = vmatpush.bf16.msra.mxu0 0
      %4601 = vmatpush.bf16.msra.mxu0 %v4592
      %4602 = vmatmul.bf16.gmra.mxu0 %v4580
      %v4603 = vpop.f32.mrf.mxu0
      %v4604 = vadd.f32 0.0, %v4603
      %v4605 = vpop.f32.mrf.mxu0
      %v4606 = vadd.f32 0.0, %v4605
      %4607 = vmatmul.bf16.gmra.mxu0 %v4583
      %v4608 = vpop.f32.mrf.mxu0
      %v4609 = vadd.f32 0.0, %v4608
      %v4610 = vpop.f32.mrf.mxu0
      %v4611 = vadd.f32 0.0, %v4610
      %4612 = vmatmul.bf16.gmra.mxu0 %v4586
      %v4613 = vpop.f32.mrf.mxu0
      %v4614 = vadd.f32 0.0, %v4613
      %v4615 = vpop.f32.mrf.mxu0
      %v4616 = vadd.f32 0.0, %v4615
      %4617 = vmatmul.bf16.gmra.mxu0 %v4589
      %v4618 = vpop.f32.mrf.mxu0
      %v4619 = vadd.f32 0.0, %v4618
      %v4620 = vpop.f32.mrf.mxu0
      %v4621 = vadd.f32 0.0, %v4620
      %4622 = vdwg.mxu0
      %v4623 = vadd.f32 %v4502, %v4604
      %v4624 = vadd.f32 %v4503, %v4606
      %v4625 = vadd.f32 %v4504, %v4609
      %v4626 = vadd.f32 %v4505, %v4611
      %v4627 = vadd.f32 %v4506, %v4614
      %v4628 = vadd.f32 %v4507, %v4616
      %v4629 = vadd.f32 %v4508, %v4619
      %v4630 = vadd.f32 %v4509, %v4621
      %v4631 = vld [vmem:[%s4] sm:$0x1]
      %v4633 = vperm.slane %v4631, 0
      %v4635 = vadd.f32 %v4623, %v4633
      %v4636 = vadd.f32 %v4624, %v4633
      %v4637 = vadd.f32 %v4625, %v4633
      %v4638 = vadd.f32 %v4626, %v4633
      %v4639 = vadd.f32 %v4627, %v4633
      %v4640 = vadd.f32 %v4628, %v4633
      %v4641 = vadd.f32 %v4629, %v4633
      %v4642 = vadd.f32 %v4630, %v4633
      %v4643 = vmax.f32 %v4635, 0.0
      %v4644 = vmax.f32 %v4636, 0.0
      %v4645 = vmax.f32 %v4637, 0.0
      %v4646 = vmax.f32 %v4638, 0.0
      %v4647 = vmax.f32 %v4639, 0.0
      %v4648 = vmax.f32 %v4640, 0.0
      %v4649 = vmax.f32 %v4641, 0.0
      %v4650 = vmax.f32 %v4642, 0.0
      %4651 = vst.msk [vmem:[%s260] sm:$0xff] %vm3608, %v4643
      %4652 = vst.msk [vmem:[%s260 + $0x8] sm:$0xff] %vm3608, %v4644
      %4653 = vst.msk [vmem:[%s260 + $0x10] sm:$0xff] %vm3608, %v4645
      %4654 = vst.msk [vmem:[%s260 + $0x18] sm:$0xff] %vm3608, %v4646
      %4655 = vst.msk [vmem:[%s260 + $0x20] sm:$0xff] %vm3608, %v4647
      %4656 = vst.msk [vmem:[%s260 + $0x28] sm:$0xff] %vm3608, %v4648
      %4657 = vst.msk [vmem:[%s260 + $0x30] sm:$0xff] %vm3608, %v4649
      %4658 = vst.msk [vmem:[%s260 + $0x38] sm:$0xff] %vm3608, %v4650
      %s4659 = smul.u32 8, %s21
      %p4660 = scmp.lt.s32.totalorder %s20, 1
      %s4661 = scalar_select %p4660, %s20, 1
      %p4662 = scmp.lt.s32.totalorder %s4659, 7
      %s4663 = scalar_select %p4662, %s4659, 7
      %s4664 = smul.addr %s4661, 8
      %s4665 = sadd.s32 %s4663, %s4664
      %s4666 = smul.addr %s4665, 8
      %s4667 = scalar_lea.vmem %s5, %s4666
      // Predicated region
      $region45: #{tpu_custom_call.1} parent=39 // pred_check
        %p4668 = pneg %p160
      $region46: #{tpu_custom_call.1} parent=39 // pred_check_branch
        %4670 = sbr.rel (%p4668) target = $region48
      $region47: #{tpu_custom_call.1} parent=39 // pred_region
        %s4671 = smul.u32 8, %s21
      $region48: #{tpu_custom_call.1} parent=39 // pred_fallthru
        _
    $region40: #{tpu_custom_call.1} parent=5 // pred_fallthru
      _
    %p4672 = scmp.le.s32.totalorder 2, %s11
    // Predicated region
    $region49: #{tpu_custom_call.1} parent=5 // pred_check
      %p4673 = pneg %p4672
    $region50: #{tpu_custom_call.1} parent=5 // pred_check_branch
      %4675 = sbr.rel (%p4673) target = $region52
    $region51: #{tpu_custom_call.1} parent=5 // pred_region
      %s4676 = ssub.s32 %s11, 2
      // Predicated region
      $region53: #{tpu_custom_call.1} parent=51 // pred_check
        %p4677 = pneg %p166
      $region54: #{tpu_custom_call.1} parent=51 // pred_check_branch
        %4679 = sbr.rel (%p4677) target = $region56
      $region55: #{tpu_custom_call.1} parent=51 // pred_region
        %s4680 = smul.u32 8, %s23
        %p4681 = scmp.lt.s32.totalorder %s22, 1
        %s4682 = scalar_select %p4681, %s22, 1
        %p4683 = scmp.lt.s32.totalorder %s4680, 7
        %s4684 = scalar_select %p4683, %s4680, 7
        %s4685 = smul.addr %s4682, 8
        %s4686 = sadd.s32 %s4684, %s4685
        %s4687 = smul.addr %s4686, 8
        %s4688 = scalar_lea.vmem %s5, %s4687
      $region56: #{tpu_custom_call.1} parent=51 // pred_fallthru
        _
    $region52: #{tpu_custom_call.1} parent=5 // pred_fallthru
      _
  $region6: #{tpu_custom_call.1} parent=0 // loop_footer
    %s15 = sadd.s32 1, %s11
  $region7: #{tpu_custom_call.1} parent=0 // loop_footer_branch
    %10 = sbr.rel target = $region3
  $region8: #{tpu_custom_call.1} parent=0 // loop_exit
    _

</llo_original>
